<compile_context>
chip_gen: v7x
topology: tpu7x:2x2x1
jax: 0.10.0
libtpu: 0.0.40
codegen_flags: <defaults>
</compile_context>

<pallas_src>
import functools

import jax
import jax.numpy as jnp
from jax import lax
from jax.experimental import pallas as pl
from jax.experimental.pallas import tpu as pltpu


# ---------------------------------------------------------------------------
# Fused kernel: one (image n, row-tile r) grid cell.
#   x_ref    : (H*W, Cin) f32   flattened NHWC image (resident across r)
#   w1/w2/w3 : bf16 conv weights with BN scale pre-folded
#   b1/b2/b3 : (1, C) f32 folded BN biases
#   rest     : out_ref [, pre_ref], h1_ref (row-haloed VMEM scratch)
# ---------------------------------------------------------------------------
def _bottleneck_kernel(x_ref, w1_ref, b1_ref, w2_ref, b2_ref, w3_ref, b3_ref,
                       *rest, tile_h, width, emit_pre):
    if emit_pre:
        out_ref, pre_ref, h1_ref = rest
    else:
        out_ref, h1_ref = rest
        pre_ref = None

    r = pl.program_id(1)
    nr = pl.num_programs(1)

    planes = w1_ref.shape[1]
    tw = tile_h * width               # flattened rows of this output tile
    total = (tile_h + 2) * width      # rows of the H-haloed h1 scratch

    base = pl.multiple_of(r * tw, 8)  # flat row offset of this tile

    b1 = b1_ref[...]
    w1 = w1_ref[...]

    def conv1(x_rows):                # 1x1 conv + bn1 + relu (bf16 MXU, f32 acc)
        acc = jnp.dot(x_rows.astype(jnp.bfloat16), w1,
                      preferred_element_type=jnp.float32)
        return jnp.maximum(acc + b1, 0.0)

    # ---- conv1 into the H-haloed scratch (halo = one image row above/below)
    x_c = x_ref[pl.ds(base, tw), :]   # f32; reused as the identity residual
    h1_ref[width:width + tw, :] = conv1(x_c)

    # top halo: zero outside the image, conv1 of the neighbor row inside
    @pl.when(r == 0)
    def _():
        h1_ref[0:width, :] = jnp.zeros((width, planes), h1_ref.dtype)

    @pl.when(r > 0)
    def _():
        h1_ref[0:width, :] = conv1(x_ref[pl.ds(base - width, width), :])

    # bottom halo
    @pl.when(r == nr - 1)
    def _():
        h1_ref[width + tw:total, :] = jnp.zeros((width, planes), h1_ref.dtype)

    @pl.when(r < nr - 1)
    def _():
        h1_ref[width + tw:total, :] = conv1(x_ref[pl.ds(base + tw, width), :])

    # ---- conv2 (3x3, stride=1, pad=1) + bn2 + relu -------------------------
    h1_all = h1_ref[...]                                    # (total, planes) f32
    col = lax.broadcasted_iota(jnp.int32, (total, 1), 0) % width
    acc2 = jnp.zeros((tw, planes), jnp.float32)             # vreg accumulator
    for dx in (-1, 0, 1):
        if dx == 0:
            shifted = h1_all
        else:
            # column shift via XLU roll; zero the column that wrapped rows
            shifted = pltpu.roll(h1_all, shift=(-dx) % total, axis=0)
            keep = (col != 0) if dx == -1 else (col != width - 1)
            shifted = jnp.where(keep, shifted, 0.0)
        src = shifted.astype(jnp.bfloat16)
        for dy in (-1, 0, 1):
            tap = (dy + 1) * 3 + (dx + 1)                   # w2[ky=dy+1, kx=dx+1]
            off = (dy + 1) * width                          # aligned: W % 8 == 0
            acc2 = acc2 + jnp.dot(src[off:off + tw, :], w2_ref[tap],
                                  preferred_element_type=jnp.float32)
    h2 = jnp.maximum(acc2 + b2_ref[...], 0.0).astype(jnp.bfloat16)

    # ---- conv3 (1x1) + bn3 + identity residual (+ optional preact) ---------
    pre = (jnp.dot(h2, w3_ref[...], preferred_element_type=jnp.float32)
           + b3_ref[...] + x_c)
    if emit_pre:
        pre_ref[...] = pre.astype(pre_ref.dtype)
    out_ref[...] = jnp.maximum(pre, 0.0).astype(out_ref.dtype)


# ---------------------------------------------------------------------------
# BN folding + parameter construction
# ---------------------------------------------------------------------------
def _fold_bn(gamma, beta, mean, var, eps=1e-5):
    scale = gamma * lax.rsqrt(var + eps)
    bias = beta - mean * scale
    return scale, bias


def make_params(key, inplanes, planes):
    expansion = 4
    ks = jax.random.split(key, 15)
    p = {}
    p["w1"] = 0.1 * jax.random.normal(ks[0], (inplanes, planes), jnp.float32)      # 1x1 (Cin,Cout)
    p["w2"] = 0.1 * jax.random.normal(ks[1], (3, 3, planes, planes), jnp.float32)  # 3x3 HWIO
    p["w3"] = 0.1 * jax.random.normal(ks[2], (planes, planes * expansion), jnp.float32)

    def bn(kidx, c):
        g = 1.0 + 0.1 * jax.random.normal(ks[kidx], (c,), jnp.float32)
        b = 0.1 * jax.random.normal(ks[kidx + 1], (c,), jnp.float32)
        m = 0.05 * jax.random.normal(ks[kidx + 2], (c,), jnp.float32)
        v = 0.5 + jnp.abs(jax.random.normal(ks[kidx + 3], (c,), jnp.float32))
        return g, b, m, v

    p["bn1"] = bn(3, planes)
    p["bn2"] = bn(7, planes)
    p["bn3"] = bn(11, planes * expansion)
    return p


# ---------------------------------------------------------------------------
# Bottleneck forward wrapper: NCHW in, NCHW out (matches PyTorch)
# ---------------------------------------------------------------------------
@functools.partial(jax.jit, static_argnames=("is_last", "tile_h"))
def bottleneck_forward(x_nchw, params, is_last=True, tile_h=8):
    N, cin, H, W = x_nchw.shape
    planes = params["w1"].shape[1]
    cout = params["w3"].shape[1]
    assert cout == cin, "identity residual requires inplanes == planes * 4"
    assert W % 8 == 0, "W must be a multiple of 8 for sublane-aligned row tiles"
    if H % tile_h != 0:
        tile_h = H                      # fall back to one row-tile per image
    n_row_tiles = H // tile_h
    tw = tile_h * W

    # single layout change at the boundary; everything else stays fused
    x_flat = jnp.transpose(x_nchw, (0, 2, 3, 1)).reshape(N, H * W, cin)

    # fold BN scale into conv weights; only the bias remains in the epilogue
    s1, c1 = _fold_bn(*params["bn1"])
    s2, c2 = _fold_bn(*params["bn2"])
    s3, c3 = _fold_bn(*params["bn3"])
    w1 = (params["w1"] * s1[None, :]).astype(jnp.bfloat16)
    w2 = (params["w2"] * s2[None, None, None, :]
          ).reshape(9, planes, planes).astype(jnp.bfloat16)
    w3 = (params["w3"] * s3[None, :]).astype(jnp.bfloat16)
    b1 = c1[None, :].astype(jnp.float32)
    b2 = c2[None, :].astype(jnp.float32)
    b3 = c3[None, :].astype(jnp.float32)

    kernel = functools.partial(_bottleneck_kernel, tile_h=tile_h, width=W,
                               emit_pre=is_last)

    out_shapes = [jax.ShapeDtypeStruct((N, H * W, cout), jnp.float32)]
    out_specs = [pl.BlockSpec((None, tw, cout), lambda n, r: (n, r, 0))]
    if is_last:
        out_shapes.append(jax.ShapeDtypeStruct((N, H * W, cout), jnp.float32))
        out_specs.append(pl.BlockSpec((None, tw, cout), lambda n, r: (n, r, 0)))

    res = pl.pallas_call(
        kernel,
        out_shape=tuple(out_shapes),
        grid_spec=pltpu.PrefetchScalarGridSpec(
            num_scalar_prefetch=0,
            grid=(N, n_row_tiles),
            in_specs=[
                # full flattened image: resident across the row-tile axis
                pl.BlockSpec((None, H * W, cin), lambda n, r: (n, 0, 0)),
                pl.BlockSpec((cin, planes), lambda n, r: (0, 0)),
                pl.BlockSpec((1, planes), lambda n, r: (0, 0)),
                pl.BlockSpec((9, planes, planes), lambda n, r: (0, 0, 0)),
                pl.BlockSpec((1, planes), lambda n, r: (0, 0)),
                pl.BlockSpec((planes, cout), lambda n, r: (0, 0)),
                pl.BlockSpec((1, cout), lambda n, r: (0, 0)),
            ],
            out_specs=tuple(out_specs),
            scratch_shapes=[
                pltpu.VMEM(((tile_h + 2) * W, planes), jnp.float32),  # haloed h1
            ],
        ),
        compiler_params=pltpu.CompilerParams(
            dimension_semantics=("parallel", "parallel"),
            vmem_limit_bytes=32 * 1024 * 1024,
        ),
    )(x_flat, w1, b1, w2, b2, w3, b3)

    def to_nchw(y):
        return jnp.transpose(y.reshape(N, H, W, cout), (0, 3, 1, 2))

    if is_last:
        out3, pre3 = res
        return to_nchw(out3), to_nchw(pre3)
    (out3,) = res
    return to_nchw(out3)


# ---------------------------------------------------------------------------
# Pure-JAX f32 reference for verification
# ---------------------------------------------------------------------------
def ref_forward(x_nchw, params):
    x = jnp.transpose(x_nchw, (0, 2, 3, 1))
    s1, c1 = _fold_bn(*params["bn1"])
    s2, c2 = _fold_bn(*params["bn2"])
    s3, c3 = _fold_bn(*params["bn3"])
    h = jnp.maximum((x @ params["w1"]) * s1 + c1, 0.0)
    h = lax.conv_general_dilated(h, params["w2"], (1, 1), "SAME",
                                 dimension_numbers=("NHWC", "HWIO", "NHWC"))
    h = jnp.maximum(h * s2 + c2, 0.0)
    pre = (h @ params["w3"]) * s3 + c3 + x
    out = jnp.maximum(pre, 0.0)
    return (jnp.transpose(out, (0, 3, 1, 2)),
            jnp.transpose(pre, (0, 3, 1, 2)))


if __name__ == "__main__":
    key = jax.random.PRNGKey(0)
    k_x, k_p = jax.random.split(key)

    # Identity-residual Bottleneck: inplanes == planes * expansion
    planes = 8
    inplanes = planes * 4            # 32
    N, H, W = 2, 16, 16

    x = jax.random.normal(k_x, (N, inplanes, H, W), jnp.float32)   # NCHW
    params = make_params(k_p, inplanes, planes)

    out, preact = bottleneck_forward(x, params, is_last=True)
    jax.block_until_ready(out)
    jax.block_until_ready(preact)

    out_only = bottleneck_forward(x, params, is_last=False)        # no-preact variant
    jax.block_until_ready(out_only)

    ref_out, ref_pre = ref_forward(x, params)
    # bf16 matmul operands (f32 accumulation) vs f32 reference
    assert jnp.allclose(out, ref_out, atol=5e-2, rtol=2e-2), "out mismatch"
    assert jnp.allclose(preact, ref_pre, atol=5e-2, rtol=2e-2), "preact mismatch"
    assert jnp.allclose(out_only, out, atol=1e-5, rtol=1e-5), "variant mismatch"

    print("KERNEL_OK")
</pallas_src>

<mosaic_0001>
module attributes {stable_mosaic.version = 11 : i64} {
  func.func @_bottleneck_kernel(%arg0: i32, %arg1: i32, %arg2: memref<1x256x32xf32, #tpu.memory_space<vmem>>, %arg3: memref<32x8xbf16, #tpu.memory_space<vmem>>, %arg4: memref<1x8xf32, #tpu.memory_space<vmem>>, %arg5: memref<9x8x8xbf16, #tpu.memory_space<vmem>>, %arg6: memref<1x8xf32, #tpu.memory_space<vmem>>, %arg7: memref<8x32xbf16, #tpu.memory_space<vmem>>, %arg8: memref<1x32xf32, #tpu.memory_space<vmem>>, %arg9: memref<1x128x32xf32, #tpu.memory_space<vmem>>, %arg10: memref<1x128x32xf32, #tpu.memory_space<vmem>>, %arg11: memref<160x8xf32, #tpu.memory_space<vmem>>) attributes {dimension_semantics = [#tpu.dimension_semantics<parallel>, #tpu.dimension_semantics<parallel>], iteration_bounds = array<i64: 2, 2>, scalar_prefetch = 0 : i64, scratch_operands = 1 : i64, tpu.core_type = #tpu.core_type<tc>, window_params = [{transform_indices = @transform_0, window_bounds = array<i64: 1, 256, 32>}, {pipeline_mode = #tpu.pipeline_mode<synchronous>, transform_indices = @transform_1, window_bounds = array<i64: 32, 8>}, {pipeline_mode = #tpu.pipeline_mode<synchronous>, transform_indices = @transform_2, window_bounds = array<i64: 1, 8>}, {pipeline_mode = #tpu.pipeline_mode<synchronous>, transform_indices = @transform_3, window_bounds = array<i64: 9, 8, 8>}, {pipeline_mode = #tpu.pipeline_mode<synchronous>, transform_indices = @transform_4, window_bounds = array<i64: 1, 8>}, {pipeline_mode = #tpu.pipeline_mode<synchronous>, transform_indices = @transform_5, window_bounds = array<i64: 8, 32>}, {pipeline_mode = #tpu.pipeline_mode<synchronous>, transform_indices = @transform_6, window_bounds = array<i64: 1, 32>}, {transform_indices = @transform_7, window_bounds = array<i64: 1, 128, 32>}, {transform_indices = @transform_8, window_bounds = array<i64: 1, 128, 32>}]} {
    %c128_i32 = arith.constant 128 : i32
    %0 = arith.muli %arg1, %c128_i32 : i32
    %1 = tpu.assume_multiple %0, 8 : i32
    %c0 = arith.constant 0 : index
    %c0_0 = arith.constant 0 : index
    %2 = vector.load %arg4[%c0, %c0_0] : memref<1x8xf32, #tpu.memory_space<vmem>>, vector<1x8xf32>
    %c0_1 = arith.constant 0 : index
    %c0_2 = arith.constant 0 : index
    %3 = vector.load %arg3[%c0_1, %c0_2] : memref<32x8xbf16, #tpu.memory_space<vmem>>, vector<32x8xbf16>
    %c0_3 = arith.constant 0 : index
    %4 = arith.index_cast %1 : i32 to index
    %c0_4 = arith.constant 0 : index
    %5 = vector.load %arg2[%c0_3, %4, %c0_4] : memref<1x256x32xf32, #tpu.memory_space<vmem>>, vector<1x128x32xf32>
    %6 = vector.shape_cast %5 : vector<1x128x32xf32> to vector<128x32xf32>
    %7 = arith.truncf %6 : vector<128x32xf32> to vector<128x32xbf16>
    %cst = arith.constant dense<0.000000e+00> : vector<128x8xf32>
    %8 = tpu.matmul %7, %3, %cst {dimension_numbers = #tpu.dot_dimension_numbers<[1], [0], [0], [1], [0, 0, 1, 1], [], []>} : vector<128x32xbf16>, vector<32x8xbf16>, vector<128x8xf32> -> vector<128x8xf32>
    %9 = vector.broadcast %2 : vector<1x8xf32> to vector<128x8xf32>
    %10 = arith.addf %8, %9 : vector<128x8xf32>
    %cst_5 = arith.constant 0.000000e+00 : f32
    %11 = vector.broadcast %cst_5 : f32 to vector<128x8xf32>
    %12 = arith.maximumf %10, %11 : vector<128x8xf32>
    %c16 = arith.constant 16 : index
    %c0_6 = arith.constant 0 : index
    %13 = vector.load %arg11[%c16, %c0_6] : memref<160x8xf32, #tpu.memory_space<vmem>>, vector<128x8xf32>
    tpu.vector_store %arg11[%c16, %c0_6], %12 {strides = array<i32>} : memref<160x8xf32, #tpu.memory_space<vmem>>, vector<128x8xf32>,
    %c0_i32 = arith.constant 0 : i32
    %14 = arith.cmpi eq, %arg1, %c0_i32 : i32
    %15 = arith.extui %14 : i1 to i32
    %c0_i32_7 = arith.constant 0 : i32
    %16 = arith.cmpi ne, %15, %c0_i32_7 : i32
    scf.if %16 {
      %cst_68 = arith.constant 0.000000e+00 : f32
      %127 = vector.broadcast %cst_68 : f32 to vector<16x8xf32>
      %c0_69 = arith.constant 0 : index
      %c0_70 = arith.constant 0 : index
      %128 = vector.load %arg11[%c0_69, %c0_70] : memref<160x8xf32, #tpu.memory_space<vmem>>, vector<16x8xf32>
      tpu.vector_store %arg11[%c0_69, %c0_70], %127 {strides = array<i32>} : memref<160x8xf32, #tpu.memory_space<vmem>>, vector<16x8xf32>,
    } else {
    }
    %c0_i32_8 = arith.constant 0 : i32
    %17 = arith.cmpi sgt, %arg1, %c0_i32_8 : i32
    %18 = arith.extui %17 : i1 to i32
    %c0_i32_9 = arith.constant 0 : i32
    %19 = arith.cmpi ne, %18, %c0_i32_9 : i32
    scf.if %19 {
      %c16_i32_68 = arith.constant 16 : i32
      %127 = arith.subi %1, %c16_i32_68 : i32
      %c0_69 = arith.constant 0 : index
      %128 = arith.index_cast %127 : i32 to index
      %c0_70 = arith.constant 0 : index
      %129 = vector.load %arg2[%c0_69, %128, %c0_70] : memref<1x256x32xf32, #tpu.memory_space<vmem>>, vector<1x16x32xf32>
      %130 = vector.shape_cast %129 : vector<1x16x32xf32> to vector<16x32xf32>
      %131 = arith.truncf %130 : vector<16x32xf32> to vector<16x32xbf16>
      %cst_71 = arith.constant dense<0.000000e+00> : vector<16x8xf32>
      %132 = tpu.matmul %131, %3, %cst_71 {dimension_numbers = #tpu.dot_dimension_numbers<[1], [0], [0], [1], [0, 0, 1, 1], [], []>} : vector<16x32xbf16>, vector<32x8xbf16>, vector<16x8xf32> -> vector<16x8xf32>
      %133 = vector.broadcast %2 : vector<1x8xf32> to vector<16x8xf32>
      %134 = arith.addf %132, %133 : vector<16x8xf32>
      %cst_72 = arith.constant 0.000000e+00 : f32
      %135 = vector.broadcast %cst_72 : f32 to vector<16x8xf32>
      %136 = arith.maximumf %134, %135 : vector<16x8xf32>
      %c0_73 = arith.constant 0 : index
      %c0_74 = arith.constant 0 : index
      %137 = vector.load %arg11[%c0_73, %c0_74] : memref<160x8xf32, #tpu.memory_space<vmem>>, vector<16x8xf32>
      tpu.vector_store %arg11[%c0_73, %c0_74], %136 {strides = array<i32>} : memref<160x8xf32, #tpu.memory_space<vmem>>, vector<16x8xf32>,
    } else {
    }
    %c1_i32 = arith.constant 1 : i32
    %20 = arith.cmpi eq, %arg1, %c1_i32 : i32
    %21 = arith.extui %20 : i1 to i32
    %c0_i32_10 = arith.constant 0 : i32
    %22 = arith.cmpi ne, %21, %c0_i32_10 : i32
    scf.if %22 {
      %cst_68 = arith.constant 0.000000e+00 : f32
      %127 = vector.broadcast %cst_68 : f32 to vector<16x8xf32>
      %c144 = arith.constant 144 : index
      %c0_69 = arith.constant 0 : index
      %128 = vector.load %arg11[%c144, %c0_69] : memref<160x8xf32, #tpu.memory_space<vmem>>, vector<16x8xf32>
      tpu.vector_store %arg11[%c144, %c0_69], %127 {strides = array<i32>} : memref<160x8xf32, #tpu.memory_space<vmem>>, vector<16x8xf32>,
    } else {
    }
    %c1_i32_11 = arith.constant 1 : i32
    %23 = arith.cmpi slt, %arg1, %c1_i32_11 : i32
    %24 = arith.extui %23 : i1 to i32
    %c0_i32_12 = arith.constant 0 : i32
    %25 = arith.cmpi ne, %24, %c0_i32_12 : i32
    scf.if %25 {
      %c128_i32_68 = arith.constant 128 : i32
      %127 = arith.addi %1, %c128_i32_68 : i32
      %c0_69 = arith.constant 0 : index
      %128 = arith.index_cast %127 : i32 to index
      %c0_70 = arith.constant 0 : index
      %129 = vector.load %arg2[%c0_69, %128, %c0_70] : memref<1x256x32xf32, #tpu.memory_space<vmem>>, vector<1x16x32xf32>
      %130 = vector.shape_cast %129 : vector<1x16x32xf32> to vector<16x32xf32>
      %131 = arith.truncf %130 : vector<16x32xf32> to vector<16x32xbf16>
      %cst_71 = arith.constant dense<0.000000e+00> : vector<16x8xf32>
      %132 = tpu.matmul %131, %3, %cst_71 {dimension_numbers = #tpu.dot_dimension_numbers<[1], [0], [0], [1], [0, 0, 1, 1], [], []>} : vector<16x32xbf16>, vector<32x8xbf16>, vector<16x8xf32> -> vector<16x8xf32>
      %133 = vector.broadcast %2 : vector<1x8xf32> to vector<16x8xf32>
      %134 = arith.addf %132, %133 : vector<16x8xf32>
      %cst_72 = arith.constant 0.000000e+00 : f32
      %135 = vector.broadcast %cst_72 : f32 to vector<16x8xf32>
      %136 = arith.maximumf %134, %135 : vector<16x8xf32>
      %c144 = arith.constant 144 : index
      %c0_73 = arith.constant 0 : index
      %137 = vector.load %arg11[%c144, %c0_73] : memref<160x8xf32, #tpu.memory_space<vmem>>, vector<16x8xf32>
      tpu.vector_store %arg11[%c144, %c0_73], %136 {strides = array<i32>} : memref<160x8xf32, #tpu.memory_space<vmem>>, vector<16x8xf32>,
    } else {
    }
    %c0_13 = arith.constant 0 : index
    %c0_14 = arith.constant 0 : index
    %26 = vector.load %arg11[%c0_13, %c0_14] : memref<160x8xf32, #tpu.memory_space<vmem>>, vector<160x8xf32>
    %27 = tpu.iota {dimensions = array<i32: 0>} : vector<160x1xi32>
    %c16_i32 = arith.constant 16 : i32
    %c0_i32_15 = arith.constant 0 : i32
    %28 = arith.cmpi eq, %c16_i32, %c0_i32_15 : i32
    %c1_i32_16 = arith.constant 1 : i32
    %29 = arith.select %28, %c1_i32_16, %c16_i32 : i32
    %30 = vector.broadcast %29 : i32 to vector<160x1xi32>
    %31 = arith.remsi %27, %30 : vector<160x1xi32>
    %c0_i32_17 = arith.constant 0 : i32
    %32 = vector.broadcast %c0_i32_17 : i32 to vector<160x1xi32>
    %33 = arith.cmpi ne, %31, %32 : vector<160x1xi32>
    %c0_i32_18 = arith.constant 0 : i32
    %34 = vector.broadcast %c0_i32_18 : i32 to vector<160x1xi32>
    %35 = arith.cmpi slt, %31, %34 : vector<160x1xi32>
    %c0_i32_19 = arith.constant 0 : i32
    %36 = arith.cmpi slt, %29, %c0_i32_19 : i32
    %37 = vector.broadcast %36 : i1 to vector<160x1xi1>
    %38 = vector.broadcast %37 : vector<160x1xi1> to vector<160x1xi1>
    %39 = arith.xori %35, %38 : vector<160x1xi1>
    %40 = arith.andi %39, %33 : vector<160x1xi1>
    %41 = vector.broadcast %29 : i32 to vector<160x1xi32>
    %42 = arith.addi %31, %41 : vector<160x1xi32>
    %43 = arith.select %40, %42, %31 : vector<160x1xi1>, vector<160x1xi32>
    %cst_20 = arith.constant 0.000000e+00 : f32
    %44 = vector.broadcast %cst_20 : f32 to vector<128x8xf32>
    %c1_i32_21 = arith.constant 1 : i32
    %45 = tpu.dynamic_rotate %26 by %c1_i32_21 dim 0 : vector<160x8xf32>, i32 -> vector<160x8xf32>
    %c0_i32_22 = arith.constant 0 : i32
    %46 = vector.broadcast %c0_i32_22 : i32 to vector<160x1xi32>
    %47 = arith.cmpi ne, %43, %46 : vector<160x1xi32>
    %cst_23 = arith.constant 0.000000e+00 : f32
    %48 = vector.shape_cast %47 : vector<160x1xi1> to vector<160x1xi1>
    %49 = vector.broadcast %48 : vector<160x1xi1> to vector<160x8xi1>
    %50 = vector.broadcast %cst_23 : f32 to vector<160x8xf32>
    %51 = arith.select %49, %45, %50 : vector<160x8xi1>, vector<160x8xf32>
    %52 = arith.truncf %51 : vector<160x8xf32> to vector<160x8xbf16>
    %53 = vector.extract_strided_slice %52 {offsets = [0, 0], sizes = [128, 8], strides = [1, 1]} : vector<160x8xbf16> to vector<128x8xbf16>
    %c0_24 = arith.constant 0 : index
    %c0_25 = arith.constant 0 : index
    %c0_26 = arith.constant 0 : index
    %54 = vector.load %arg5[%c0_24, %c0_25, %c0_26] : memref<9x8x8xbf16, #tpu.memory_space<vmem>>, vector<1x8x8xbf16>
    %55 = vector.shape_cast %54 : vector<1x8x8xbf16> to vector<8x8xbf16>
    %cst_27 = arith.constant dense<0.000000e+00> : vector<128x8xf32>
    %56 = tpu.matmul %53, %55, %cst_27 {dimension_numbers = #tpu.dot_dimension_numbers<[1], [0], [0], [1], [0, 0, 1, 1], [], []>} : vector<128x8xbf16>, vector<8x8xbf16>, vector<128x8xf32> -> vector<128x8xf32>
    %57 = arith.addf %44, %56 : vector<128x8xf32>
    %58 = vector.extract_strided_slice %52 {offsets = [16, 0], sizes = [128, 8], strides = [1, 1]} : vector<160x8xbf16> to vector<128x8xbf16>
    %c3 = arith.constant 3 : index
    %c0_28 = arith.constant 0 : index
    %c0_29 = arith.constant 0 : index
    %59 = vector.load %arg5[%c3, %c0_28, %c0_29] : memref<9x8x8xbf16, #tpu.memory_space<vmem>>, vector<1x8x8xbf16>
    %60 = vector.shape_cast %59 : vector<1x8x8xbf16> to vector<8x8xbf16>
    %cst_30 = arith.constant dense<0.000000e+00> : vector<128x8xf32>
    %61 = tpu.matmul %58, %60, %cst_30 {dimension_numbers = #tpu.dot_dimension_numbers<[1], [0], [0], [1], [0, 0, 1, 1], [], []>} : vector<128x8xbf16>, vector<8x8xbf16>, vector<128x8xf32> -> vector<128x8xf32>
    %62 = arith.addf %57, %61 : vector<128x8xf32>
    %63 = vector.extract_strided_slice %52 {offsets = [32, 0], sizes = [128, 8], strides = [1, 1]} : vector<160x8xbf16> to vector<128x8xbf16>
    %c6 = arith.constant 6 : index
    %c0_31 = arith.constant 0 : index
    %c0_32 = arith.constant 0 : index
    %64 = vector.load %arg5[%c6, %c0_31, %c0_32] : memref<9x8x8xbf16, #tpu.memory_space<vmem>>, vector<1x8x8xbf16>
    %65 = vector.shape_cast %64 : vector<1x8x8xbf16> to vector<8x8xbf16>
    %cst_33 = arith.constant dense<0.000000e+00> : vector<128x8xf32>
    %66 = tpu.matmul %63, %65, %cst_33 {dimension_numbers = #tpu.dot_dimension_numbers<[1], [0], [0], [1], [0, 0, 1, 1], [], []>} : vector<128x8xbf16>, vector<8x8xbf16>, vector<128x8xf32> -> vector<128x8xf32>
    %67 = arith.addf %62, %66 : vector<128x8xf32>
    %68 = arith.truncf %26 : vector<160x8xf32> to vector<160x8xbf16>
    %69 = vector.extract_strided_slice %68 {offsets = [0, 0], sizes = [128, 8], strides = [1, 1]} : vector<160x8xbf16> to vector<128x8xbf16>
    %c1 = arith.constant 1 : index
    %c0_34 = arith.constant 0 : index
    %c0_35 = arith.constant 0 : index
    %70 = vector.load %arg5[%c1, %c0_34, %c0_35] : memref<9x8x8xbf16, #tpu.memory_space<vmem>>, vector<1x8x8xbf16>
    %71 = vector.shape_cast %70 : vector<1x8x8xbf16> to vector<8x8xbf16>
    %cst_36 = arith.constant dense<0.000000e+00> : vector<128x8xf32>
    %72 = tpu.matmul %69, %71, %cst_36 {dimension_numbers = #tpu.dot_dimension_numbers<[1], [0], [0], [1], [0, 0, 1, 1], [], []>} : vector<128x8xbf16>, vector<8x8xbf16>, vector<128x8xf32> -> vector<128x8xf32>
    %73 = arith.addf %67, %72 : vector<128x8xf32>
    %74 = vector.extract_strided_slice %68 {offsets = [16, 0], sizes = [128, 8], strides = [1, 1]} : vector<160x8xbf16> to vector<128x8xbf16>
    %c4 = arith.constant 4 : index
    %c0_37 = arith.constant 0 : index
    %c0_38 = arith.constant 0 : index
    %75 = vector.load %arg5[%c4, %c0_37, %c0_38] : memref<9x8x8xbf16, #tpu.memory_space<vmem>>, vector<1x8x8xbf16>
    %76 = vector.shape_cast %75 : vector<1x8x8xbf16> to vector<8x8xbf16>
    %cst_39 = arith.constant dense<0.000000e+00> : vector<128x8xf32>
    %77 = tpu.matmul %74, %76, %cst_39 {dimension_numbers = #tpu.dot_dimension_numbers<[1], [0], [0], [1], [0, 0, 1, 1], [], []>} : vector<128x8xbf16>, vector<8x8xbf16>, vector<128x8xf32> -> vector<128x8xf32>
    %78 = arith.addf %73, %77 : vector<128x8xf32>
    %79 = vector.extract_strided_slice %68 {offsets = [32, 0], sizes = [128, 8], strides = [1, 1]} : vector<160x8xbf16> to vector<128x8xbf16>
    %c7 = arith.constant 7 : index
    %c0_40 = arith.constant 0 : index
    %c0_41 = arith.constant 0 : index
    %80 = vector.load %arg5[%c7, %c0_40, %c0_41] : memref<9x8x8xbf16, #tpu.memory_space<vmem>>, vector<1x8x8xbf16>
    %81 = vector.shape_cast %80 : vector<1x8x8xbf16> to vector<8x8xbf16>
    %cst_42 = arith.constant dense<0.000000e+00> : vector<128x8xf32>
    %82 = tpu.matmul %79, %81, %cst_42 {dimension_numbers = #tpu.dot_dimension_numbers<[1], [0], [0], [1], [0, 0, 1, 1], [], []>} : vector<128x8xbf16>, vector<8x8xbf16>, vector<128x8xf32> -> vector<128x8xf32>
    %83 = arith.addf %78, %82 : vector<128x8xf32>
    %c159_i32 = arith.constant 159 : i32
    %84 = tpu.dynamic_rotate %26 by %c159_i32 dim 0 : vector<160x8xf32>, i32 -> vector<160x8xf32>
    %c15_i32 = arith.constant 15 : i32
    %85 = vector.broadcast %c15_i32 : i32 to vector<160x1xi32>
    %86 = arith.cmpi ne, %43, %85 : vector<160x1xi32>
    %cst_43 = arith.constant 0.000000e+00 : f32
    %87 = vector.shape_cast %86 : vector<160x1xi1> to vector<160x1xi1>
    %88 = vector.broadcast %87 : vector<160x1xi1> to vector<160x8xi1>
    %89 = vector.broadcast %cst_43 : f32 to vector<160x8xf32>
    %90 = arith.select %88, %84, %89 : vector<160x8xi1>, vector<160x8xf32>
    %91 = arith.truncf %90 : vector<160x8xf32> to vector<160x8xbf16>
    %92 = vector.extract_strided_slice %91 {offsets = [0, 0], sizes = [128, 8], strides = [1, 1]} : vector<160x8xbf16> to vector<128x8xbf16>
    %c2 = arith.constant 2 : index
    %c0_44 = arith.constant 0 : index
    %c0_45 = arith.constant 0 : index
    %93 = vector.load %arg5[%c2, %c0_44, %c0_45] : memref<9x8x8xbf16, #tpu.memory_space<vmem>>, vector<1x8x8xbf16>
    %94 = vector.shape_cast %93 : vector<1x8x8xbf16> to vector<8x8xbf16>
    %cst_46 = arith.constant dense<0.000000e+00> : vector<128x8xf32>
    %95 = tpu.matmul %92, %94, %cst_46 {dimension_numbers = #tpu.dot_dimension_numbers<[1], [0], [0], [1], [0, 0, 1, 1], [], []>} : vector<128x8xbf16>, vector<8x8xbf16>, vector<128x8xf32> -> vector<128x8xf32>
    %96 = arith.addf %83, %95 : vector<128x8xf32>
    %97 = vector.extract_strided_slice %91 {offsets = [16, 0], sizes = [128, 8], strides = [1, 1]} : vector<160x8xbf16> to vector<128x8xbf16>
    %c5 = arith.constant 5 : index
    %c0_47 = arith.constant 0 : index
    %c0_48 = arith.constant 0 : index
    %98 = vector.load %arg5[%c5, %c0_47, %c0_48] : memref<9x8x8xbf16, #tpu.memory_space<vmem>>, vector<1x8x8xbf16>
    %99 = vector.shape_cast %98 : vector<1x8x8xbf16> to vector<8x8xbf16>
    %cst_49 = arith.constant dense<0.000000e+00> : vector<128x8xf32>
    %100 = tpu.matmul %97, %99, %cst_49 {dimension_numbers = #tpu.dot_dimension_numbers<[1], [0], [0], [1], [0, 0, 1, 1], [], []>} : vector<128x8xbf16>, vector<8x8xbf16>, vector<128x8xf32> -> vector<128x8xf32>
    %101 = arith.addf %96, %100 : vector<128x8xf32>
    %102 = vector.extract_strided_slice %91 {offsets = [32, 0], sizes = [128, 8], strides = [1, 1]} : vector<160x8xbf16> to vector<128x8xbf16>
    %c8 = arith.constant 8 : index
    %c0_50 = arith.constant 0 : index
    %c0_51 = arith.constant 0 : index
    %103 = vector.load %arg5[%c8, %c0_50, %c0_51] : memref<9x8x8xbf16, #tpu.memory_space<vmem>>, vector<1x8x8xbf16>
    %104 = vector.shape_cast %103 : vector<1x8x8xbf16> to vector<8x8xbf16>
    %cst_52 = arith.constant dense<0.000000e+00> : vector<128x8xf32>
    %105 = tpu.matmul %102, %104, %cst_52 {dimension_numbers = #tpu.dot_dimension_numbers<[1], [0], [0], [1], [0, 0, 1, 1], [], []>} : vector<128x8xbf16>, vector<8x8xbf16>, vector<128x8xf32> -> vector<128x8xf32>
    %106 = arith.addf %101, %105 : vector<128x8xf32>
    %c0_53 = arith.constant 0 : index
    %c0_54 = arith.constant 0 : index
    %107 = vector.load %arg6[%c0_53, %c0_54] : memref<1x8xf32, #tpu.memory_space<vmem>>, vector<1x8xf32>
    %108 = vector.broadcast %107 : vector<1x8xf32> to vector<128x8xf32>
    %109 = arith.addf %106, %108 : vector<128x8xf32>
    %cst_55 = arith.constant 0.000000e+00 : f32
    %110 = vector.broadcast %cst_55 : f32 to vector<128x8xf32>
    %111 = arith.maximumf %109, %110 : vector<128x8xf32>
    %112 = arith.truncf %111 : vector<128x8xf32> to vector<128x8xbf16>
    %c0_56 = arith.constant 0 : index
    %c0_57 = arith.constant 0 : index
    %113 = vector.load %arg7[%c0_56, %c0_57] : memref<8x32xbf16, #tpu.memory_space<vmem>>, vector<8x32xbf16>
    %cst_58 = arith.constant dense<0.000000e+00> : vector<128x32xf32>
    %114 = tpu.matmul %112, %113, %cst_58 {dimension_numbers = #tpu.dot_dimension_numbers<[1], [0], [0], [1], [0, 0, 1, 1], [], []>} : vector<128x8xbf16>, vector<8x32xbf16>, vector<128x32xf32> -> vector<128x32xf32>
    %c0_59 = arith.constant 0 : index
    %c0_60 = arith.constant 0 : index
    %115 = vector.load %arg8[%c0_59, %c0_60] : memref<1x32xf32, #tpu.memory_space<vmem>>, vector<1x32xf32>
    %116 = vector.broadcast %115 : vector<1x32xf32> to vector<128x32xf32>
    %117 = arith.addf %114, %116 : vector<128x32xf32>
    %118 = arith.addf %117, %6 : vector<128x32xf32>
    %c0_61 = arith.constant 0 : index
    %c0_62 = arith.constant 0 : index
    %c0_63 = arith.constant 0 : index
    %119 = vector.load %arg10[%c0_61, %c0_62, %c0_63] : memref<1x128x32xf32, #tpu.memory_space<vmem>>, vector<1x128x32xf32>
    %120 = vector.shape_cast %119 : vector<1x128x32xf32> to vector<128x32xf32>
    %121 = vector.shape_cast %118 : vector<128x32xf32> to vector<1x128x32xf32>
    tpu.vector_store %arg10[%c0_61, %c0_62, %c0_63], %121 {strides = array<i32>} : memref<1x128x32xf32, #tpu.memory_space<vmem>>, vector<1x128x32xf32>,
    %cst_64 = arith.constant 0.000000e+00 : f32
    %122 = vector.broadcast %cst_64 : f32 to vector<128x32xf32>
    %123 = arith.maximumf %118, %122 : vector<128x32xf32>
    %c0_65 = arith.constant 0 : index
    %c0_66 = arith.constant 0 : index
    %c0_67 = arith.constant 0 : index
    %124 = vector.load %arg9[%c0_65, %c0_66, %c0_67] : memref<1x128x32xf32, #tpu.memory_space<vmem>>, vector<1x128x32xf32>
    %125 = vector.shape_cast %124 : vector<1x128x32xf32> to vector<128x32xf32>
    %126 = vector.shape_cast %123 : vector<128x32xf32> to vector<1x128x32xf32>
    tpu.vector_store %arg9[%c0_65, %c0_66, %c0_67], %126 {strides = array<i32>} : memref<1x128x32xf32, #tpu.memory_space<vmem>>, vector<1x128x32xf32>,
    return
  }
  func.func @transform_0(%arg0: i32, %arg1: i32) -> (i32, i32, i32) {
    %c0_i32 = arith.constant 0 : i32
    %c0_i32_0 = arith.constant 0 : i32
    %c0_i32_1 = arith.constant 0 : i32
    return %arg0, %c0_i32, %c0_i32_0 : i32, i32, i32
  }
  func.func @transform_1(%arg0: i32, %arg1: i32) -> (i32, i32) {
    %c0_i32 = arith.constant 0 : i32
    %c0_i32_0 = arith.constant 0 : i32
    %c0_i32_1 = arith.constant 0 : i32
    return %c0_i32, %c0_i32_0 : i32, i32
  }
  func.func @transform_2(%arg0: i32, %arg1: i32) -> (i32, i32) {
    %c0_i32 = arith.constant 0 : i32
    %c0_i32_0 = arith.constant 0 : i32
    %c0_i32_1 = arith.constant 0 : i32
    return %c0_i32, %c0_i32_0 : i32, i32
  }
  func.func @transform_3(%arg0: i32, %arg1: i32) -> (i32, i32, i32) {
    %c0_i32 = arith.constant 0 : i32
    %c0_i32_0 = arith.constant 0 : i32
    %c0_i32_1 = arith.constant 0 : i32
    %c0_i32_2 = arith.constant 0 : i32
    return %c0_i32, %c0_i32_0, %c0_i32_1 : i32, i32, i32
  }
  func.func @transform_4(%arg0: i32, %arg1: i32) -> (i32, i32) {
    %c0_i32 = arith.constant 0 : i32
    %c0_i32_0 = arith.constant 0 : i32
    %c0_i32_1 = arith.constant 0 : i32
    return %c0_i32, %c0_i32_0 : i32, i32
  }
  func.func @transform_5(%arg0: i32, %arg1: i32) -> (i32, i32) {
    %c0_i32 = arith.constant 0 : i32
    %c0_i32_0 = arith.constant 0 : i32
    %c0_i32_1 = arith.constant 0 : i32
    return %c0_i32, %c0_i32_0 : i32, i32
  }
  func.func @transform_6(%arg0: i32, %arg1: i32) -> (i32, i32) {
    %c0_i32 = arith.constant 0 : i32
    %c0_i32_0 = arith.constant 0 : i32
    %c0_i32_1 = arith.constant 0 : i32
    return %c0_i32, %c0_i32_0 : i32, i32
  }
  func.func @transform_7(%arg0: i32, %arg1: i32) -> (i32, i32, i32) {
    %c0_i32 = arith.constant 0 : i32
    %c0_i32_0 = arith.constant 0 : i32
    return %arg0, %arg1, %c0_i32 : i32, i32, i32
  }
  func.func @transform_8(%arg0: i32, %arg1: i32) -> (i32, i32, i32) {
    %c0_i32 = arith.constant 0 : i32
    %c0_i32_0 = arith.constant 0 : i32
    return %arg0, %arg1, %c0_i32 : i32, i32, i32
  }
}

</mosaic_0001>

<llo_original>
// kernel: bottleneck_forward.1
$region0: #{bottleneck_forward.1}
  #allocation0 [shape = 'u32[]', space=smem, size = 0x4, offset = 0x4, fixed_abs, tag = 'smem constant byte address 0x4 - core index']
  #allocation1 [shape = 'u32[144,128]{1,0:T(1,128)}', space=vmem, size = 0x12000, scoped, tag = 'internal scratch']
  #allocation2 [shape = 'f32[160,8]{1,0:T(8,128)}', space=vmem, size = 0x14000, scoped, tag = 'scratch operand']
  %s0 = inlined_call_operand.hbm [shape: f32[2,256,32], index: 0, kind: input, shape index: {}]
  %s1 = inlined_call_operand.vmem [shape: bf16[32,8], index: 1, kind: input, shape index: {}]
  %s2 = inlined_call_operand.vmem [shape: f32[1,8], index: 2, kind: input, shape index: {}]
  %s3 = inlined_call_operand.vmem [shape: bf16[9,8,8], index: 3, kind: input, shape index: {}]
  %s4 = inlined_call_operand.vmem [shape: f32[1,8], index: 4, kind: input, shape index: {}]
  %s5 = inlined_call_operand.vmem [shape: bf16[8,32], index: 5, kind: input, shape index: {}]
  %s6 = inlined_call_operand.vmem [shape: f32[1,32], index: 6, kind: input, shape index: {}]
  %s7 = inlined_call_operand.hbm [shape: f32[2,256,32], index: 7, kind: output, shape index: {0}]
  %s8 = inlined_call_operand.hbm [shape: f32[2,256,32], index: 8, kind: output, shape index: {1}]
  %9 = xla_tuple %s7, %s8
  %s10 = sld [smem:[#allocation0]]
  $region89: #{bottleneck_forward.1} parent=0
    _
  %s12 = ssub.s32 1, %s10
  %s13 = scalar_select 0, %s12, %s10
  $region1: #{bottleneck_forward.1} parent=0
    #allocation3 [shape = 'u8[262144]{0}', space=vmem, size = 0x40000, scoped, tag = 'input window, operand 0']
    #allocation4 [shape = 's32[2]{0}', space=sflag, size = 0x8, scoped, tag = 'scoped memory for bottleneck_forward.1']
    #allocation5 [shape = 's32[2]{0}', space=sflag, size = 0x8, scoped, tag = 'scoped memory for bottleneck_forward.1']
    #allocation6 [shape = 'u8[131072]{0}', space=vmem, size = 0x20000, scoped, tag = 'output window, operand 0']
    #allocation7 [shape = 'u8[131072]{0}', space=vmem, size = 0x20000, scoped, tag = 'output window, operand 1']
    #allocation8 [shape = 's32[2]{0}', space=sflag, size = 0x8, scoped, tag = 'scoped memory for bottleneck_forward.1']
    %14 = vsyncpa [#allocation4], 0
    %s15 = scalar_lea.sflag [#allocation4], 1
    %16 = vsyncpa %s15, 0
    %17 = vsyncpa [#allocation5], 0
    %s18 = scalar_lea.sflag [#allocation5], 1
    %19 = vsyncpa %s18, 0
    %20 = vsyncpa [#allocation8], 0
    %s21 = scalar_lea.sflag [#allocation8], 1
    %22 = vsyncpa %s21, 0
    loop: start=0, step=1, limit=6
    $region2: #{bottleneck_forward.1} parent=1 // loop_pre_header
      _
    $region3: #{bottleneck_forward.1} parent=1 // loop_header
      %s24 = sphi 0, %s28
      %p25 = scmp.ge.s32.totalorder %s24, 6
      %s31 = sphi 0, %s43
      %s32 = sphi 0, %s39
      %s33 = sphi 0, %s31
      %s34 = sphi 0, %s32
      %s35 = sphi 0, %s33
      %s36 = sphi 0, %s34
      %s46 = sphi 0, %s48
      %s49 = sphi 0, %s46
      %s50 = sphi 0, %s49
      %s66 = sphi 0, %s50
      %s70 = sphi 0, %s70
      %s72 = sphi 0, %s70
      %s73 = sphi 0, %s72
      %s87 = sphi 0, %s73
      %s91 = sphi 0, %s91
      %s93 = sphi 0, %s91
      %s94 = sphi 0, %s93
      %s108 = sphi 0, %s94
      %s112 = sphi 0, %s112
      %s114 = sphi 0, %s112
      %s115 = sphi 0, %s114
      %s129 = sphi 0, %s115
      %s133 = sphi 0, %s133
      %s135 = sphi 0, %s133
      %s136 = sphi 0, %s135
      %s150 = sphi 0, %s136
      %s154 = sphi 0, %s154
      %s156 = sphi 0, %s154
      %s157 = sphi 0, %s156
      %s171 = sphi 0, %s157
      %s175 = sphi 0, %s175
      %s177 = sphi 0, %s175
      %s178 = sphi 0, %s177
      %s192 = sphi 0, %s178
      %s200 = sphi 0, %s202
      %s203 = sphi 0, %s200
      %s204 = sphi 0, %s203
      %s220 = sphi 0, %s204
      %s228 = sphi 0, %s230
      %s231 = sphi 0, %s228
      %s232 = sphi 0, %s231
      %s248 = sphi 0, %s232
    $region4: #{bottleneck_forward.1} parent=1 // loop_header_branch
      %27 = sbr.rel (%p25) target = $region8
    $region5: #{bottleneck_forward.1} parent=1 // loop_body
      %s29 = ssub.s32 %s24, 1
      %s30 = ssub.s32 %s24, 2
      %s37 = sadd.s32 1, %s32
      %p38 = scmp.ge.s32.totalorder %s37, 2
      %s39 = scalar_select %p38, 0, %s37
      %s40 = sadd.s32 1, %s31
      %s41 = scalar_select %p38, %s40, %s31
      %p42 = scmp.ge.s32.totalorder %s41, 2
      %s43 = scalar_select %p42, 0, %s41
      %s44 = ssub.s32 %s31, %s43
      %p45 = scmp.eq.s32.totalorder %s44, 0
      %s47 = sadd.s32 %s46, 1
      %s48 = scalar_select %p45, %s46, %s47
      %p51 = pneg %p45
      %p52 = scmp.eq.s32.totalorder %s24, 3
      %p53 = por %p51, %p52
      %p54 = scmp.ne.s32.totalorder %s46, %s49
      %p55 = scmp.eq.s32.totalorder %s24, 0
      %p56 = por %p54, %p55
      %p57 = scmp.ne.s32.totalorder %s46, %s49
      %p58 = scmp.eq.s32.totalorder %s29, 3
      %p59 = por %p57, %p58
      %p60 = scmp.ne.s32.totalorder %s49, %s50
      %p61 = scmp.eq.s32.totalorder %s29, 0
      %p62 = por %p60, %p61
      %p63 = scmp.ne.s32.totalorder %s49, %s50
      %p64 = scmp.eq.s32.totalorder %s30, 3
      %p65 = por %p63, %p64
      %p67 = scmp.ne.s32.totalorder %s50, %s66
      %p68 = scmp.eq.s32.totalorder %s30, 0
      %p69 = por %p67, %p68
      %s71 = sadd.s32 %s70, 1
      %p74 = scmp.eq.s32.totalorder %s24, 3
      %p75 = scmp.ne.s32.totalorder %s70, %s72
      %p76 = scmp.eq.s32.totalorder %s24, 0
      %p77 = por %p75, %p76
      %p78 = scmp.ne.s32.totalorder %s70, %s72
      %p79 = scmp.eq.s32.totalorder %s29, 3
      %p80 = por %p78, %p79
      %p81 = scmp.ne.s32.totalorder %s72, %s73
      %p82 = scmp.eq.s32.totalorder %s29, 0
      %p83 = por %p81, %p82
      %p84 = scmp.ne.s32.totalorder %s72, %s73
      %p85 = scmp.eq.s32.totalorder %s30, 3
      %p86 = por %p84, %p85
      %p88 = scmp.ne.s32.totalorder %s73, %s87
      %p89 = scmp.eq.s32.totalorder %s30, 0
      %p90 = por %p88, %p89
      %s92 = sadd.s32 %s91, 1
      %p95 = scmp.eq.s32.totalorder %s24, 3
      %p96 = scmp.ne.s32.totalorder %s91, %s93
      %p97 = scmp.eq.s32.totalorder %s24, 0
      %p98 = por %p96, %p97
      %p99 = scmp.ne.s32.totalorder %s91, %s93
      %p100 = scmp.eq.s32.totalorder %s29, 3
      %p101 = por %p99, %p100
      %p102 = scmp.ne.s32.totalorder %s93, %s94
      %p103 = scmp.eq.s32.totalorder %s29, 0
      %p104 = por %p102, %p103
      %p105 = scmp.ne.s32.totalorder %s93, %s94
      %p106 = scmp.eq.s32.totalorder %s30, 3
      %p107 = por %p105, %p106
      %p109 = scmp.ne.s32.totalorder %s94, %s108
      %p110 = scmp.eq.s32.totalorder %s30, 0
      %p111 = por %p109, %p110
      %s113 = sadd.s32 %s112, 1
      %p116 = scmp.eq.s32.totalorder %s24, 3
      %p117 = scmp.ne.s32.totalorder %s112, %s114
      %p118 = scmp.eq.s32.totalorder %s24, 0
      %p119 = por %p117, %p118
      %p120 = scmp.ne.s32.totalorder %s112, %s114
      %p121 = scmp.eq.s32.totalorder %s29, 3
      %p122 = por %p120, %p121
      %p123 = scmp.ne.s32.totalorder %s114, %s115
      %p124 = scmp.eq.s32.totalorder %s29, 0
      %p125 = por %p123, %p124
      %p126 = scmp.ne.s32.totalorder %s114, %s115
      %p127 = scmp.eq.s32.totalorder %s30, 3
      %p128 = por %p126, %p127
      %p130 = scmp.ne.s32.totalorder %s115, %s129
      %p131 = scmp.eq.s32.totalorder %s30, 0
      %p132 = por %p130, %p131
      %s134 = sadd.s32 %s133, 1
      %p137 = scmp.eq.s32.totalorder %s24, 3
      %p138 = scmp.ne.s32.totalorder %s133, %s135
      %p139 = scmp.eq.s32.totalorder %s24, 0
      %p140 = por %p138, %p139
      %p141 = scmp.ne.s32.totalorder %s133, %s135
      %p142 = scmp.eq.s32.totalorder %s29, 3
      %p143 = por %p141, %p142
      %p144 = scmp.ne.s32.totalorder %s135, %s136
      %p145 = scmp.eq.s32.totalorder %s29, 0
      %p146 = por %p144, %p145
      %p147 = scmp.ne.s32.totalorder %s135, %s136
      %p148 = scmp.eq.s32.totalorder %s30, 3
      %p149 = por %p147, %p148
      %p151 = scmp.ne.s32.totalorder %s136, %s150
      %p152 = scmp.eq.s32.totalorder %s30, 0
      %p153 = por %p151, %p152
      %s155 = sadd.s32 %s154, 1
      %p158 = scmp.eq.s32.totalorder %s24, 3
      %p159 = scmp.ne.s32.totalorder %s154, %s156
      %p160 = scmp.eq.s32.totalorder %s24, 0
      %p161 = por %p159, %p160
      %p162 = scmp.ne.s32.totalorder %s154, %s156
      %p163 = scmp.eq.s32.totalorder %s29, 3
      %p164 = por %p162, %p163
      %p165 = scmp.ne.s32.totalorder %s156, %s157
      %p166 = scmp.eq.s32.totalorder %s29, 0
      %p167 = por %p165, %p166
      %p168 = scmp.ne.s32.totalorder %s156, %s157
      %p169 = scmp.eq.s32.totalorder %s30, 3
      %p170 = por %p168, %p169
      %p172 = scmp.ne.s32.totalorder %s157, %s171
      %p173 = scmp.eq.s32.totalorder %s30, 0
      %p174 = por %p172, %p173
      %s176 = sadd.s32 %s175, 1
      %p179 = scmp.eq.s32.totalorder %s24, 3
      %p180 = scmp.ne.s32.totalorder %s175, %s177
      %p181 = scmp.eq.s32.totalorder %s24, 0
      %p182 = por %p180, %p181
      %p183 = scmp.ne.s32.totalorder %s175, %s177
      %p184 = scmp.eq.s32.totalorder %s29, 3
      %p185 = por %p183, %p184
      %p186 = scmp.ne.s32.totalorder %s177, %s178
      %p187 = scmp.eq.s32.totalorder %s29, 0
      %p188 = por %p186, %p187
      %p189 = scmp.ne.s32.totalorder %s177, %s178
      %p190 = scmp.eq.s32.totalorder %s30, 3
      %p191 = por %p189, %p190
      %p193 = scmp.ne.s32.totalorder %s178, %s192
      %p194 = scmp.eq.s32.totalorder %s30, 0
      %p195 = por %p193, %p194
      %s196 = ssub.s32 %s31, %s43
      %s197 = ssub.s32 %s32, %s39
      %s198 = sor.u32 %s196, %s197
      %p199 = scmp.eq.s32.totalorder %s198, 0
      %s201 = sadd.s32 %s200, 1
      %s202 = scalar_select %p199, %s200, %s201
      %p205 = pneg %p199
      %p206 = scmp.eq.s32.totalorder %s24, 3
      %p207 = por %p205, %p206
      %p208 = scmp.ne.s32.totalorder %s200, %s203
      %p209 = scmp.eq.s32.totalorder %s24, 0
      %p210 = por %p208, %p209
      %p211 = scmp.ne.s32.totalorder %s200, %s203
      %p212 = scmp.eq.s32.totalorder %s29, 3
      %p213 = por %p211, %p212
      %p214 = scmp.ne.s32.totalorder %s203, %s204
      %p215 = scmp.eq.s32.totalorder %s29, 0
      %p216 = por %p214, %p215
      %p217 = scmp.ne.s32.totalorder %s203, %s204
      %p218 = scmp.eq.s32.totalorder %s30, 3
      %p219 = por %p217, %p218
      %p221 = scmp.ne.s32.totalorder %s204, %s220
      %p222 = scmp.eq.s32.totalorder %s30, 0
      %p223 = por %p221, %p222
      %s224 = ssub.s32 %s31, %s43
      %s225 = ssub.s32 %s32, %s39
      %s226 = sor.u32 %s224, %s225
      %p227 = scmp.eq.s32.totalorder %s226, 0
      %s229 = sadd.s32 %s228, 1
      %s230 = scalar_select %p227, %s228, %s229
      %p233 = pneg %p227
      %p234 = scmp.eq.s32.totalorder %s24, 3
      %p235 = por %p233, %p234
      %p236 = scmp.ne.s32.totalorder %s228, %s231
      %p237 = scmp.eq.s32.totalorder %s24, 0
      %p238 = por %p236, %p237
      %p239 = scmp.ne.s32.totalorder %s228, %s231
      %p240 = scmp.eq.s32.totalorder %s29, 3
      %p241 = por %p239, %p240
      %p242 = scmp.ne.s32.totalorder %s231, %s232
      %p243 = scmp.eq.s32.totalorder %s29, 0
      %p244 = por %p242, %p243
      %p245 = scmp.ne.s32.totalorder %s231, %s232
      %p246 = scmp.eq.s32.totalorder %s30, 3
      %p247 = por %p245, %p246
      %p249 = scmp.ne.s32.totalorder %s232, %s248
      %p250 = scmp.eq.s32.totalorder %s30, 0
      %p251 = por %p249, %p250
      %p252 = scmp.le.s32.totalorder 1, %s24
      %p253 = scmp.lt.s32.totalorder %s24, 5
      %p254 = pnand %p252, %p253
      %p255 = pneg %p254
      // Predicated region
      $region9: #{bottleneck_forward.1} parent=5 // pred_check
        _
      $region10: #{bottleneck_forward.1} parent=5 // pred_check_branch
        %257 = sbr.rel (%p254) target = $region12
      $region11: #{bottleneck_forward.1} parent=5 // pred_region
        %s258 = ssub.s32 %s24, 1
        // Predicated region
        $region13: #{bottleneck_forward.1} parent=11 // pred_check
          %p259 = pneg %p83
        $region14: #{bottleneck_forward.1} parent=11 // pred_check_branch
          %261 = sbr.rel (%p259) target = $region16
        $region15: #{bottleneck_forward.1} parent=11 // pred_region
          _
        $region16: #{bottleneck_forward.1} parent=11 // pred_fallthru
          _
        // Predicated region
        $region17: #{bottleneck_forward.1} parent=11 // pred_check
          %p262 = pneg %p104
        $region18: #{bottleneck_forward.1} parent=11 // pred_check_branch
          %264 = sbr.rel (%p262) target = $region20
        $region19: #{bottleneck_forward.1} parent=11 // pred_region
          _
        $region20: #{bottleneck_forward.1} parent=11 // pred_fallthru
          _
        // Predicated region
        $region21: #{bottleneck_forward.1} parent=11 // pred_check
          %p265 = pneg %p125
        $region22: #{bottleneck_forward.1} parent=11 // pred_check_branch
          %267 = sbr.rel (%p265) target = $region24
        $region23: #{bottleneck_forward.1} parent=11 // pred_region
          _
        $region24: #{bottleneck_forward.1} parent=11 // pred_fallthru
          _
        // Predicated region
        $region25: #{bottleneck_forward.1} parent=11 // pred_check
          %p268 = pneg %p146
        $region26: #{bottleneck_forward.1} parent=11 // pred_check_branch
          %270 = sbr.rel (%p268) target = $region28
        $region27: #{bottleneck_forward.1} parent=11 // pred_region
          _
        $region28: #{bottleneck_forward.1} parent=11 // pred_fallthru
          _
        // Predicated region
        $region29: #{bottleneck_forward.1} parent=11 // pred_check
          %p271 = pneg %p167
        $region30: #{bottleneck_forward.1} parent=11 // pred_check_branch
          %273 = sbr.rel (%p271) target = $region32
        $region31: #{bottleneck_forward.1} parent=11 // pred_region
          _
        $region32: #{bottleneck_forward.1} parent=11 // pred_fallthru
          _
        // Predicated region
        $region33: #{bottleneck_forward.1} parent=11 // pred_check
          %p274 = pneg %p188
        $region34: #{bottleneck_forward.1} parent=11 // pred_check_branch
          %276 = sbr.rel (%p274) target = $region36
        $region35: #{bottleneck_forward.1} parent=11 // pred_region
          _
        $region36: #{bottleneck_forward.1} parent=11 // pred_fallthru
          _
      $region12: #{bottleneck_forward.1} parent=5 // pred_fallthru
        _
      %p277 = scmp.lt.s32.totalorder %s24, 4
      // Predicated region
      $region37: #{bottleneck_forward.1} parent=5 // pred_check
        %p278 = pneg %p277
      $region38: #{bottleneck_forward.1} parent=5 // pred_check_branch
        %280 = sbr.rel (%p278) target = $region40
      $region39: #{bottleneck_forward.1} parent=5 // pred_region
        // Predicated region
        $region41: #{bottleneck_forward.1} parent=39 // pred_check
          %p281 = pneg %p56
        $region42: #{bottleneck_forward.1} parent=39 // pred_check_branch
          %283 = sbr.rel (%p281) target = $region44
        $region43: #{bottleneck_forward.1} parent=39 // pred_region
          %s284 = sand.u32 %s46, 1
          %s285 = scalar_lea.sflag [#allocation4], %s284
          %s286 = sand.u32 %s46, 1
          %s287 = smul.addr %s286, 256
          %s288 = scalar_lea.vmem [#allocation3], %s287
          %s290 = ssub.s32 4096, 4096
          %291 = vsyncadd %s285, %s290
          %s292 = smul.addr %s31, 32
          %s293 = smul.addr %s292, 128
          %s294 = scalar_lea.hbm %s0, %s293
          %s295 = sshll.u32 %s288, 4
          %s296 = int_to_ptr.vmem [resolvable:$true] %s295
          %301 = dma.hbm_to_vmem [thread:$0]  %s294, 4096, %s296, %s285, 128, 128, 8
        $region44: #{bottleneck_forward.1} parent=39 // pred_fallthru
          _
      $region40: #{bottleneck_forward.1} parent=5 // pred_fallthru
        _
      %p302 = scmp.le.s32.totalorder 1, %s24
      %p303 = scmp.lt.s32.totalorder %s24, 5
      %p304 = pnand %p302, %p303
      %p305 = pneg %p304
      // Predicated region
      $region45: #{bottleneck_forward.1} parent=5 // pred_check
        _
      $region46: #{bottleneck_forward.1} parent=5 // pred_check_branch
        %307 = sbr.rel (%p304) target = $region48
      $region47: #{bottleneck_forward.1} parent=5 // pred_region
        %s308 = ssub.s32 %s24, 1
        %s309 = sand.u32 %s49, 1
        %s310 = scalar_lea.sflag [#allocation4], %s309
        %s311 = sand.u32 %s49, 1
        %s312 = smul.addr %s311, 256
        %s313 = scalar_lea.vmem [#allocation3], %s312
        // Predicated region
        $region49: #{bottleneck_forward.1} parent=47 // pred_check
          %p314 = pneg %p62
        $region50: #{bottleneck_forward.1} parent=47 // pred_check_branch
          %316 = sbr.rel (%p314) target = $region52
        $region51: #{bottleneck_forward.1} parent=47 // pred_region
          %317 = dma.done %s310, 4096
        $region52: #{bottleneck_forward.1} parent=47 // pred_fallthru
          _
        %s318 = sand.u32 %s49, 1
        %s319 = scalar_lea.sflag [#allocation4], %s318
        %s320 = sand.u32 %s49, 1
        %s321 = smul.addr %s320, 256
        %s322 = scalar_lea.vmem [#allocation3], %s321
        %p323 = pneg %p62
        %p324 = pneg %p59
        %p325 = pneg %p83
        %p326 = pneg %p80
        %p327 = pneg %p104
        %p328 = pneg %p101
        %p329 = pneg %p125
        %p330 = pneg %p122
        %p331 = pneg %p146
        %p332 = pneg %p143
        %p333 = pneg %p167
        %p334 = pneg %p164
        %p335 = pneg %p188
        %p336 = pneg %p185
        %p337 = pneg %p216
        %p338 = pneg %p213
        %s339 = sand.u32 %s203, 1
        %s340 = scalar_lea.sflag [#allocation5], %s339
        %s341 = sand.u32 %s203, 1
        %s342 = smul.addr %s341, 128
        %s343 = scalar_lea.vmem [#allocation6], %s342
        %p344 = pneg %p244
        %p345 = pneg %p241
        %s346 = sand.u32 %s231, 1
        %s347 = scalar_lea.sflag [#allocation8], %s346
        %s348 = sand.u32 %s231, 1
        %s349 = smul.addr %s348, 128
        %s350 = scalar_lea.vmem [#allocation7], %s349
        %s351 = smul.u32 16, %s34
        %s352 = smul.u32 16, %s34
        %s354 = smul.u32 %s34, 128
        %v355 = vld [vmem:[%s2] sm:$0x1]
        %v356 = vld [vmem:[%s1] sm:$0xf]
        %v357 = vld [vmem:[%s1 + $0x4] sm:$0xf]
        %v358 = vld [vmem:[%s1 + $0x8] sm:$0xf]
        %v359 = vld [vmem:[%s1 + $0xc] sm:$0xf]
        %s360 = scalar_lea.vmem %s313, %s354 [#allocation3]
        %v361 = vld [vmem:[%s360] sm:$0xff]
        %v362 = vld [vmem:[%s360 + $0x8] sm:$0xff]
        %v363 = vld [vmem:[%s360 + $0x10] sm:$0xff]
        %v364 = vld [vmem:[%s360 + $0x18] sm:$0xff]
        %v365 = vld [vmem:[%s360 + $0x20] sm:$0xff]
        %v366 = vld [vmem:[%s360 + $0x28] sm:$0xff]
        %v367 = vld [vmem:[%s360 + $0x30] sm:$0xff]
        %v368 = vld [vmem:[%s360 + $0x38] sm:$0xff]
        %v369 = vld [vmem:[%s360 + $0x40] sm:$0xff]
        %v370 = vld [vmem:[%s360 + $0x48] sm:$0xff]
        %v371 = vld [vmem:[%s360 + $0x50] sm:$0xff]
        %v372 = vld [vmem:[%s360 + $0x58] sm:$0xff]
        %v373 = vld [vmem:[%s360 + $0x60] sm:$0xff]
        %v374 = vld [vmem:[%s360 + $0x68] sm:$0xff]
        %v375 = vld [vmem:[%s360 + $0x70] sm:$0xff]
        %v376 = vld [vmem:[%s360 + $0x78] sm:$0xff]
        %v377 = vpack.c.bf16 %v362, %v361
        %v378 = vpack.c.bf16 %v364, %v363
        %v379 = vpack.c.bf16 %v366, %v365
        %v380 = vpack.c.bf16 %v368, %v367
        %v381 = vpack.c.bf16 %v370, %v369
        %v382 = vpack.c.bf16 %v372, %v371
        %v383 = vpack.c.bf16 %v374, %v373
        %v384 = vpack.c.bf16 %v376, %v375
        %v386 = vlaneseq
        %v387 = vshrl.u32 %v386, 7
        %v388 = vsub.s32 0, %v387
        %v389 = vrot.slane %v355, %v388
        %v395 = vunpack.c.l.b16 %v356
        %v396 = vunpack.c.l.b16 %v357
        %v397 = vunpack.c.l.b16 %v358
        %v398 = vunpack.c.l.b16 %v359
        %v399 = vpack.c.b16 %v396, %v395
        %v400 = vpack.c.b16 %v398, %v397
        %vm403 = vcmask 261120
        %v405 = vsel %vm403, %v377, 0
        %v408 = vsel %vm403, %v378, 0
        %v411 = vsel %vm403, %v379, 0
        %v414 = vsel %vm403, %v380, 0
        %v417 = vsel %vm403, %v381, 0
        %v420 = vsel %vm403, %v382, 0
        %v423 = vsel %vm403, %v383, 0
        %v426 = vsel %vm403, %v384, 0
        %428 = vmatprep.subr.bf16.mxu0 0
        %429 = vmatpush1.bf16.msra.mxu0 %v399
        %430 = vmatprep.subr.bf16.mxu0 0
        %431 = vmatpush1.bf16.msra.mxu0 %v400
        %432 = vmatprep.subr.bf16.mxu0 0
        %433 = vmatpush1.bf16.msra.mxu0 0
        %434 = vmatprep.subr.bf16.mxu0 0
        %435 = vmatpush1.bf16.msra.mxu0 0
        %436 = vmatprep.subr.bf16.mxu0 0
        %437 = vmatpush1.bf16.msra.mxu0 0
        %438 = vmatprep.subr.bf16.mxu0 0
        %439 = vmatpush1.bf16.msra.mxu0 0
        %440 = vmatprep.subr.bf16.mxu0 0
        %441 = vmatpush1.bf16.msra.mxu0 0
        %442 = vmatprep.subr.bf16.mxu0 0
        %443 = vmatpush1.bf16.msra.mxu0 0
        %444 = vmatprep.subr.bf16.mxu0 0
        %445 = vmatpush1.bf16.msra.mxu0 0
        %446 = vmatprep.subr.bf16.mxu0 0
        %447 = vmatpush1.bf16.msra.mxu0 0
        %448 = vmatprep.subr.bf16.mxu0 0
        %449 = vmatpush1.bf16.msra.mxu0 0
        %450 = vmatprep.subr.bf16.mxu0 0
        %451 = vmatpush1.bf16.msra.mxu0 0
        %452 = vmatprep.subr.bf16.mxu0 0
        %453 = vmatpush1.bf16.msra.mxu0 0
        %454 = vmatprep.subr.bf16.mxu0 0
        %455 = vmatpush1.bf16.msra.mxu0 0
        %456 = vmatprep.subr.bf16.mxu0 0
        %457 = vmatpush1.bf16.msra.mxu0 0
        %458 = vmatprep.subr.bf16.mxu0 0
        %459 = vmatpush1.bf16.msra.mxu0 0
        %460 = vmatprep.mubr.bf16.mxu0 0
        %461 = vmatmul.mubr.bf16.gmra.mrb[0].mxu0 %v405
        %v462 = vpop.f32.mrb[0].mxu0
        %v463 = vadd.f32 %v389, %v462
        %v464 = vpop.f32.mrb[0].mxu0
        %v465 = vpop.f32.mrb[0].mxu0
        %v466 = vadd.f32 %v389, %v465
        %v467 = vpop.f32.mrb[0].mxu0
        %468 = vmatprep.mubr.bf16.mxu0 0
        %469 = vmatmul.mubr.bf16.gmra.mrb[0].mxu0 %v408
        %v470 = vpop.f32.mrb[0].mxu0
        %v471 = vadd.f32 %v389, %v470
        %v472 = vpop.f32.mrb[0].mxu0
        %v473 = vpop.f32.mrb[0].mxu0
        %v474 = vadd.f32 %v389, %v473
        %v475 = vpop.f32.mrb[0].mxu0
        %476 = vmatprep.mubr.bf16.mxu0 0
        %477 = vmatmul.mubr.bf16.gmra.mrb[0].mxu0 %v411
        %v478 = vpop.f32.mrb[0].mxu0
        %v479 = vadd.f32 %v389, %v478
        %v480 = vpop.f32.mrb[0].mxu0
        %v481 = vpop.f32.mrb[0].mxu0
        %v482 = vadd.f32 %v389, %v481
        %v483 = vpop.f32.mrb[0].mxu0
        %484 = vmatprep.mubr.bf16.mxu0 0
        %485 = vmatmul.mubr.bf16.gmra.mrb[0].mxu0 %v414
        %v486 = vpop.f32.mrb[0].mxu0
        %v487 = vadd.f32 %v389, %v486
        %v488 = vpop.f32.mrb[0].mxu0
        %v489 = vpop.f32.mrb[0].mxu0
        %v490 = vadd.f32 %v389, %v489
        %v491 = vpop.f32.mrb[0].mxu0
        %492 = vmatprep.mubr.bf16.mxu0 0
        %493 = vmatmul.mubr.bf16.gmra.mrb[0].mxu0 %v417
        %v494 = vpop.f32.mrb[0].mxu0
        %v495 = vadd.f32 %v389, %v494
        %v496 = vpop.f32.mrb[0].mxu0
        %v497 = vpop.f32.mrb[0].mxu0
        %v498 = vadd.f32 %v389, %v497
        %v499 = vpop.f32.mrb[0].mxu0
        %500 = vmatprep.mubr.bf16.mxu0 0
        %501 = vmatmul.mubr.bf16.gmra.mrb[0].mxu0 %v420
        %v502 = vpop.f32.mrb[0].mxu0
        %v503 = vadd.f32 %v389, %v502
        %v504 = vpop.f32.mrb[0].mxu0
        %v505 = vpop.f32.mrb[0].mxu0
        %v506 = vadd.f32 %v389, %v505
        %v507 = vpop.f32.mrb[0].mxu0
        %508 = vmatprep.mubr.bf16.mxu0 0
        %509 = vmatmul.mubr.bf16.gmra.mrb[0].mxu0 %v423
        %v510 = vpop.f32.mrb[0].mxu0
        %v511 = vadd.f32 %v389, %v510
        %v512 = vpop.f32.mrb[0].mxu0
        %v513 = vpop.f32.mrb[0].mxu0
        %v514 = vadd.f32 %v389, %v513
        %v515 = vpop.f32.mrb[0].mxu0
        %516 = vmatprep.mubr.bf16.mxu0 0
        %517 = vmatmul.mubr.bf16.gmra.mrb[0].mxu0 %v426
        %v518 = vpop.f32.mrb[0].mxu0
        %v519 = vadd.f32 %v389, %v518
        %v520 = vpop.f32.mrb[0].mxu0
        %v521 = vpop.f32.mrb[0].mxu0
        %v522 = vadd.f32 %v389, %v521
        %v523 = vpop.f32.mrb[0].mxu0
        %524 = vdwg.mxu0
        %v525 = vmax.f32 %v463, 0.0
        %v526 = vmax.f32 %v466, 0.0
        %v527 = vmax.f32 %v471, 0.0
        %v528 = vmax.f32 %v474, 0.0
        %v529 = vmax.f32 %v479, 0.0
        %v530 = vmax.f32 %v482, 0.0
        %v531 = vmax.f32 %v487, 0.0
        %v532 = vmax.f32 %v490, 0.0
        %v533 = vmax.f32 %v495, 0.0
        %v534 = vmax.f32 %v498, 0.0
        %v535 = vmax.f32 %v503, 0.0
        %v536 = vmax.f32 %v506, 0.0
        %v537 = vmax.f32 %v511, 0.0
        %v538 = vmax.f32 %v514, 0.0
        %v539 = vmax.f32 %v519, 0.0
        %v540 = vmax.f32 %v522, 0.0
        %vm541 = vcmask 64512
        %542 = vst.msk [vmem:[#allocation2 + $0x10] sm:$0xff] %vm541, %v525
        %543 = vst.msk [vmem:[#allocation2 + $0x18] sm:$0xff] %vm541, %v526
        %544 = vst.msk [vmem:[#allocation2 + $0x20] sm:$0xff] %vm541, %v527
        %545 = vst.msk [vmem:[#allocation2 + $0x28] sm:$0xff] %vm541, %v528
        %546 = vst.msk [vmem:[#allocation2 + $0x30] sm:$0xff] %vm541, %v529
        %547 = vst.msk [vmem:[#allocation2 + $0x38] sm:$0xff] %vm541, %v530
        %548 = vst.msk [vmem:[#allocation2 + $0x40] sm:$0xff] %vm541, %v531
        %549 = vst.msk [vmem:[#allocation2 + $0x48] sm:$0xff] %vm541, %v532
        %550 = vst.msk [vmem:[#allocation2 + $0x50] sm:$0xff] %vm541, %v533
        %551 = vst.msk [vmem:[#allocation2 + $0x58] sm:$0xff] %vm541, %v534
        %552 = vst.msk [vmem:[#allocation2 + $0x60] sm:$0xff] %vm541, %v535
        %553 = vst.msk [vmem:[#allocation2 + $0x68] sm:$0xff] %vm541, %v536
        %554 = vst.msk [vmem:[#allocation2 + $0x70] sm:$0xff] %vm541, %v537
        %555 = vst.msk [vmem:[#allocation2 + $0x78] sm:$0xff] %vm541, %v538
        %556 = vst.msk [vmem:[#allocation2 + $0x80] sm:$0xff] %vm541, %v539
        %557 = vst.msk [vmem:[#allocation2 + $0x88] sm:$0xff] %vm541, %v540
        %p558 = scmp.eq.s32.totalorder %s34, 0
        // Predicated region
        $region53: #{bottleneck_forward.1} parent=47 // pred_check
          %p559 = pneg %p558
        $region54: #{bottleneck_forward.1} parent=47 // pred_check_branch
          %561 = sbr.rel (%p559) target = $region56
        $region55: #{bottleneck_forward.1} parent=47 // pred_region
          %562 = vst.msk [vmem:[#allocation2] sm:$0xff] %vm541, 0.0
          %563 = vst.msk [vmem:[#allocation2 + $0x8] sm:$0xff] %vm541, 0.0
        $region56: #{bottleneck_forward.1} parent=47 // pred_fallthru
          _
        %p564 = scmp.gt.s32.totalorder %s34, 0
        // Predicated region
        $region57: #{bottleneck_forward.1} parent=47 // pred_check
          %p565 = pneg %p564
        $region58: #{bottleneck_forward.1} parent=47 // pred_check_branch
          %567 = sbr.rel (%p565) target = $region60
        $region59: #{bottleneck_forward.1} parent=47 // pred_region
          %s568 = ssub.s32 %s354, 16
          %s569 = scalar_lea.vmem %s313, %s568 [#allocation3]
          %v570 = vld [vmem:[%s569] sm:$0xff]
          %v571 = vld [vmem:[%s569 + $0x8] sm:$0xff]
          %v572 = vpack.c.bf16 %v571, %v570
          %v574 = vsel %vm403, %v572, 0
          %576 = vmatprep.subr.bf16.mxu0 0
          %577 = vmatpush1.bf16.msra.mxu0 %v399
          %578 = vmatprep.subr.bf16.mxu0 0
          %579 = vmatpush1.bf16.msra.mxu0 %v400
          %580 = vmatprep.subr.bf16.mxu0 0
          %581 = vmatpush1.bf16.msra.mxu0 0
          %582 = vmatprep.subr.bf16.mxu0 0
          %583 = vmatpush1.bf16.msra.mxu0 0
          %584 = vmatprep.subr.bf16.mxu0 0
          %585 = vmatpush1.bf16.msra.mxu0 0
          %586 = vmatprep.subr.bf16.mxu0 0
          %587 = vmatpush1.bf16.msra.mxu0 0
          %588 = vmatprep.subr.bf16.mxu0 0
          %589 = vmatpush1.bf16.msra.mxu0 0
          %590 = vmatprep.subr.bf16.mxu0 0
          %591 = vmatpush1.bf16.msra.mxu0 0
          %592 = vmatprep.subr.bf16.mxu0 0
          %593 = vmatpush1.bf16.msra.mxu0 0
          %594 = vmatprep.subr.bf16.mxu0 0
          %595 = vmatpush1.bf16.msra.mxu0 0
          %596 = vmatprep.subr.bf16.mxu0 0
          %597 = vmatpush1.bf16.msra.mxu0 0
          %598 = vmatprep.subr.bf16.mxu0 0
          %599 = vmatpush1.bf16.msra.mxu0 0
          %600 = vmatprep.subr.bf16.mxu0 0
          %601 = vmatpush1.bf16.msra.mxu0 0
          %602 = vmatprep.subr.bf16.mxu0 0
          %603 = vmatpush1.bf16.msra.mxu0 0
          %604 = vmatprep.subr.bf16.mxu0 0
          %605 = vmatpush1.bf16.msra.mxu0 0
          %606 = vmatprep.subr.bf16.mxu0 0
          %607 = vmatpush1.bf16.msra.mxu0 0
          %608 = vmatprep.mubr.bf16.mxu0 0
          %609 = vmatmul.mubr.bf16.gmra.mrb[0].mxu0 %v574
          %v610 = vpop.f32.mrb[0].mxu0
          %v611 = vadd.f32 %v389, %v610
          %v612 = vpop.f32.mrb[0].mxu0
          %v613 = vpop.f32.mrb[0].mxu0
          %v614 = vadd.f32 %v389, %v613
          %v615 = vpop.f32.mrb[0].mxu0
          %616 = vdwg.mxu0
          %v617 = vmax.f32 %v611, 0.0
          %v618 = vmax.f32 %v614, 0.0
          %619 = vst.msk [vmem:[#allocation2] sm:$0xff] %vm541, %v617
          %620 = vst.msk [vmem:[#allocation2 + $0x8] sm:$0xff] %vm541, %v618
        $region60: #{bottleneck_forward.1} parent=47 // pred_fallthru
          _
        %p621 = scmp.eq.s32.totalorder %s34, 1
        // Predicated region
        $region61: #{bottleneck_forward.1} parent=47 // pred_check
          %p622 = pneg %p621
        $region62: #{bottleneck_forward.1} parent=47 // pred_check_branch
          %624 = sbr.rel (%p622) target = $region64
        $region63: #{bottleneck_forward.1} parent=47 // pred_region
          %625 = vst.msk [vmem:[#allocation2 + $0x90] sm:$0xff] %vm541, 0.0
          %626 = vst.msk [vmem:[#allocation2 + $0x98] sm:$0xff] %vm541, 0.0
        $region64: #{bottleneck_forward.1} parent=47 // pred_fallthru
          _
        %p627 = scmp.lt.s32.totalorder %s34, 1
        // Predicated region
        $region65: #{bottleneck_forward.1} parent=47 // pred_check
          %p628 = pneg %p627
        $region66: #{bottleneck_forward.1} parent=47 // pred_check_branch
          %630 = sbr.rel (%p628) target = $region68
        $region67: #{bottleneck_forward.1} parent=47 // pred_region
          %s631 = sadd.s32 %s354, 128
          %s632 = scalar_lea.vmem %s313, %s631 [#allocation3]
          %v633 = vld [vmem:[%s632] sm:$0xff]
          %v634 = vld [vmem:[%s632 + $0x8] sm:$0xff]
          %v635 = vpack.c.bf16 %v634, %v633
          %v637 = vsel %vm403, %v635, 0
          %639 = vmatprep.subr.bf16.mxu0 0
          %640 = vmatpush1.bf16.msra.mxu0 %v399
          %641 = vmatprep.subr.bf16.mxu0 0
          %642 = vmatpush1.bf16.msra.mxu0 %v400
          %643 = vmatprep.subr.bf16.mxu0 0
          %644 = vmatpush1.bf16.msra.mxu0 0
          %645 = vmatprep.subr.bf16.mxu0 0
          %646 = vmatpush1.bf16.msra.mxu0 0
          %647 = vmatprep.subr.bf16.mxu0 0
          %648 = vmatpush1.bf16.msra.mxu0 0
          %649 = vmatprep.subr.bf16.mxu0 0
          %650 = vmatpush1.bf16.msra.mxu0 0
          %651 = vmatprep.subr.bf16.mxu0 0
          %652 = vmatpush1.bf16.msra.mxu0 0
          %653 = vmatprep.subr.bf16.mxu0 0
          %654 = vmatpush1.bf16.msra.mxu0 0
          %655 = vmatprep.subr.bf16.mxu0 0
          %656 = vmatpush1.bf16.msra.mxu0 0
          %657 = vmatprep.subr.bf16.mxu0 0
          %658 = vmatpush1.bf16.msra.mxu0 0
          %659 = vmatprep.subr.bf16.mxu0 0
          %660 = vmatpush1.bf16.msra.mxu0 0
          %661 = vmatprep.subr.bf16.mxu0 0
          %662 = vmatpush1.bf16.msra.mxu0 0
          %663 = vmatprep.subr.bf16.mxu0 0
          %664 = vmatpush1.bf16.msra.mxu0 0
          %665 = vmatprep.subr.bf16.mxu0 0
          %666 = vmatpush1.bf16.msra.mxu0 0
          %667 = vmatprep.subr.bf16.mxu0 0
          %668 = vmatpush1.bf16.msra.mxu0 0
          %669 = vmatprep.subr.bf16.mxu0 0
          %670 = vmatpush1.bf16.msra.mxu0 0
          %671 = vmatprep.mubr.bf16.mxu0 0
          %672 = vmatmul.mubr.bf16.gmra.mrb[0].mxu0 %v637
          %v673 = vpop.f32.mrb[0].mxu0
          %v674 = vadd.f32 %v389, %v673
          %v675 = vpop.f32.mrb[0].mxu0
          %v676 = vpop.f32.mrb[0].mxu0
          %v677 = vadd.f32 %v389, %v676
          %v678 = vpop.f32.mrb[0].mxu0
          %679 = vdwg.mxu0
          %v680 = vmax.f32 %v674, 0.0
          %v681 = vmax.f32 %v677, 0.0
          %682 = vst.msk [vmem:[#allocation2 + $0x90] sm:$0xff] %vm541, %v680
          %683 = vst.msk [vmem:[#allocation2 + $0x98] sm:$0xff] %vm541, %v681
        $region68: #{bottleneck_forward.1} parent=47 // pred_fallthru
          _
        %v684 = vld [vmem:[#allocation2] sm:$0xff]
        %v685 = vld [vmem:[#allocation2 + $0x8] sm:$0xff]
        %v686 = vld [vmem:[#allocation2 + $0x10] sm:$0xff]
        %v687 = vld [vmem:[#allocation2 + $0x18] sm:$0xff]
        %v688 = vld [vmem:[#allocation2 + $0x20] sm:$0xff]
        %v689 = vld [vmem:[#allocation2 + $0x28] sm:$0xff]
        %v690 = vld [vmem:[#allocation2 + $0x30] sm:$0xff]
        %v691 = vld [vmem:[#allocation2 + $0x38] sm:$0xff]
        %v692 = vld [vmem:[#allocation2 + $0x40] sm:$0xff]
        %v693 = vld [vmem:[#allocation2 + $0x48] sm:$0xff]
        %v694 = vld [vmem:[#allocation2 + $0x50] sm:$0xff]
        %v695 = vld [vmem:[#allocation2 + $0x58] sm:$0xff]
        %v696 = vld [vmem:[#allocation2 + $0x60] sm:$0xff]
        %v697 = vld [vmem:[#allocation2 + $0x68] sm:$0xff]
        %v698 = vld [vmem:[#allocation2 + $0x70] sm:$0xff]
        %v699 = vld [vmem:[#allocation2 + $0x78] sm:$0xff]
        %v700 = vld [vmem:[#allocation2 + $0x80] sm:$0xff]
        %v701 = vld [vmem:[#allocation2 + $0x88] sm:$0xff]
        %v702 = vld [vmem:[#allocation2 + $0x90] sm:$0xff]
        %v703 = vld [vmem:[#allocation2 + $0x98] sm:$0xff]
        %v704 = vlaneseq
        %v705 = vshrl.u32 %v704, 7
        %v706 = vadd.s32 %v705, 8
        %v707 = vadd.s32 %v705, 16
        %v708 = vadd.s32 %v705, 24
        %v709 = vadd.s32 %v705, 32
        %v710 = vadd.s32 %v705, 40
        %v711 = vadd.s32 %v705, 48
        %v712 = vadd.s32 %v705, 56
        %v713 = vadd.s32 %v705, 64
        %v714 = vadd.s32 %v705, 72
        %v715 = vadd.s32 %v705, 80
        %v716 = vadd.s32 %v705, 88
        %v717 = vadd.s32 %v705, 96
        %v718 = vadd.s32 %v705, 104
        %v719 = vadd.s32 %v705, 112
        %v720 = vadd.s32 %v705, 120
        %v721 = vadd.s32 %v705, 128
        %v722 = vadd.s32 %v705, 136
        %v723 = vadd.s32 %v705, 144
        %v724 = vadd.s32 %v705, 152
        %vm725 = vcmp.lt.s32.totalorder %v705, 0
        %v726 = vsub.s32 0, %v705
        %v727 = vsel %vm725, %v726, %v705
        %v728 = vshrl.u32 %v727, 4
        %v729 = vand.u32 %v727, 15
        %v730 = vsub.s32 0, %v729
        %v731 = vsel %vm725, %v730, %v729
        %vm732 = vcmp.lt.s32.totalorder %v706, 0
        %v733 = vsub.s32 0, %v706
        %v734 = vsel %vm732, %v733, %v706
        %v735 = vshrl.u32 %v734, 4
        %v736 = vand.u32 %v734, 15
        %v737 = vsub.s32 0, %v736
        %v738 = vsel %vm732, %v737, %v736
        %vm739 = vcmp.lt.s32.totalorder %v707, 0
        %v740 = vsub.s32 0, %v707
        %v741 = vsel %vm739, %v740, %v707
        %v742 = vshrl.u32 %v741, 4
        %v743 = vand.u32 %v741, 15
        %v744 = vsub.s32 0, %v743
        %v745 = vsel %vm739, %v744, %v743
        %vm746 = vcmp.lt.s32.totalorder %v708, 0
        %v747 = vsub.s32 0, %v708
        %v748 = vsel %vm746, %v747, %v708
        %v749 = vshrl.u32 %v748, 4
        %v750 = vand.u32 %v748, 15
        %v751 = vsub.s32 0, %v750
        %v752 = vsel %vm746, %v751, %v750
        %vm753 = vcmp.lt.s32.totalorder %v709, 0
        %v754 = vsub.s32 0, %v709
        %v755 = vsel %vm753, %v754, %v709
        %v756 = vshrl.u32 %v755, 4
        %v757 = vand.u32 %v755, 15
        %v758 = vsub.s32 0, %v757
        %v759 = vsel %vm753, %v758, %v757
        %vm760 = vcmp.lt.s32.totalorder %v710, 0
        %v761 = vsub.s32 0, %v710
        %v762 = vsel %vm760, %v761, %v710
        %v763 = vshrl.u32 %v762, 4
        %v764 = vand.u32 %v762, 15
        %v765 = vsub.s32 0, %v764
        %v766 = vsel %vm760, %v765, %v764
        %vm767 = vcmp.lt.s32.totalorder %v711, 0
        %v768 = vsub.s32 0, %v711
        %v769 = vsel %vm767, %v768, %v711
        %v770 = vshrl.u32 %v769, 4
        %v771 = vand.u32 %v769, 15
        %v772 = vsub.s32 0, %v771
        %v773 = vsel %vm767, %v772, %v771
        %vm774 = vcmp.lt.s32.totalorder %v712, 0
        %v775 = vsub.s32 0, %v712
        %v776 = vsel %vm774, %v775, %v712
        %v777 = vshrl.u32 %v776, 4
        %v778 = vand.u32 %v776, 15
        %v779 = vsub.s32 0, %v778
        %v780 = vsel %vm774, %v779, %v778
        %vm781 = vcmp.lt.s32.totalorder %v713, 0
        %v782 = vsub.s32 0, %v713
        %v783 = vsel %vm781, %v782, %v713
        %v784 = vshrl.u32 %v783, 4
        %v785 = vand.u32 %v783, 15
        %v786 = vsub.s32 0, %v785
        %v787 = vsel %vm781, %v786, %v785
        %vm788 = vcmp.lt.s32.totalorder %v714, 0
        %v789 = vsub.s32 0, %v714
        %v790 = vsel %vm788, %v789, %v714
        %v791 = vshrl.u32 %v790, 4
        %v792 = vand.u32 %v790, 15
        %v793 = vsub.s32 0, %v792
        %v794 = vsel %vm788, %v793, %v792
        %vm795 = vcmp.lt.s32.totalorder %v715, 0
        %v796 = vsub.s32 0, %v715
        %v797 = vsel %vm795, %v796, %v715
        %v798 = vshrl.u32 %v797, 4
        %v799 = vand.u32 %v797, 15
        %v800 = vsub.s32 0, %v799
        %v801 = vsel %vm795, %v800, %v799
        %vm802 = vcmp.lt.s32.totalorder %v716, 0
        %v803 = vsub.s32 0, %v716
        %v804 = vsel %vm802, %v803, %v716
        %v805 = vshrl.u32 %v804, 4
        %v806 = vand.u32 %v804, 15
        %v807 = vsub.s32 0, %v806
        %v808 = vsel %vm802, %v807, %v806
        %vm809 = vcmp.lt.s32.totalorder %v717, 0
        %v810 = vsub.s32 0, %v717
        %v811 = vsel %vm809, %v810, %v717
        %v812 = vshrl.u32 %v811, 4
        %v813 = vand.u32 %v811, 15
        %v814 = vsub.s32 0, %v813
        %v815 = vsel %vm809, %v814, %v813
        %vm816 = vcmp.lt.s32.totalorder %v718, 0
        %v817 = vsub.s32 0, %v718
        %v818 = vsel %vm816, %v817, %v718
        %v819 = vshrl.u32 %v818, 4
        %v820 = vand.u32 %v818, 15
        %v821 = vsub.s32 0, %v820
        %v822 = vsel %vm816, %v821, %v820
        %vm823 = vcmp.lt.s32.totalorder %v719, 0
        %v824 = vsub.s32 0, %v719
        %v825 = vsel %vm823, %v824, %v719
        %v826 = vshrl.u32 %v825, 4
        %v827 = vand.u32 %v825, 15
        %v828 = vsub.s32 0, %v827
        %v829 = vsel %vm823, %v828, %v827
        %vm830 = vcmp.lt.s32.totalorder %v720, 0
        %v831 = vsub.s32 0, %v720
        %v832 = vsel %vm830, %v831, %v720
        %v833 = vshrl.u32 %v832, 4
        %v834 = vand.u32 %v832, 15
        %v835 = vsub.s32 0, %v834
        %v836 = vsel %vm830, %v835, %v834
        %vm837 = vcmp.lt.s32.totalorder %v721, 0
        %v838 = vsub.s32 0, %v721
        %v839 = vsel %vm837, %v838, %v721
        %v840 = vshrl.u32 %v839, 4
        %v841 = vand.u32 %v839, 15
        %v842 = vsub.s32 0, %v841
        %v843 = vsel %vm837, %v842, %v841
        %vm844 = vcmp.lt.s32.totalorder %v722, 0
        %v845 = vsub.s32 0, %v722
        %v846 = vsel %vm844, %v845, %v722
        %v847 = vshrl.u32 %v846, 4
        %v848 = vand.u32 %v846, 15
        %v849 = vsub.s32 0, %v848
        %v850 = vsel %vm844, %v849, %v848
        %vm851 = vcmp.lt.s32.totalorder %v723, 0
        %v852 = vsub.s32 0, %v723
        %v853 = vsel %vm851, %v852, %v723
        %v854 = vshrl.u32 %v853, 4
        %v855 = vand.u32 %v853, 15
        %v856 = vsub.s32 0, %v855
        %v857 = vsel %vm851, %v856, %v855
        %vm858 = vcmp.lt.s32.totalorder %v724, 0
        %v859 = vsub.s32 0, %v724
        %v860 = vsel %vm858, %v859, %v724
        %v861 = vshrl.u32 %v860, 4
        %v862 = vand.u32 %v860, 15
        %v863 = vsub.s32 0, %v862
        %v864 = vsel %vm858, %v863, %v862
        %vm865 = vcmp.ne.s32.totalorder %v731, 0
        %vm866 = vcmp.ne.s32.totalorder %v738, 0
        %vm867 = vcmp.ne.s32.totalorder %v745, 0
        %vm868 = vcmp.ne.s32.totalorder %v752, 0
        %vm869 = vcmp.ne.s32.totalorder %v759, 0
        %vm870 = vcmp.ne.s32.totalorder %v766, 0
        %vm871 = vcmp.ne.s32.totalorder %v773, 0
        %vm872 = vcmp.ne.s32.totalorder %v780, 0
        %vm873 = vcmp.ne.s32.totalorder %v787, 0
        %vm874 = vcmp.ne.s32.totalorder %v794, 0
        %vm875 = vcmp.ne.s32.totalorder %v801, 0
        %vm876 = vcmp.ne.s32.totalorder %v808, 0
        %vm877 = vcmp.ne.s32.totalorder %v815, 0
        %vm878 = vcmp.ne.s32.totalorder %v822, 0
        %vm879 = vcmp.ne.s32.totalorder %v829, 0
        %vm880 = vcmp.ne.s32.totalorder %v836, 0
        %vm881 = vcmp.ne.s32.totalorder %v843, 0
        %vm882 = vcmp.ne.s32.totalorder %v850, 0
        %vm883 = vcmp.ne.s32.totalorder %v857, 0
        %vm884 = vcmp.ne.s32.totalorder %v864, 0
        %vm885 = vcmp.lt.s32.totalorder %v731, 0
        %vm886 = vcmp.lt.s32.totalorder %v738, 0
        %vm887 = vcmp.lt.s32.totalorder %v745, 0
        %vm888 = vcmp.lt.s32.totalorder %v752, 0
        %vm889 = vcmp.lt.s32.totalorder %v759, 0
        %vm890 = vcmp.lt.s32.totalorder %v766, 0
        %vm891 = vcmp.lt.s32.totalorder %v773, 0
        %vm892 = vcmp.lt.s32.totalorder %v780, 0
        %vm893 = vcmp.lt.s32.totalorder %v787, 0
        %vm894 = vcmp.lt.s32.totalorder %v794, 0
        %vm895 = vcmp.lt.s32.totalorder %v801, 0
        %vm896 = vcmp.lt.s32.totalorder %v808, 0
        %vm897 = vcmp.lt.s32.totalorder %v815, 0
        %vm898 = vcmp.lt.s32.totalorder %v822, 0
        %vm899 = vcmp.lt.s32.totalorder %v829, 0
        %vm900 = vcmp.lt.s32.totalorder %v836, 0
        %vm901 = vcmp.lt.s32.totalorder %v843, 0
        %vm902 = vcmp.lt.s32.totalorder %v850, 0
        %vm903 = vcmp.lt.s32.totalorder %v857, 0
        %vm904 = vcmp.lt.s32.totalorder %v864, 0
        %vm905 = vmand %vm885, %vm865
        %vm906 = vmand %vm886, %vm866
        %vm907 = vmand %vm887, %vm867
        %vm908 = vmand %vm888, %vm868
        %vm909 = vmand %vm889, %vm869
        %vm910 = vmand %vm890, %vm870
        %vm911 = vmand %vm891, %vm871
        %vm912 = vmand %vm892, %vm872
        %vm913 = vmand %vm893, %vm873
        %vm914 = vmand %vm894, %vm874
        %vm915 = vmand %vm895, %vm875
        %vm916 = vmand %vm896, %vm876
        %vm917 = vmand %vm897, %vm877
        %vm918 = vmand %vm898, %vm878
        %vm919 = vmand %vm899, %vm879
        %vm920 = vmand %vm900, %vm880
        %vm921 = vmand %vm901, %vm881
        %vm922 = vmand %vm902, %vm882
        %vm923 = vmand %vm903, %vm883
        %vm924 = vmand %vm904, %vm884
        %v925 = vadd.s32 %v731, 16
        %v926 = vadd.s32 %v738, 16
        %v927 = vadd.s32 %v745, 16
        %v928 = vadd.s32 %v752, 16
        %v929 = vadd.s32 %v759, 16
        %v930 = vadd.s32 %v766, 16
        %v931 = vadd.s32 %v773, 16
        %v932 = vadd.s32 %v780, 16
        %v933 = vadd.s32 %v787, 16
        %v934 = vadd.s32 %v794, 16
        %v935 = vadd.s32 %v801, 16
        %v936 = vadd.s32 %v808, 16
        %v937 = vadd.s32 %v815, 16
        %v938 = vadd.s32 %v822, 16
        %v939 = vadd.s32 %v829, 16
        %v940 = vadd.s32 %v836, 16
        %v941 = vadd.s32 %v843, 16
        %v942 = vadd.s32 %v850, 16
        %v943 = vadd.s32 %v857, 16
        %v944 = vadd.s32 %v864, 16
        %v945 = vsel %vm905, %v925, %v731
        %v946 = vsel %vm906, %v926, %v738
        %v947 = vsel %vm907, %v927, %v745
        %v948 = vsel %vm908, %v928, %v752
        %v949 = vsel %vm909, %v929, %v759
        %v950 = vsel %vm910, %v930, %v766
        %v951 = vsel %vm911, %v931, %v773
        %v952 = vsel %vm912, %v932, %v780
        %v953 = vsel %vm913, %v933, %v787
        %v954 = vsel %vm914, %v934, %v794
        %v955 = vsel %vm915, %v935, %v801
        %v956 = vsel %vm916, %v936, %v808
        %v957 = vsel %vm917, %v937, %v815
        %v958 = vsel %vm918, %v938, %v822
        %v959 = vsel %vm919, %v939, %v829
        %v960 = vsel %vm920, %v940, %v836
        %v961 = vsel %vm921, %v941, %v843
        %v962 = vsel %vm922, %v942, %v850
        %v963 = vsel %vm923, %v943, %v857
        %v964 = vsel %vm924, %v944, %v864
        %v965 = vrot.slane %v684, 7
        %v966 = vrot.slane %v685, 7
        %v967 = vrot.slane %v686, 7
        %v968 = vrot.slane %v687, 7
        %v969 = vrot.slane %v688, 7
        %v970 = vrot.slane %v689, 7
        %v971 = vrot.slane %v690, 7
        %v972 = vrot.slane %v691, 7
        %v973 = vrot.slane %v692, 7
        %v974 = vrot.slane %v693, 7
        %v975 = vrot.slane %v694, 7
        %v976 = vrot.slane %v695, 7
        %v977 = vrot.slane %v696, 7
        %v978 = vrot.slane %v697, 7
        %v979 = vrot.slane %v698, 7
        %v980 = vrot.slane %v699, 7
        %v981 = vrot.slane %v700, 7
        %v982 = vrot.slane %v701, 7
        %v983 = vrot.slane %v702, 7
        %v984 = vrot.slane %v703, 7
        %vm985 = vcmp.lt.s32.totalorder %v705, 1
        %v986 = vsel %vm985, %v983, %v984
        %v987 = vsel %vm985, %v982, %v983
        %v988 = vsel %vm985, %v981, %v982
        %v989 = vsel %vm985, %v980, %v981
        %v990 = vsel %vm985, %v979, %v980
        %v991 = vsel %vm985, %v978, %v979
        %v992 = vsel %vm985, %v977, %v978
        %v993 = vsel %vm985, %v976, %v977
        %v994 = vsel %vm985, %v975, %v976
        %v995 = vsel %vm985, %v974, %v975
        %v996 = vsel %vm985, %v973, %v974
        %v997 = vsel %vm985, %v972, %v973
        %v998 = vsel %vm985, %v971, %v972
        %v999 = vsel %vm985, %v970, %v971
        %v1000 = vsel %vm985, %v969, %v970
        %v1001 = vsel %vm985, %v968, %v969
        %v1002 = vsel %vm985, %v967, %v968
        %v1003 = vsel %vm985, %v966, %v967
        %v1004 = vsel %vm985, %v965, %v966
        %v1005 = vsel %vm985, %v984, %v965
        %vm1006 = vcmp.ne.s32.totalorder %v945, 0
        %vm1007 = vcmp.ne.s32.totalorder %v946, 0
        %vm1008 = vcmp.ne.s32.totalorder %v947, 0
        %vm1009 = vcmp.ne.s32.totalorder %v948, 0
        %vm1010 = vcmp.ne.s32.totalorder %v949, 0
        %vm1011 = vcmp.ne.s32.totalorder %v950, 0
        %vm1012 = vcmp.ne.s32.totalorder %v951, 0
        %vm1013 = vcmp.ne.s32.totalorder %v952, 0
        %vm1014 = vcmp.ne.s32.totalorder %v953, 0
        %vm1015 = vcmp.ne.s32.totalorder %v954, 0
        %vm1016 = vcmp.ne.s32.totalorder %v955, 0
        %vm1017 = vcmp.ne.s32.totalorder %v956, 0
        %vm1018 = vcmp.ne.s32.totalorder %v957, 0
        %vm1019 = vcmp.ne.s32.totalorder %v958, 0
        %vm1020 = vcmp.ne.s32.totalorder %v959, 0
        %vm1021 = vcmp.ne.s32.totalorder %v960, 0
        %vm1022 = vcmp.ne.s32.totalorder %v961, 0
        %vm1023 = vcmp.ne.s32.totalorder %v962, 0
        %vm1024 = vcmp.ne.s32.totalorder %v963, 0
        %vm1025 = vcmp.ne.s32.totalorder %v964, 0
        %v1026 = vsel %vm1006, 1, 0
        %v1027 = vsel %vm1007, 1, 0
        %v1028 = vsel %vm1008, 1, 0
        %v1029 = vsel %vm1009, 1, 0
        %v1030 = vsel %vm1010, 1, 0
        %v1031 = vsel %vm1011, 1, 0
        %v1032 = vsel %vm1012, 1, 0
        %v1033 = vsel %vm1013, 1, 0
        %v1034 = vsel %vm1014, 1, 0
        %v1035 = vsel %vm1015, 1, 0
        %v1036 = vsel %vm1016, 1, 0
        %v1037 = vsel %vm1017, 1, 0
        %v1038 = vsel %vm1018, 1, 0
        %v1039 = vsel %vm1019, 1, 0
        %v1040 = vsel %vm1020, 1, 0
        %v1041 = vsel %vm1021, 1, 0
        %v1042 = vsel %vm1022, 1, 0
        %v1043 = vsel %vm1023, 1, 0
        %v1044 = vsel %vm1024, 1, 0
        %v1045 = vsel %vm1025, 1, 0
        %vm1046 = vcmp.eq.s32.totalorder %v1026, 1
        %vm1047 = vcmp.eq.s32.totalorder %v1027, 1
        %vm1048 = vcmp.eq.s32.totalorder %v1028, 1
        %vm1049 = vcmp.eq.s32.totalorder %v1029, 1
        %vm1050 = vcmp.eq.s32.totalorder %v1030, 1
        %vm1051 = vcmp.eq.s32.totalorder %v1031, 1
        %vm1052 = vcmp.eq.s32.totalorder %v1032, 1
        %vm1053 = vcmp.eq.s32.totalorder %v1033, 1
        %vm1054 = vcmp.eq.s32.totalorder %v1034, 1
        %vm1055 = vcmp.eq.s32.totalorder %v1035, 1
        %vm1056 = vcmp.eq.s32.totalorder %v1036, 1
        %vm1057 = vcmp.eq.s32.totalorder %v1037, 1
        %vm1058 = vcmp.eq.s32.totalorder %v1038, 1
        %vm1059 = vcmp.eq.s32.totalorder %v1039, 1
        %vm1060 = vcmp.eq.s32.totalorder %v1040, 1
        %vm1061 = vcmp.eq.s32.totalorder %v1041, 1
        %vm1062 = vcmp.eq.s32.totalorder %v1042, 1
        %vm1063 = vcmp.eq.s32.totalorder %v1043, 1
        %vm1064 = vcmp.eq.s32.totalorder %v1044, 1
        %vm1065 = vcmp.eq.s32.totalorder %v1045, 1
        %v1066 = vsel %vm1046, %v1005, 0.0
        %v1067 = vsel %vm1047, %v1004, 0.0
        %v1068 = vsel %vm1048, %v1003, 0.0
        %v1069 = vsel %vm1049, %v1002, 0.0
        %v1070 = vsel %vm1050, %v1001, 0.0
        %v1071 = vsel %vm1051, %v1000, 0.0
        %v1072 = vsel %vm1052, %v999, 0.0
        %v1073 = vsel %vm1053, %v998, 0.0
        %v1074 = vsel %vm1054, %v997, 0.0
        %v1075 = vsel %vm1055, %v996, 0.0
        %v1076 = vsel %vm1056, %v995, 0.0
        %v1077 = vsel %vm1057, %v994, 0.0
        %v1078 = vsel %vm1058, %v993, 0.0
        %v1079 = vsel %vm1059, %v992, 0.0
        %v1080 = vsel %vm1060, %v991, 0.0
        %v1081 = vsel %vm1061, %v990, 0.0
        %v1082 = vsel %vm1062, %v989, 0.0
        %v1083 = vsel %vm1063, %v988, 0.0
        %v1084 = vsel %vm1064, %v987, 0.0
        %v1085 = vsel %vm1065, %v986, 0.0
        %v1086 = vpack.c.bf16 %v1067, %v1066
        %v1087 = vpack.c.bf16 %v1069, %v1068
        %v1088 = vpack.c.bf16 %v1071, %v1070
        %v1089 = vpack.c.bf16 %v1073, %v1072
        %v1090 = vpack.c.bf16 %v1075, %v1074
        %v1091 = vpack.c.bf16 %v1077, %v1076
        %v1092 = vpack.c.bf16 %v1079, %v1078
        %v1093 = vpack.c.bf16 %v1081, %v1080
        %v1094 = vpack.c.bf16 %v1083, %v1082
        %v1095 = vpack.c.bf16 %v1085, %v1084
        %v1096 = vld [vmem:[%s3] sm:$0xf]
        %s1097 = scalar_lea.vmem %s3, 12
        %v1098 = vld [vmem:[%s1097] sm:$0xf]
        %v1100 = vsel %vm541, %v1087, 0
        %v1103 = vsel %vm541, %v1088, 0
        %v1106 = vsel %vm541, %v1089, 0
        %v1109 = vsel %vm541, %v1090, 0
        %v1112 = vsel %vm541, %v1091, 0
        %v1115 = vsel %vm541, %v1092, 0
        %v1118 = vsel %vm541, %v1093, 0
        %v1121 = vsel %vm541, %v1094, 0
        %vm1123 = vcmask 1043456
        %v1125 = vsel %vm1123, %v1098, 0
        %1127 = vmatprep.subr.bf16.mxu0 0
        %1128 = vmatpush1.bf16.msra.mxu0 %v1125
        %1129 = vmatprep.subr.bf16.mxu0 0
        %1130 = vmatpush1.bf16.msra.mxu0 0
        %1131 = vmatprep.subr.bf16.mxu0 0
        %1132 = vmatpush1.bf16.msra.mxu0 0
        %1133 = vmatprep.subr.bf16.mxu0 0
        %1134 = vmatpush1.bf16.msra.mxu0 0
        %1135 = vmatprep.subr.bf16.mxu0 0
        %1136 = vmatpush1.bf16.msra.mxu0 0
        %1137 = vmatprep.subr.bf16.mxu0 0
        %1138 = vmatpush1.bf16.msra.mxu0 0
        %1139 = vmatprep.subr.bf16.mxu0 0
        %1140 = vmatpush1.bf16.msra.mxu0 0
        %1141 = vmatprep.subr.bf16.mxu0 0
        %1142 = vmatpush1.bf16.msra.mxu0 0
        %1143 = vmatprep.subr.bf16.mxu0 0
        %1144 = vmatpush1.bf16.msra.mxu0 0
        %1145 = vmatprep.subr.bf16.mxu0 0
        %1146 = vmatpush1.bf16.msra.mxu0 0
        %1147 = vmatprep.subr.bf16.mxu0 0
        %1148 = vmatpush1.bf16.msra.mxu0 0
        %1149 = vmatprep.subr.bf16.mxu0 0
        %1150 = vmatpush1.bf16.msra.mxu0 0
        %1151 = vmatprep.subr.bf16.mxu0 0
        %1152 = vmatpush1.bf16.msra.mxu0 0
        %1153 = vmatprep.subr.bf16.mxu0 0
        %1154 = vmatpush1.bf16.msra.mxu0 0
        %1155 = vmatprep.subr.bf16.mxu0 0
        %1156 = vmatpush1.bf16.msra.mxu0 0
        %1157 = vmatprep.subr.bf16.mxu0 0
        %1158 = vmatpush1.bf16.msra.mxu0 0
        %1159 = vmatprep.mubr.bf16.mxu0 0
        %1160 = vmatmul.mubr.bf16.gmra.mrb[0].mxu0 %v1100
        %v1161 = vpop.f32.mrb[0].mxu0
        %v1162 = vadd.f32 0.0, %v1161
        %v1163 = vpop.f32.mrb[0].mxu0
        %v1164 = vpop.f32.mrb[0].mxu0
        %v1165 = vadd.f32 0.0, %v1164
        %v1166 = vpop.f32.mrb[0].mxu0
        %1167 = vmatprep.mubr.bf16.mxu0 0
        %1168 = vmatmul.mubr.bf16.gmra.mrb[0].mxu0 %v1103
        %v1169 = vpop.f32.mrb[0].mxu0
        %v1170 = vadd.f32 0.0, %v1169
        %v1171 = vpop.f32.mrb[0].mxu0
        %v1172 = vpop.f32.mrb[0].mxu0
        %v1173 = vadd.f32 0.0, %v1172
        %v1174 = vpop.f32.mrb[0].mxu0
        %1175 = vmatprep.mubr.bf16.mxu0 0
        %1176 = vmatmul.mubr.bf16.gmra.mrb[0].mxu0 %v1106
        %v1177 = vpop.f32.mrb[0].mxu0
        %v1178 = vadd.f32 0.0, %v1177
        %v1179 = vpop.f32.mrb[0].mxu0
        %v1180 = vpop.f32.mrb[0].mxu0
        %v1181 = vadd.f32 0.0, %v1180
        %v1182 = vpop.f32.mrb[0].mxu0
        %1183 = vmatprep.mubr.bf16.mxu0 0
        %1184 = vmatmul.mubr.bf16.gmra.mrb[0].mxu0 %v1109
        %v1185 = vpop.f32.mrb[0].mxu0
        %v1186 = vadd.f32 0.0, %v1185
        %v1187 = vpop.f32.mrb[0].mxu0
        %v1188 = vpop.f32.mrb[0].mxu0
        %v1189 = vadd.f32 0.0, %v1188
        %v1190 = vpop.f32.mrb[0].mxu0
        %1191 = vmatprep.mubr.bf16.mxu0 0
        %1192 = vmatmul.mubr.bf16.gmra.mrb[0].mxu0 %v1112
        %v1193 = vpop.f32.mrb[0].mxu0
        %v1194 = vadd.f32 0.0, %v1193
        %v1195 = vpop.f32.mrb[0].mxu0
        %v1196 = vpop.f32.mrb[0].mxu0
        %v1197 = vadd.f32 0.0, %v1196
        %v1198 = vpop.f32.mrb[0].mxu0
        %1199 = vmatprep.mubr.bf16.mxu0 0
        %1200 = vmatmul.mubr.bf16.gmra.mrb[0].mxu0 %v1115
        %v1201 = vpop.f32.mrb[0].mxu0
        %v1202 = vadd.f32 0.0, %v1201
        %v1203 = vpop.f32.mrb[0].mxu0
        %v1204 = vpop.f32.mrb[0].mxu0
        %v1205 = vadd.f32 0.0, %v1204
        %v1206 = vpop.f32.mrb[0].mxu0
        %1207 = vmatprep.mubr.bf16.mxu0 0
        %1208 = vmatmul.mubr.bf16.gmra.mrb[0].mxu0 %v1118
        %v1209 = vpop.f32.mrb[0].mxu0
        %v1210 = vadd.f32 0.0, %v1209
        %v1211 = vpop.f32.mrb[0].mxu0
        %v1212 = vpop.f32.mrb[0].mxu0
        %v1213 = vadd.f32 0.0, %v1212
        %v1214 = vpop.f32.mrb[0].mxu0
        %1215 = vmatprep.mubr.bf16.mxu0 0
        %1216 = vmatmul.mubr.bf16.gmra.mrb[0].mxu0 %v1121
        %v1217 = vpop.f32.mrb[0].mxu0
        %v1218 = vadd.f32 0.0, %v1217
        %v1219 = vpop.f32.mrb[0].mxu0
        %v1220 = vpop.f32.mrb[0].mxu0
        %v1221 = vadd.f32 0.0, %v1220
        %v1222 = vpop.f32.mrb[0].mxu0
        %1223 = vdwg.mxu0
        %v1225 = vsel %vm541, %v1086, 0
        %v1228 = vsel %vm1123, %v1096, 0
        %1230 = vmatprep.subr.bf16.mxu0 0
        %1231 = vmatpush1.bf16.msra.mxu0 %v1228
        %1232 = vmatprep.subr.bf16.mxu0 0
        %1233 = vmatpush1.bf16.msra.mxu0 0
        %1234 = vmatprep.subr.bf16.mxu0 0
        %1235 = vmatpush1.bf16.msra.mxu0 0
        %1236 = vmatprep.subr.bf16.mxu0 0
        %1237 = vmatpush1.bf16.msra.mxu0 0
        %1238 = vmatprep.subr.bf16.mxu0 0
        %1239 = vmatpush1.bf16.msra.mxu0 0
        %1240 = vmatprep.subr.bf16.mxu0 0
        %1241 = vmatpush1.bf16.msra.mxu0 0
        %1242 = vmatprep.subr.bf16.mxu0 0
        %1243 = vmatpush1.bf16.msra.mxu0 0
        %1244 = vmatprep.subr.bf16.mxu0 0
        %1245 = vmatpush1.bf16.msra.mxu0 0
        %1246 = vmatprep.subr.bf16.mxu0 0
        %1247 = vmatpush1.bf16.msra.mxu0 0
        %1248 = vmatprep.subr.bf16.mxu0 0
        %1249 = vmatpush1.bf16.msra.mxu0 0
        %1250 = vmatprep.subr.bf16.mxu0 0
        %1251 = vmatpush1.bf16.msra.mxu0 0
        %1252 = vmatprep.subr.bf16.mxu0 0
        %1253 = vmatpush1.bf16.msra.mxu0 0
        %1254 = vmatprep.subr.bf16.mxu0 0
        %1255 = vmatpush1.bf16.msra.mxu0 0
        %1256 = vmatprep.subr.bf16.mxu0 0
        %1257 = vmatpush1.bf16.msra.mxu0 0
        %1258 = vmatprep.subr.bf16.mxu0 0
        %1259 = vmatpush1.bf16.msra.mxu0 0
        %1260 = vmatprep.subr.bf16.mxu0 0
        %1261 = vmatpush1.bf16.msra.mxu0 0
        %1262 = vmatprep.mubr.bf16.mxu0 0
        %1263 = vmatmul.mubr.bf16.gmra.mrb[0].mxu0 %v1225
        %v1264 = vpop.f32.mrb[0].mxu0
        %v1265 = vadd.f32 %v1162, %v1264
        %v1266 = vpop.f32.mrb[0].mxu0
        %v1267 = vpop.f32.mrb[0].mxu0
        %v1268 = vadd.f32 %v1165, %v1267
        %v1269 = vpop.f32.mrb[0].mxu0
        %1270 = vmatprep.mubr.bf16.mxu0 0
        %1271 = vmatmul.mubr.bf16.gmra.mrb[0].mxu0 %v1100
        %v1272 = vpop.f32.mrb[0].mxu0
        %v1273 = vadd.f32 %v1170, %v1272
        %v1274 = vpop.f32.mrb[0].mxu0
        %v1275 = vpop.f32.mrb[0].mxu0
        %v1276 = vadd.f32 %v1173, %v1275
        %v1277 = vpop.f32.mrb[0].mxu0
        %1278 = vmatprep.mubr.bf16.mxu0 0
        %1279 = vmatmul.mubr.bf16.gmra.mrb[0].mxu0 %v1103
        %v1280 = vpop.f32.mrb[0].mxu0
        %v1281 = vadd.f32 %v1178, %v1280
        %v1282 = vpop.f32.mrb[0].mxu0
        %v1283 = vpop.f32.mrb[0].mxu0
        %v1284 = vadd.f32 %v1181, %v1283
        %v1285 = vpop.f32.mrb[0].mxu0
        %1286 = vmatprep.mubr.bf16.mxu0 0
        %1287 = vmatmul.mubr.bf16.gmra.mrb[0].mxu0 %v1106
        %v1288 = vpop.f32.mrb[0].mxu0
        %v1289 = vadd.f32 %v1186, %v1288
        %v1290 = vpop.f32.mrb[0].mxu0
        %v1291 = vpop.f32.mrb[0].mxu0
        %v1292 = vadd.f32 %v1189, %v1291
        %v1293 = vpop.f32.mrb[0].mxu0
        %1294 = vmatprep.mubr.bf16.mxu0 0
        %1295 = vmatmul.mubr.bf16.gmra.mrb[0].mxu0 %v1109
        %v1296 = vpop.f32.mrb[0].mxu0
        %v1297 = vadd.f32 %v1194, %v1296
        %v1298 = vpop.f32.mrb[0].mxu0
        %v1299 = vpop.f32.mrb[0].mxu0
        %v1300 = vadd.f32 %v1197, %v1299
        %v1301 = vpop.f32.mrb[0].mxu0
        %1302 = vmatprep.mubr.bf16.mxu0 0
        %1303 = vmatmul.mubr.bf16.gmra.mrb[0].mxu0 %v1112
        %v1304 = vpop.f32.mrb[0].mxu0
        %v1305 = vadd.f32 %v1202, %v1304
        %v1306 = vpop.f32.mrb[0].mxu0
        %v1307 = vpop.f32.mrb[0].mxu0
        %v1308 = vadd.f32 %v1205, %v1307
        %v1309 = vpop.f32.mrb[0].mxu0
        %1310 = vmatprep.mubr.bf16.mxu0 0
        %1311 = vmatmul.mubr.bf16.gmra.mrb[0].mxu0 %v1115
        %v1312 = vpop.f32.mrb[0].mxu0
        %v1313 = vadd.f32 %v1210, %v1312
        %v1314 = vpop.f32.mrb[0].mxu0
        %v1315 = vpop.f32.mrb[0].mxu0
        %v1316 = vadd.f32 %v1213, %v1315
        %v1317 = vpop.f32.mrb[0].mxu0
        %1318 = vmatprep.mubr.bf16.mxu0 0
        %1319 = vmatmul.mubr.bf16.gmra.mrb[0].mxu0 %v1118
        %v1320 = vpop.f32.mrb[0].mxu0
        %v1321 = vadd.f32 %v1218, %v1320
        %v1322 = vpop.f32.mrb[0].mxu0
        %v1323 = vpop.f32.mrb[0].mxu0
        %v1324 = vadd.f32 %v1221, %v1323
        %v1325 = vpop.f32.mrb[0].mxu0
        %1326 = vdwg.mxu0
        %s1327 = scalar_lea.vmem %s3, 24
        %v1328 = vld [vmem:[%s1327] sm:$0xf]
        %v1330 = vsel %vm541, %v1095, 0
        %v1333 = vsel %vm1123, %v1328, 0
        %1335 = vmatprep.subr.bf16.mxu0 0
        %1336 = vmatpush1.bf16.msra.mxu0 %v1333
        %1337 = vmatprep.subr.bf16.mxu0 0
        %1338 = vmatpush1.bf16.msra.mxu0 0
        %1339 = vmatprep.subr.bf16.mxu0 0
        %1340 = vmatpush1.bf16.msra.mxu0 0
        %1341 = vmatprep.subr.bf16.mxu0 0
        %1342 = vmatpush1.bf16.msra.mxu0 0
        %1343 = vmatprep.subr.bf16.mxu0 0
        %1344 = vmatpush1.bf16.msra.mxu0 0
        %1345 = vmatprep.subr.bf16.mxu0 0
        %1346 = vmatpush1.bf16.msra.mxu0 0
        %1347 = vmatprep.subr.bf16.mxu0 0
        %1348 = vmatpush1.bf16.msra.mxu0 0
        %1349 = vmatprep.subr.bf16.mxu0 0
        %1350 = vmatpush1.bf16.msra.mxu0 0
        %1351 = vmatprep.subr.bf16.mxu0 0
        %1352 = vmatpush1.bf16.msra.mxu0 0
        %1353 = vmatprep.subr.bf16.mxu0 0
        %1354 = vmatpush1.bf16.msra.mxu0 0
        %1355 = vmatprep.subr.bf16.mxu0 0
        %1356 = vmatpush1.bf16.msra.mxu0 0
        %1357 = vmatprep.subr.bf16.mxu0 0
        %1358 = vmatpush1.bf16.msra.mxu0 0
        %1359 = vmatprep.subr.bf16.mxu0 0
        %1360 = vmatpush1.bf16.msra.mxu0 0
        %1361 = vmatprep.subr.bf16.mxu0 0
        %1362 = vmatpush1.bf16.msra.mxu0 0
        %1363 = vmatprep.subr.bf16.mxu0 0
        %1364 = vmatpush1.bf16.msra.mxu0 0
        %1365 = vmatprep.subr.bf16.mxu0 0
        %1366 = vmatpush1.bf16.msra.mxu0 0
        %1367 = vmatprep.mubr.bf16.mxu0 0
        %1368 = vmatmul.mubr.bf16.gmra.mrb[0].mxu0 %v1103
        %v1369 = vpop.f32.mrb[0].mxu0
        %v1370 = vadd.f32 0.0, %v1369
        %v1371 = vpop.f32.mrb[0].mxu0
        %v1372 = vpop.f32.mrb[0].mxu0
        %v1373 = vadd.f32 0.0, %v1372
        %v1374 = vpop.f32.mrb[0].mxu0
        %1375 = vmatprep.mubr.bf16.mxu0 0
        %1376 = vmatmul.mubr.bf16.gmra.mrb[0].mxu0 %v1106
        %v1377 = vpop.f32.mrb[0].mxu0
        %v1378 = vadd.f32 0.0, %v1377
        %v1379 = vpop.f32.mrb[0].mxu0
        %v1380 = vpop.f32.mrb[0].mxu0
        %v1381 = vadd.f32 0.0, %v1380
        %v1382 = vpop.f32.mrb[0].mxu0
        %1383 = vmatprep.mubr.bf16.mxu0 0
        %1384 = vmatmul.mubr.bf16.gmra.mrb[0].mxu0 %v1109
        %v1385 = vpop.f32.mrb[0].mxu0
        %v1386 = vadd.f32 0.0, %v1385
        %v1387 = vpop.f32.mrb[0].mxu0
        %v1388 = vpop.f32.mrb[0].mxu0
        %v1389 = vadd.f32 0.0, %v1388
        %v1390 = vpop.f32.mrb[0].mxu0
        %1391 = vmatprep.mubr.bf16.mxu0 0
        %1392 = vmatmul.mubr.bf16.gmra.mrb[0].mxu0 %v1112
        %v1393 = vpop.f32.mrb[0].mxu0
        %v1394 = vadd.f32 0.0, %v1393
        %v1395 = vpop.f32.mrb[0].mxu0
        %v1396 = vpop.f32.mrb[0].mxu0
        %v1397 = vadd.f32 0.0, %v1396
        %v1398 = vpop.f32.mrb[0].mxu0
        %1399 = vmatprep.mubr.bf16.mxu0 0
        %1400 = vmatmul.mubr.bf16.gmra.mrb[0].mxu0 %v1115
        %v1401 = vpop.f32.mrb[0].mxu0
        %v1402 = vadd.f32 0.0, %v1401
        %v1403 = vpop.f32.mrb[0].mxu0
        %v1404 = vpop.f32.mrb[0].mxu0
        %v1405 = vadd.f32 0.0, %v1404
        %v1406 = vpop.f32.mrb[0].mxu0
        %1407 = vmatprep.mubr.bf16.mxu0 0
        %1408 = vmatmul.mubr.bf16.gmra.mrb[0].mxu0 %v1118
        %v1409 = vpop.f32.mrb[0].mxu0
        %v1410 = vadd.f32 0.0, %v1409
        %v1411 = vpop.f32.mrb[0].mxu0
        %v1412 = vpop.f32.mrb[0].mxu0
        %v1413 = vadd.f32 0.0, %v1412
        %v1414 = vpop.f32.mrb[0].mxu0
        %1415 = vmatprep.mubr.bf16.mxu0 0
        %1416 = vmatmul.mubr.bf16.gmra.mrb[0].mxu0 %v1121
        %v1417 = vpop.f32.mrb[0].mxu0
        %v1418 = vadd.f32 0.0, %v1417
        %v1419 = vpop.f32.mrb[0].mxu0
        %v1420 = vpop.f32.mrb[0].mxu0
        %v1421 = vadd.f32 0.0, %v1420
        %v1422 = vpop.f32.mrb[0].mxu0
        %1423 = vmatprep.mubr.bf16.mxu0 0
        %1424 = vmatmul.mubr.bf16.gmra.mrb[0].mxu0 %v1330
        %v1425 = vpop.f32.mrb[0].mxu0
        %v1426 = vadd.f32 0.0, %v1425
        %v1427 = vpop.f32.mrb[0].mxu0
        %v1428 = vpop.f32.mrb[0].mxu0
        %v1429 = vadd.f32 0.0, %v1428
        %v1430 = vpop.f32.mrb[0].mxu0
        %1431 = vdwg.mxu0
        %v1432 = vadd.f32 %v1265, %v1370
        %v1433 = vadd.f32 %v1268, %v1373
        %v1434 = vadd.f32 %v1273, %v1378
        %v1435 = vadd.f32 %v1276, %v1381
        %v1436 = vadd.f32 %v1281, %v1386
        %v1437 = vadd.f32 %v1284, %v1389
        %v1438 = vadd.f32 %v1289, %v1394
        %v1439 = vadd.f32 %v1292, %v1397
        %v1440 = vadd.f32 %v1297, %v1402
        %v1441 = vadd.f32 %v1300, %v1405
        %v1442 = vadd.f32 %v1305, %v1410
        %v1443 = vadd.f32 %v1308, %v1413
        %v1444 = vadd.f32 %v1313, %v1418
        %v1445 = vadd.f32 %v1316, %v1421
        %v1446 = vadd.f32 %v1321, %v1426
        %v1447 = vadd.f32 %v1324, %v1429
        %v1448 = vpack.c.bf16 %v685, %v684
        %v1449 = vpack.c.bf16 %v687, %v686
        %v1450 = vpack.c.bf16 %v689, %v688
        %v1451 = vpack.c.bf16 %v691, %v690
        %v1452 = vpack.c.bf16 %v693, %v692
        %v1453 = vpack.c.bf16 %v695, %v694
        %v1454 = vpack.c.bf16 %v697, %v696
        %v1455 = vpack.c.bf16 %v699, %v698
        %v1456 = vpack.c.bf16 %v701, %v700
        %v1457 = vpack.c.bf16 %v703, %v702
        %s1458 = scalar_lea.vmem %s3, 4
        %v1459 = vld [vmem:[%s1458] sm:$0xf]
        %v1461 = vsel %vm541, %v1448, 0
        %v1464 = vsel %vm541, %v1449, 0
        %v1467 = vsel %vm541, %v1450, 0
        %v1470 = vsel %vm541, %v1451, 0
        %v1473 = vsel %vm541, %v1452, 0
        %v1476 = vsel %vm541, %v1453, 0
        %v1479 = vsel %vm541, %v1454, 0
        %v1482 = vsel %vm541, %v1455, 0
        %v1485 = vsel %vm1123, %v1459, 0
        %1487 = vmatprep.subr.bf16.mxu0 0
        %1488 = vmatpush1.bf16.msra.mxu0 %v1485
        %1489 = vmatprep.subr.bf16.mxu0 0
        %1490 = vmatpush1.bf16.msra.mxu0 0
        %1491 = vmatprep.subr.bf16.mxu0 0
        %1492 = vmatpush1.bf16.msra.mxu0 0
        %1493 = vmatprep.subr.bf16.mxu0 0
        %1494 = vmatpush1.bf16.msra.mxu0 0
        %1495 = vmatprep.subr.bf16.mxu0 0
        %1496 = vmatpush1.bf16.msra.mxu0 0
        %1497 = vmatprep.subr.bf16.mxu0 0
        %1498 = vmatpush1.bf16.msra.mxu0 0
        %1499 = vmatprep.subr.bf16.mxu0 0
        %1500 = vmatpush1.bf16.msra.mxu0 0
        %1501 = vmatprep.subr.bf16.mxu0 0
        %1502 = vmatpush1.bf16.msra.mxu0 0
        %1503 = vmatprep.subr.bf16.mxu0 0
        %1504 = vmatpush1.bf16.msra.mxu0 0
        %1505 = vmatprep.subr.bf16.mxu0 0
        %1506 = vmatpush1.bf16.msra.mxu0 0
        %1507 = vmatprep.subr.bf16.mxu0 0
        %1508 = vmatpush1.bf16.msra.mxu0 0
        %1509 = vmatprep.subr.bf16.mxu0 0
        %1510 = vmatpush1.bf16.msra.mxu0 0
        %1511 = vmatprep.subr.bf16.mxu0 0
        %1512 = vmatpush1.bf16.msra.mxu0 0
        %1513 = vmatprep.subr.bf16.mxu0 0
        %1514 = vmatpush1.bf16.msra.mxu0 0
        %1515 = vmatprep.subr.bf16.mxu0 0
        %1516 = vmatpush1.bf16.msra.mxu0 0
        %1517 = vmatprep.subr.bf16.mxu0 0
        %1518 = vmatpush1.bf16.msra.mxu0 0
        %1519 = vmatprep.mubr.bf16.mxu0 0
        %1520 = vmatmul.mubr.bf16.gmra.mrb[0].mxu0 %v1461
        %v1521 = vpop.f32.mrb[0].mxu0
        %v1522 = vadd.f32 0.0, %v1521
        %v1523 = vpop.f32.mrb[0].mxu0
        %v1524 = vpop.f32.mrb[0].mxu0
        %v1525 = vadd.f32 0.0, %v1524
        %v1526 = vpop.f32.mrb[0].mxu0
        %1527 = vmatprep.mubr.bf16.mxu0 0
        %1528 = vmatmul.mubr.bf16.gmra.mrb[0].mxu0 %v1464
        %v1529 = vpop.f32.mrb[0].mxu0
        %v1530 = vadd.f32 0.0, %v1529
        %v1531 = vpop.f32.mrb[0].mxu0
        %v1532 = vpop.f32.mrb[0].mxu0
        %v1533 = vadd.f32 0.0, %v1532
        %v1534 = vpop.f32.mrb[0].mxu0
        %1535 = vmatprep.mubr.bf16.mxu0 0
        %1536 = vmatmul.mubr.bf16.gmra.mrb[0].mxu0 %v1467
        %v1537 = vpop.f32.mrb[0].mxu0
        %v1538 = vadd.f32 0.0, %v1537
        %v1539 = vpop.f32.mrb[0].mxu0
        %v1540 = vpop.f32.mrb[0].mxu0
        %v1541 = vadd.f32 0.0, %v1540
        %v1542 = vpop.f32.mrb[0].mxu0
        %1543 = vmatprep.mubr.bf16.mxu0 0
        %1544 = vmatmul.mubr.bf16.gmra.mrb[0].mxu0 %v1470
        %v1545 = vpop.f32.mrb[0].mxu0
        %v1546 = vadd.f32 0.0, %v1545
        %v1547 = vpop.f32.mrb[0].mxu0
        %v1548 = vpop.f32.mrb[0].mxu0
        %v1549 = vadd.f32 0.0, %v1548
        %v1550 = vpop.f32.mrb[0].mxu0
        %1551 = vmatprep.mubr.bf16.mxu0 0
        %1552 = vmatmul.mubr.bf16.gmra.mrb[0].mxu0 %v1473
        %v1553 = vpop.f32.mrb[0].mxu0
        %v1554 = vadd.f32 0.0, %v1553
        %v1555 = vpop.f32.mrb[0].mxu0
        %v1556 = vpop.f32.mrb[0].mxu0
        %v1557 = vadd.f32 0.0, %v1556
        %v1558 = vpop.f32.mrb[0].mxu0
        %1559 = vmatprep.mubr.bf16.mxu0 0
        %1560 = vmatmul.mubr.bf16.gmra.mrb[0].mxu0 %v1476
        %v1561 = vpop.f32.mrb[0].mxu0
        %v1562 = vadd.f32 0.0, %v1561
        %v1563 = vpop.f32.mrb[0].mxu0
        %v1564 = vpop.f32.mrb[0].mxu0
        %v1565 = vadd.f32 0.0, %v1564
        %v1566 = vpop.f32.mrb[0].mxu0
        %1567 = vmatprep.mubr.bf16.mxu0 0
        %1568 = vmatmul.mubr.bf16.gmra.mrb[0].mxu0 %v1479
        %v1569 = vpop.f32.mrb[0].mxu0
        %v1570 = vadd.f32 0.0, %v1569
        %v1571 = vpop.f32.mrb[0].mxu0
        %v1572 = vpop.f32.mrb[0].mxu0
        %v1573 = vadd.f32 0.0, %v1572
        %v1574 = vpop.f32.mrb[0].mxu0
        %1575 = vmatprep.mubr.bf16.mxu0 0
        %1576 = vmatmul.mubr.bf16.gmra.mrb[0].mxu0 %v1482
        %v1577 = vpop.f32.mrb[0].mxu0
        %v1578 = vadd.f32 0.0, %v1577
        %v1579 = vpop.f32.mrb[0].mxu0
        %v1580 = vpop.f32.mrb[0].mxu0
        %v1581 = vadd.f32 0.0, %v1580
        %v1582 = vpop.f32.mrb[0].mxu0
        %1583 = vdwg.mxu0
        %v1584 = vadd.f32 %v1432, %v1522
        %v1585 = vadd.f32 %v1433, %v1525
        %v1586 = vadd.f32 %v1434, %v1530
        %v1587 = vadd.f32 %v1435, %v1533
        %v1588 = vadd.f32 %v1436, %v1538
        %v1589 = vadd.f32 %v1437, %v1541
        %v1590 = vadd.f32 %v1438, %v1546
        %v1591 = vadd.f32 %v1439, %v1549
        %v1592 = vadd.f32 %v1440, %v1554
        %v1593 = vadd.f32 %v1441, %v1557
        %v1594 = vadd.f32 %v1442, %v1562
        %v1595 = vadd.f32 %v1443, %v1565
        %v1596 = vadd.f32 %v1444, %v1570
        %v1597 = vadd.f32 %v1445, %v1573
        %v1598 = vadd.f32 %v1446, %v1578
        %v1599 = vadd.f32 %v1447, %v1581
        %s1600 = scalar_lea.vmem %s3, 16
        %v1601 = vld [vmem:[%s1600] sm:$0xf]
        %v1603 = vsel %vm541, %v1456, 0
        %v1606 = vsel %vm1123, %v1601, 0
        %1608 = vmatprep.subr.bf16.mxu0 0
        %1609 = vmatpush1.bf16.msra.mxu0 %v1606
        %1610 = vmatprep.subr.bf16.mxu0 0
        %1611 = vmatpush1.bf16.msra.mxu0 0
        %1612 = vmatprep.subr.bf16.mxu0 0
        %1613 = vmatpush1.bf16.msra.mxu0 0
        %1614 = vmatprep.subr.bf16.mxu0 0
        %1615 = vmatpush1.bf16.msra.mxu0 0
        %1616 = vmatprep.subr.bf16.mxu0 0
        %1617 = vmatpush1.bf16.msra.mxu0 0
        %1618 = vmatprep.subr.bf16.mxu0 0
        %1619 = vmatpush1.bf16.msra.mxu0 0
        %1620 = vmatprep.subr.bf16.mxu0 0
        %1621 = vmatpush1.bf16.msra.mxu0 0
        %1622 = vmatprep.subr.bf16.mxu0 0
        %1623 = vmatpush1.bf16.msra.mxu0 0
        %1624 = vmatprep.subr.bf16.mxu0 0
        %1625 = vmatpush1.bf16.msra.mxu0 0
        %1626 = vmatprep.subr.bf16.mxu0 0
        %1627 = vmatpush1.bf16.msra.mxu0 0
        %1628 = vmatprep.subr.bf16.mxu0 0
        %1629 = vmatpush1.bf16.msra.mxu0 0
        %1630 = vmatprep.subr.bf16.mxu0 0
        %1631 = vmatpush1.bf16.msra.mxu0 0
        %1632 = vmatprep.subr.bf16.mxu0 0
        %1633 = vmatpush1.bf16.msra.mxu0 0
        %1634 = vmatprep.subr.bf16.mxu0 0
        %1635 = vmatpush1.bf16.msra.mxu0 0
        %1636 = vmatprep.subr.bf16.mxu0 0
        %1637 = vmatpush1.bf16.msra.mxu0 0
        %1638 = vmatprep.subr.bf16.mxu0 0
        %1639 = vmatpush1.bf16.msra.mxu0 0
        %1640 = vmatprep.mubr.bf16.mxu0 0
        %1641 = vmatmul.mubr.bf16.gmra.mrb[0].mxu0 %v1464
        %v1642 = vpop.f32.mrb[0].mxu0
        %v1643 = vadd.f32 0.0, %v1642
        %v1644 = vpop.f32.mrb[0].mxu0
        %v1645 = vpop.f32.mrb[0].mxu0
        %v1646 = vadd.f32 0.0, %v1645
        %v1647 = vpop.f32.mrb[0].mxu0
        %1648 = vmatprep.mubr.bf16.mxu0 0
        %1649 = vmatmul.mubr.bf16.gmra.mrb[0].mxu0 %v1467
        %v1650 = vpop.f32.mrb[0].mxu0
        %v1651 = vadd.f32 0.0, %v1650
        %v1652 = vpop.f32.mrb[0].mxu0
        %v1653 = vpop.f32.mrb[0].mxu0
        %v1654 = vadd.f32 0.0, %v1653
        %v1655 = vpop.f32.mrb[0].mxu0
        %1656 = vmatprep.mubr.bf16.mxu0 0
        %1657 = vmatmul.mubr.bf16.gmra.mrb[0].mxu0 %v1470
        %v1658 = vpop.f32.mrb[0].mxu0
        %v1659 = vadd.f32 0.0, %v1658
        %v1660 = vpop.f32.mrb[0].mxu0
        %v1661 = vpop.f32.mrb[0].mxu0
        %v1662 = vadd.f32 0.0, %v1661
        %v1663 = vpop.f32.mrb[0].mxu0
        %1664 = vmatprep.mubr.bf16.mxu0 0
        %1665 = vmatmul.mubr.bf16.gmra.mrb[0].mxu0 %v1473
        %v1666 = vpop.f32.mrb[0].mxu0
        %v1667 = vadd.f32 0.0, %v1666
        %v1668 = vpop.f32.mrb[0].mxu0
        %v1669 = vpop.f32.mrb[0].mxu0
        %v1670 = vadd.f32 0.0, %v1669
        %v1671 = vpop.f32.mrb[0].mxu0
        %1672 = vmatprep.mubr.bf16.mxu0 0
        %1673 = vmatmul.mubr.bf16.gmra.mrb[0].mxu0 %v1476
        %v1674 = vpop.f32.mrb[0].mxu0
        %v1675 = vadd.f32 0.0, %v1674
        %v1676 = vpop.f32.mrb[0].mxu0
        %v1677 = vpop.f32.mrb[0].mxu0
        %v1678 = vadd.f32 0.0, %v1677
        %v1679 = vpop.f32.mrb[0].mxu0
        %1680 = vmatprep.mubr.bf16.mxu0 0
        %1681 = vmatmul.mubr.bf16.gmra.mrb[0].mxu0 %v1479
        %v1682 = vpop.f32.mrb[0].mxu0
        %v1683 = vadd.f32 0.0, %v1682
        %v1684 = vpop.f32.mrb[0].mxu0
        %v1685 = vpop.f32.mrb[0].mxu0
        %v1686 = vadd.f32 0.0, %v1685
        %v1687 = vpop.f32.mrb[0].mxu0
        %1688 = vmatprep.mubr.bf16.mxu0 0
        %1689 = vmatmul.mubr.bf16.gmra.mrb[0].mxu0 %v1482
        %v1690 = vpop.f32.mrb[0].mxu0
        %v1691 = vadd.f32 0.0, %v1690
        %v1692 = vpop.f32.mrb[0].mxu0
        %v1693 = vpop.f32.mrb[0].mxu0
        %v1694 = vadd.f32 0.0, %v1693
        %v1695 = vpop.f32.mrb[0].mxu0
        %1696 = vmatprep.mubr.bf16.mxu0 0
        %1697 = vmatmul.mubr.bf16.gmra.mrb[0].mxu0 %v1603
        %v1698 = vpop.f32.mrb[0].mxu0
        %v1699 = vadd.f32 0.0, %v1698
        %v1700 = vpop.f32.mrb[0].mxu0
        %v1701 = vpop.f32.mrb[0].mxu0
        %v1702 = vadd.f32 0.0, %v1701
        %v1703 = vpop.f32.mrb[0].mxu0
        %1704 = vdwg.mxu0
        %v1705 = vadd.f32 %v1584, %v1643
        %v1706 = vadd.f32 %v1585, %v1646
        %v1707 = vadd.f32 %v1586, %v1651
        %v1708 = vadd.f32 %v1587, %v1654
        %v1709 = vadd.f32 %v1588, %v1659
        %v1710 = vadd.f32 %v1589, %v1662
        %v1711 = vadd.f32 %v1590, %v1667
        %v1712 = vadd.f32 %v1591, %v1670
        %v1713 = vadd.f32 %v1592, %v1675
        %v1714 = vadd.f32 %v1593, %v1678
        %v1715 = vadd.f32 %v1594, %v1683
        %v1716 = vadd.f32 %v1595, %v1686
        %v1717 = vadd.f32 %v1596, %v1691
        %v1718 = vadd.f32 %v1597, %v1694
        %v1719 = vadd.f32 %v1598, %v1699
        %v1720 = vadd.f32 %v1599, %v1702
        %s1721 = scalar_lea.vmem %s3, 28
        %v1722 = vld [vmem:[%s1721] sm:$0xf]
        %v1724 = vsel %vm541, %v1457, 0
        %v1727 = vsel %vm1123, %v1722, 0
        %1729 = vmatprep.subr.bf16.mxu0 0
        %1730 = vmatpush1.bf16.msra.mxu0 %v1727
        %1731 = vmatprep.subr.bf16.mxu0 0
        %1732 = vmatpush1.bf16.msra.mxu0 0
        %1733 = vmatprep.subr.bf16.mxu0 0
        %1734 = vmatpush1.bf16.msra.mxu0 0
        %1735 = vmatprep.subr.bf16.mxu0 0
        %1736 = vmatpush1.bf16.msra.mxu0 0
        %1737 = vmatprep.subr.bf16.mxu0 0
        %1738 = vmatpush1.bf16.msra.mxu0 0
        %1739 = vmatprep.subr.bf16.mxu0 0
        %1740 = vmatpush1.bf16.msra.mxu0 0
        %1741 = vmatprep.subr.bf16.mxu0 0
        %1742 = vmatpush1.bf16.msra.mxu0 0
        %1743 = vmatprep.subr.bf16.mxu0 0
        %1744 = vmatpush1.bf16.msra.mxu0 0
        %1745 = vmatprep.subr.bf16.mxu0 0
        %1746 = vmatpush1.bf16.msra.mxu0 0
        %1747 = vmatprep.subr.bf16.mxu0 0
        %1748 = vmatpush1.bf16.msra.mxu0 0
        %1749 = vmatprep.subr.bf16.mxu0 0
        %1750 = vmatpush1.bf16.msra.mxu0 0
        %1751 = vmatprep.subr.bf16.mxu0 0
        %1752 = vmatpush1.bf16.msra.mxu0 0
        %1753 = vmatprep.subr.bf16.mxu0 0
        %1754 = vmatpush1.bf16.msra.mxu0 0
        %1755 = vmatprep.subr.bf16.mxu0 0
        %1756 = vmatpush1.bf16.msra.mxu0 0
        %1757 = vmatprep.subr.bf16.mxu0 0
        %1758 = vmatpush1.bf16.msra.mxu0 0
        %1759 = vmatprep.subr.bf16.mxu0 0
        %1760 = vmatpush1.bf16.msra.mxu0 0
        %1761 = vmatprep.mubr.bf16.mxu0 0
        %1762 = vmatmul.mubr.bf16.gmra.mrb[0].mxu0 %v1467
        %v1763 = vpop.f32.mrb[0].mxu0
        %v1764 = vadd.f32 0.0, %v1763
        %v1765 = vpop.f32.mrb[0].mxu0
        %v1766 = vpop.f32.mrb[0].mxu0
        %v1767 = vadd.f32 0.0, %v1766
        %v1768 = vpop.f32.mrb[0].mxu0
        %1769 = vmatprep.mubr.bf16.mxu0 0
        %1770 = vmatmul.mubr.bf16.gmra.mrb[0].mxu0 %v1470
        %v1771 = vpop.f32.mrb[0].mxu0
        %v1772 = vadd.f32 0.0, %v1771
        %v1773 = vpop.f32.mrb[0].mxu0
        %v1774 = vpop.f32.mrb[0].mxu0
        %v1775 = vadd.f32 0.0, %v1774
        %v1776 = vpop.f32.mrb[0].mxu0
        %1777 = vmatprep.mubr.bf16.mxu0 0
        %1778 = vmatmul.mubr.bf16.gmra.mrb[0].mxu0 %v1473
        %v1779 = vpop.f32.mrb[0].mxu0
        %v1780 = vadd.f32 0.0, %v1779
        %v1781 = vpop.f32.mrb[0].mxu0
        %v1782 = vpop.f32.mrb[0].mxu0
        %v1783 = vadd.f32 0.0, %v1782
        %v1784 = vpop.f32.mrb[0].mxu0
        %1785 = vmatprep.mubr.bf16.mxu0 0
        %1786 = vmatmul.mubr.bf16.gmra.mrb[0].mxu0 %v1476
        %v1787 = vpop.f32.mrb[0].mxu0
        %v1788 = vadd.f32 0.0, %v1787
        %v1789 = vpop.f32.mrb[0].mxu0
        %v1790 = vpop.f32.mrb[0].mxu0
        %v1791 = vadd.f32 0.0, %v1790
        %v1792 = vpop.f32.mrb[0].mxu0
        %1793 = vmatprep.mubr.bf16.mxu0 0
        %1794 = vmatmul.mubr.bf16.gmra.mrb[0].mxu0 %v1479
        %v1795 = vpop.f32.mrb[0].mxu0
        %v1796 = vadd.f32 0.0, %v1795
        %v1797 = vpop.f32.mrb[0].mxu0
        %v1798 = vpop.f32.mrb[0].mxu0
        %v1799 = vadd.f32 0.0, %v1798
        %v1800 = vpop.f32.mrb[0].mxu0
        %1801 = vmatprep.mubr.bf16.mxu0 0
        %1802 = vmatmul.mubr.bf16.gmra.mrb[0].mxu0 %v1482
        %v1803 = vpop.f32.mrb[0].mxu0
        %v1804 = vadd.f32 0.0, %v1803
        %v1805 = vpop.f32.mrb[0].mxu0
        %v1806 = vpop.f32.mrb[0].mxu0
        %v1807 = vadd.f32 0.0, %v1806
        %v1808 = vpop.f32.mrb[0].mxu0
        %1809 = vmatprep.mubr.bf16.mxu0 0
        %1810 = vmatmul.mubr.bf16.gmra.mrb[0].mxu0 %v1603
        %v1811 = vpop.f32.mrb[0].mxu0
        %v1812 = vadd.f32 0.0, %v1811
        %v1813 = vpop.f32.mrb[0].mxu0
        %v1814 = vpop.f32.mrb[0].mxu0
        %v1815 = vadd.f32 0.0, %v1814
        %v1816 = vpop.f32.mrb[0].mxu0
        %1817 = vmatprep.mubr.bf16.mxu0 0
        %1818 = vmatmul.mubr.bf16.gmra.mrb[0].mxu0 %v1724
        %v1819 = vpop.f32.mrb[0].mxu0
        %v1820 = vadd.f32 0.0, %v1819
        %v1821 = vpop.f32.mrb[0].mxu0
        %v1822 = vpop.f32.mrb[0].mxu0
        %v1823 = vadd.f32 0.0, %v1822
        %v1824 = vpop.f32.mrb[0].mxu0
        %1825 = vdwg.mxu0
        %v1826 = vadd.f32 %v1705, %v1764
        %v1827 = vadd.f32 %v1706, %v1767
        %v1828 = vadd.f32 %v1707, %v1772
        %v1829 = vadd.f32 %v1708, %v1775
        %v1830 = vadd.f32 %v1709, %v1780
        %v1831 = vadd.f32 %v1710, %v1783
        %v1832 = vadd.f32 %v1711, %v1788
        %v1833 = vadd.f32 %v1712, %v1791
        %v1834 = vadd.f32 %v1713, %v1796
        %v1835 = vadd.f32 %v1714, %v1799
        %v1836 = vadd.f32 %v1715, %v1804
        %v1837 = vadd.f32 %v1716, %v1807
        %v1838 = vadd.f32 %v1717, %v1812
        %v1839 = vadd.f32 %v1718, %v1815
        %v1840 = vadd.f32 %v1719, %v1820
        %v1841 = vadd.f32 %v1720, %v1823
        %v1842 = vrot.slane %v684, 1
        %v1843 = vrot.slane %v685, 1
        %v1844 = vrot.slane %v686, 1
        %v1845 = vrot.slane %v687, 1
        %v1846 = vrot.slane %v688, 1
        %v1847 = vrot.slane %v689, 1
        %v1848 = vrot.slane %v690, 1
        %v1849 = vrot.slane %v691, 1
        %v1850 = vrot.slane %v692, 1
        %v1851 = vrot.slane %v693, 1
        %v1852 = vrot.slane %v694, 1
        %v1853 = vrot.slane %v695, 1
        %v1854 = vrot.slane %v696, 1
        %v1855 = vrot.slane %v697, 1
        %v1856 = vrot.slane %v698, 1
        %v1857 = vrot.slane %v699, 1
        %v1858 = vrot.slane %v700, 1
        %v1859 = vrot.slane %v701, 1
        %v1860 = vrot.slane %v702, 1
        %v1861 = vrot.slane %v703, 1
        %vm1862 = vcmp.lt.s32.totalorder %v705, 7
        %v1863 = vsel %vm1862, %v1860, %v1861
        %v1864 = vsel %vm1862, %v1859, %v1860
        %v1865 = vsel %vm1862, %v1858, %v1859
        %v1866 = vsel %vm1862, %v1857, %v1858
        %v1867 = vsel %vm1862, %v1856, %v1857
        %v1868 = vsel %vm1862, %v1855, %v1856
        %v1869 = vsel %vm1862, %v1854, %v1855
        %v1870 = vsel %vm1862, %v1853, %v1854
        %v1871 = vsel %vm1862, %v1852, %v1853
        %v1872 = vsel %vm1862, %v1851, %v1852
        %v1873 = vsel %vm1862, %v1850, %v1851
        %v1874 = vsel %vm1862, %v1849, %v1850
        %v1875 = vsel %vm1862, %v1848, %v1849
        %v1876 = vsel %vm1862, %v1847, %v1848
        %v1877 = vsel %vm1862, %v1846, %v1847
        %v1878 = vsel %vm1862, %v1845, %v1846
        %v1879 = vsel %vm1862, %v1844, %v1845
        %v1880 = vsel %vm1862, %v1843, %v1844
        %v1881 = vsel %vm1862, %v1842, %v1843
        %v1882 = vsel %vm1862, %v1861, %v1842
        %vm1883 = vcmp.ne.s32.totalorder %v945, 15
        %vm1884 = vcmp.ne.s32.totalorder %v946, 15
        %vm1885 = vcmp.ne.s32.totalorder %v947, 15
        %vm1886 = vcmp.ne.s32.totalorder %v948, 15
        %vm1887 = vcmp.ne.s32.totalorder %v949, 15
        %vm1888 = vcmp.ne.s32.totalorder %v950, 15
        %vm1889 = vcmp.ne.s32.totalorder %v951, 15
        %vm1890 = vcmp.ne.s32.totalorder %v952, 15
        %vm1891 = vcmp.ne.s32.totalorder %v953, 15
        %vm1892 = vcmp.ne.s32.totalorder %v954, 15
        %vm1893 = vcmp.ne.s32.totalorder %v955, 15
        %vm1894 = vcmp.ne.s32.totalorder %v956, 15
        %vm1895 = vcmp.ne.s32.totalorder %v957, 15
        %vm1896 = vcmp.ne.s32.totalorder %v958, 15
        %vm1897 = vcmp.ne.s32.totalorder %v959, 15
        %vm1898 = vcmp.ne.s32.totalorder %v960, 15
        %vm1899 = vcmp.ne.s32.totalorder %v961, 15
        %vm1900 = vcmp.ne.s32.totalorder %v962, 15
        %vm1901 = vcmp.ne.s32.totalorder %v963, 15
        %vm1902 = vcmp.ne.s32.totalorder %v964, 15
        %v1903 = vsel %vm1883, 1, 0
        %v1904 = vsel %vm1884, 1, 0
        %v1905 = vsel %vm1885, 1, 0
        %v1906 = vsel %vm1886, 1, 0
        %v1907 = vsel %vm1887, 1, 0
        %v1908 = vsel %vm1888, 1, 0
        %v1909 = vsel %vm1889, 1, 0
        %v1910 = vsel %vm1890, 1, 0
        %v1911 = vsel %vm1891, 1, 0
        %v1912 = vsel %vm1892, 1, 0
        %v1913 = vsel %vm1893, 1, 0
        %v1914 = vsel %vm1894, 1, 0
        %v1915 = vsel %vm1895, 1, 0
        %v1916 = vsel %vm1896, 1, 0
        %v1917 = vsel %vm1897, 1, 0
        %v1918 = vsel %vm1898, 1, 0
        %v1919 = vsel %vm1899, 1, 0
        %v1920 = vsel %vm1900, 1, 0
        %v1921 = vsel %vm1901, 1, 0
        %v1922 = vsel %vm1902, 1, 0
        %vm1923 = vcmp.eq.s32.totalorder %v1903, 1
        %vm1924 = vcmp.eq.s32.totalorder %v1904, 1
        %vm1925 = vcmp.eq.s32.totalorder %v1905, 1
        %vm1926 = vcmp.eq.s32.totalorder %v1906, 1
        %vm1927 = vcmp.eq.s32.totalorder %v1907, 1
        %vm1928 = vcmp.eq.s32.totalorder %v1908, 1
        %vm1929 = vcmp.eq.s32.totalorder %v1909, 1
        %vm1930 = vcmp.eq.s32.totalorder %v1910, 1
        %vm1931 = vcmp.eq.s32.totalorder %v1911, 1
        %vm1932 = vcmp.eq.s32.totalorder %v1912, 1
        %vm1933 = vcmp.eq.s32.totalorder %v1913, 1
        %vm1934 = vcmp.eq.s32.totalorder %v1914, 1
        %vm1935 = vcmp.eq.s32.totalorder %v1915, 1
        %vm1936 = vcmp.eq.s32.totalorder %v1916, 1
        %vm1937 = vcmp.eq.s32.totalorder %v1917, 1
        %vm1938 = vcmp.eq.s32.totalorder %v1918, 1
        %vm1939 = vcmp.eq.s32.totalorder %v1919, 1
        %vm1940 = vcmp.eq.s32.totalorder %v1920, 1
        %vm1941 = vcmp.eq.s32.totalorder %v1921, 1
        %vm1942 = vcmp.eq.s32.totalorder %v1922, 1
        %v1943 = vsel %vm1923, %v1881, 0.0
        %v1944 = vsel %vm1924, %v1880, 0.0
        %v1945 = vsel %vm1925, %v1879, 0.0
        %v1946 = vsel %vm1926, %v1878, 0.0
        %v1947 = vsel %vm1927, %v1877, 0.0
        %v1948 = vsel %vm1928, %v1876, 0.0
        %v1949 = vsel %vm1929, %v1875, 0.0
        %v1950 = vsel %vm1930, %v1874, 0.0
        %v1951 = vsel %vm1931, %v1873, 0.0
        %v1952 = vsel %vm1932, %v1872, 0.0
        %v1953 = vsel %vm1933, %v1871, 0.0
        %v1954 = vsel %vm1934, %v1870, 0.0
        %v1955 = vsel %vm1935, %v1869, 0.0
        %v1956 = vsel %vm1936, %v1868, 0.0
        %v1957 = vsel %vm1937, %v1867, 0.0
        %v1958 = vsel %vm1938, %v1866, 0.0
        %v1959 = vsel %vm1939, %v1865, 0.0
        %v1960 = vsel %vm1940, %v1864, 0.0
        %v1961 = vsel %vm1941, %v1863, 0.0
        %v1962 = vsel %vm1942, %v1882, 0.0
        %v1963 = vpack.c.bf16 %v1944, %v1943
        %v1964 = vpack.c.bf16 %v1946, %v1945
        %v1965 = vpack.c.bf16 %v1948, %v1947
        %v1966 = vpack.c.bf16 %v1950, %v1949
        %v1967 = vpack.c.bf16 %v1952, %v1951
        %v1968 = vpack.c.bf16 %v1954, %v1953
        %v1969 = vpack.c.bf16 %v1956, %v1955
        %v1970 = vpack.c.bf16 %v1958, %v1957
        %v1971 = vpack.c.bf16 %v1960, %v1959
        %v1972 = vpack.c.bf16 %v1962, %v1961
        %s1973 = scalar_lea.vmem %s3, 8
        %v1974 = vld [vmem:[%s1973] sm:$0xf]
        %v1976 = vsel %vm541, %v1963, 0
        %v1979 = vsel %vm541, %v1964, 0
        %v1982 = vsel %vm541, %v1965, 0
        %v1985 = vsel %vm541, %v1966, 0
        %v1988 = vsel %vm541, %v1967, 0
        %v1991 = vsel %vm541, %v1968, 0
        %v1994 = vsel %vm541, %v1969, 0
        %v1997 = vsel %vm541, %v1970, 0
        %v2000 = vsel %vm1123, %v1974, 0
        %2002 = vmatprep.subr.bf16.mxu0 0
        %2003 = vmatpush1.bf16.msra.mxu0 %v2000
        %2004 = vmatprep.subr.bf16.mxu0 0
        %2005 = vmatpush1.bf16.msra.mxu0 0
        %2006 = vmatprep.subr.bf16.mxu0 0
        %2007 = vmatpush1.bf16.msra.mxu0 0
        %2008 = vmatprep.subr.bf16.mxu0 0
        %2009 = vmatpush1.bf16.msra.mxu0 0
        %2010 = vmatprep.subr.bf16.mxu0 0
        %2011 = vmatpush1.bf16.msra.mxu0 0
        %2012 = vmatprep.subr.bf16.mxu0 0
        %2013 = vmatpush1.bf16.msra.mxu0 0
        %2014 = vmatprep.subr.bf16.mxu0 0
        %2015 = vmatpush1.bf16.msra.mxu0 0
        %2016 = vmatprep.subr.bf16.mxu0 0
        %2017 = vmatpush1.bf16.msra.mxu0 0
        %2018 = vmatprep.subr.bf16.mxu0 0
        %2019 = vmatpush1.bf16.msra.mxu0 0
        %2020 = vmatprep.subr.bf16.mxu0 0
        %2021 = vmatpush1.bf16.msra.mxu0 0
        %2022 = vmatprep.subr.bf16.mxu0 0
        %2023 = vmatpush1.bf16.msra.mxu0 0
        %2024 = vmatprep.subr.bf16.mxu0 0
        %2025 = vmatpush1.bf16.msra.mxu0 0
        %2026 = vmatprep.subr.bf16.mxu0 0
        %2027 = vmatpush1.bf16.msra.mxu0 0
        %2028 = vmatprep.subr.bf16.mxu0 0
        %2029 = vmatpush1.bf16.msra.mxu0 0
        %2030 = vmatprep.subr.bf16.mxu0 0
        %2031 = vmatpush1.bf16.msra.mxu0 0
        %2032 = vmatprep.subr.bf16.mxu0 0
        %2033 = vmatpush1.bf16.msra.mxu0 0
        %2034 = vmatprep.mubr.bf16.mxu0 0
        %2035 = vmatmul.mubr.bf16.gmra.mrb[0].mxu0 %v1976
        %v2036 = vpop.f32.mrb[0].mxu0
        %v2037 = vadd.f32 0.0, %v2036
        %v2038 = vpop.f32.mrb[0].mxu0
        %v2039 = vpop.f32.mrb[0].mxu0
        %v2040 = vadd.f32 0.0, %v2039
        %v2041 = vpop.f32.mrb[0].mxu0
        %2042 = vmatprep.mubr.bf16.mxu0 0
        %2043 = vmatmul.mubr.bf16.gmra.mrb[0].mxu0 %v1979
        %v2044 = vpop.f32.mrb[0].mxu0
        %v2045 = vadd.f32 0.0, %v2044
        %v2046 = vpop.f32.mrb[0].mxu0
        %v2047 = vpop.f32.mrb[0].mxu0
        %v2048 = vadd.f32 0.0, %v2047
        %v2049 = vpop.f32.mrb[0].mxu0
        %2050 = vmatprep.mubr.bf16.mxu0 0
        %2051 = vmatmul.mubr.bf16.gmra.mrb[0].mxu0 %v1982
        %v2052 = vpop.f32.mrb[0].mxu0
        %v2053 = vadd.f32 0.0, %v2052
        %v2054 = vpop.f32.mrb[0].mxu0
        %v2055 = vpop.f32.mrb[0].mxu0
        %v2056 = vadd.f32 0.0, %v2055
        %v2057 = vpop.f32.mrb[0].mxu0
        %2058 = vmatprep.mubr.bf16.mxu0 0
        %2059 = vmatmul.mubr.bf16.gmra.mrb[0].mxu0 %v1985
        %v2060 = vpop.f32.mrb[0].mxu0
        %v2061 = vadd.f32 0.0, %v2060
        %v2062 = vpop.f32.mrb[0].mxu0
        %v2063 = vpop.f32.mrb[0].mxu0
        %v2064 = vadd.f32 0.0, %v2063
        %v2065 = vpop.f32.mrb[0].mxu0
        %2066 = vmatprep.mubr.bf16.mxu0 0
        %2067 = vmatmul.mubr.bf16.gmra.mrb[0].mxu0 %v1988
        %v2068 = vpop.f32.mrb[0].mxu0
        %v2069 = vadd.f32 0.0, %v2068
        %v2070 = vpop.f32.mrb[0].mxu0
        %v2071 = vpop.f32.mrb[0].mxu0
        %v2072 = vadd.f32 0.0, %v2071
        %v2073 = vpop.f32.mrb[0].mxu0
        %2074 = vmatprep.mubr.bf16.mxu0 0
        %2075 = vmatmul.mubr.bf16.gmra.mrb[0].mxu0 %v1991
        %v2076 = vpop.f32.mrb[0].mxu0
        %v2077 = vadd.f32 0.0, %v2076
        %v2078 = vpop.f32.mrb[0].mxu0
        %v2079 = vpop.f32.mrb[0].mxu0
        %v2080 = vadd.f32 0.0, %v2079
        %v2081 = vpop.f32.mrb[0].mxu0
        %2082 = vmatprep.mubr.bf16.mxu0 0
        %2083 = vmatmul.mubr.bf16.gmra.mrb[0].mxu0 %v1994
        %v2084 = vpop.f32.mrb[0].mxu0
        %v2085 = vadd.f32 0.0, %v2084
        %v2086 = vpop.f32.mrb[0].mxu0
        %v2087 = vpop.f32.mrb[0].mxu0
        %v2088 = vadd.f32 0.0, %v2087
        %v2089 = vpop.f32.mrb[0].mxu0
        %2090 = vmatprep.mubr.bf16.mxu0 0
        %2091 = vmatmul.mubr.bf16.gmra.mrb[0].mxu0 %v1997
        %v2092 = vpop.f32.mrb[0].mxu0
        %v2093 = vadd.f32 0.0, %v2092
        %v2094 = vpop.f32.mrb[0].mxu0
        %v2095 = vpop.f32.mrb[0].mxu0
        %v2096 = vadd.f32 0.0, %v2095
        %v2097 = vpop.f32.mrb[0].mxu0
        %2098 = vdwg.mxu0
        %v2099 = vadd.f32 %v1826, %v2037
        %v2100 = vadd.f32 %v1827, %v2040
        %v2101 = vadd.f32 %v1828, %v2045
        %v2102 = vadd.f32 %v1829, %v2048
        %v2103 = vadd.f32 %v1830, %v2053
        %v2104 = vadd.f32 %v1831, %v2056
        %v2105 = vadd.f32 %v1832, %v2061
        %v2106 = vadd.f32 %v1833, %v2064
        %v2107 = vadd.f32 %v1834, %v2069
        %v2108 = vadd.f32 %v1835, %v2072
        %v2109 = vadd.f32 %v1836, %v2077
        %v2110 = vadd.f32 %v1837, %v2080
        %v2111 = vadd.f32 %v1838, %v2085
        %v2112 = vadd.f32 %v1839, %v2088
        %v2113 = vadd.f32 %v1840, %v2093
        %v2114 = vadd.f32 %v1841, %v2096
        %s2115 = scalar_lea.vmem %s3, 20
        %v2116 = vld [vmem:[%s2115] sm:$0xf]
        %v2118 = vsel %vm541, %v1971, 0
        %v2121 = vsel %vm1123, %v2116, 0
        %2123 = vmatprep.subr.bf16.mxu0 0
        %2124 = vmatpush1.bf16.msra.mxu0 %v2121
        %2125 = vmatprep.subr.bf16.mxu0 0
        %2126 = vmatpush1.bf16.msra.mxu0 0
        %2127 = vmatprep.subr.bf16.mxu0 0
        %2128 = vmatpush1.bf16.msra.mxu0 0
        %2129 = vmatprep.subr.bf16.mxu0 0
        %2130 = vmatpush1.bf16.msra.mxu0 0
        %2131 = vmatprep.subr.bf16.mxu0 0
        %2132 = vmatpush1.bf16.msra.mxu0 0
        %2133 = vmatprep.subr.bf16.mxu0 0
        %2134 = vmatpush1.bf16.msra.mxu0 0
        %2135 = vmatprep.subr.bf16.mxu0 0
        %2136 = vmatpush1.bf16.msra.mxu0 0
        %2137 = vmatprep.subr.bf16.mxu0 0
        %2138 = vmatpush1.bf16.msra.mxu0 0
        %2139 = vmatprep.subr.bf16.mxu0 0
        %2140 = vmatpush1.bf16.msra.mxu0 0
        %2141 = vmatprep.subr.bf16.mxu0 0
        %2142 = vmatpush1.bf16.msra.mxu0 0
        %2143 = vmatprep.subr.bf16.mxu0 0
        %2144 = vmatpush1.bf16.msra.mxu0 0
        %2145 = vmatprep.subr.bf16.mxu0 0
        %2146 = vmatpush1.bf16.msra.mxu0 0
        %2147 = vmatprep.subr.bf16.mxu0 0
        %2148 = vmatpush1.bf16.msra.mxu0 0
        %2149 = vmatprep.subr.bf16.mxu0 0
        %2150 = vmatpush1.bf16.msra.mxu0 0
        %2151 = vmatprep.subr.bf16.mxu0 0
        %2152 = vmatpush1.bf16.msra.mxu0 0
        %2153 = vmatprep.subr.bf16.mxu0 0
        %2154 = vmatpush1.bf16.msra.mxu0 0
        %2155 = vmatprep.mubr.bf16.mxu0 0
        %2156 = vmatmul.mubr.bf16.gmra.mrb[0].mxu0 %v1979
        %v2157 = vpop.f32.mrb[0].mxu0
        %v2158 = vadd.f32 0.0, %v2157
        %v2159 = vpop.f32.mrb[0].mxu0
        %v2160 = vpop.f32.mrb[0].mxu0
        %v2161 = vadd.f32 0.0, %v2160
        %v2162 = vpop.f32.mrb[0].mxu0
        %2163 = vmatprep.mubr.bf16.mxu0 0
        %2164 = vmatmul.mubr.bf16.gmra.mrb[0].mxu0 %v1982
        %v2165 = vpop.f32.mrb[0].mxu0
        %v2166 = vadd.f32 0.0, %v2165
        %v2167 = vpop.f32.mrb[0].mxu0
        %v2168 = vpop.f32.mrb[0].mxu0
        %v2169 = vadd.f32 0.0, %v2168
        %v2170 = vpop.f32.mrb[0].mxu0
        %2171 = vmatprep.mubr.bf16.mxu0 0
        %2172 = vmatmul.mubr.bf16.gmra.mrb[0].mxu0 %v1985
        %v2173 = vpop.f32.mrb[0].mxu0
        %v2174 = vadd.f32 0.0, %v2173
        %v2175 = vpop.f32.mrb[0].mxu0
        %v2176 = vpop.f32.mrb[0].mxu0
        %v2177 = vadd.f32 0.0, %v2176
        %v2178 = vpop.f32.mrb[0].mxu0
        %2179 = vmatprep.mubr.bf16.mxu0 0
        %2180 = vmatmul.mubr.bf16.gmra.mrb[0].mxu0 %v1988
        %v2181 = vpop.f32.mrb[0].mxu0
        %v2182 = vadd.f32 0.0, %v2181
        %v2183 = vpop.f32.mrb[0].mxu0
        %v2184 = vpop.f32.mrb[0].mxu0
        %v2185 = vadd.f32 0.0, %v2184
        %v2186 = vpop.f32.mrb[0].mxu0
        %2187 = vmatprep.mubr.bf16.mxu0 0
        %2188 = vmatmul.mubr.bf16.gmra.mrb[0].mxu0 %v1991
        %v2189 = vpop.f32.mrb[0].mxu0
        %v2190 = vadd.f32 0.0, %v2189
        %v2191 = vpop.f32.mrb[0].mxu0
        %v2192 = vpop.f32.mrb[0].mxu0
        %v2193 = vadd.f32 0.0, %v2192
        %v2194 = vpop.f32.mrb[0].mxu0
        %2195 = vmatprep.mubr.bf16.mxu0 0
        %2196 = vmatmul.mubr.bf16.gmra.mrb[0].mxu0 %v1994
        %v2197 = vpop.f32.mrb[0].mxu0
        %v2198 = vadd.f32 0.0, %v2197
        %v2199 = vpop.f32.mrb[0].mxu0
        %v2200 = vpop.f32.mrb[0].mxu0
        %v2201 = vadd.f32 0.0, %v2200
        %v2202 = vpop.f32.mrb[0].mxu0
        %2203 = vmatprep.mubr.bf16.mxu0 0
        %2204 = vmatmul.mubr.bf16.gmra.mrb[0].mxu0 %v1997
        %v2205 = vpop.f32.mrb[0].mxu0
        %v2206 = vadd.f32 0.0, %v2205
        %v2207 = vpop.f32.mrb[0].mxu0
        %v2208 = vpop.f32.mrb[0].mxu0
        %v2209 = vadd.f32 0.0, %v2208
        %v2210 = vpop.f32.mrb[0].mxu0
        %2211 = vmatprep.mubr.bf16.mxu0 0
        %2212 = vmatmul.mubr.bf16.gmra.mrb[0].mxu0 %v2118
        %v2213 = vpop.f32.mrb[0].mxu0
        %v2214 = vadd.f32 0.0, %v2213
        %v2215 = vpop.f32.mrb[0].mxu0
        %v2216 = vpop.f32.mrb[0].mxu0
        %v2217 = vadd.f32 0.0, %v2216
        %v2218 = vpop.f32.mrb[0].mxu0
        %2219 = vdwg.mxu0
        %v2220 = vadd.f32 %v2099, %v2158
        %v2221 = vadd.f32 %v2100, %v2161
        %v2222 = vadd.f32 %v2101, %v2166
        %v2223 = vadd.f32 %v2102, %v2169
        %v2224 = vadd.f32 %v2103, %v2174
        %v2225 = vadd.f32 %v2104, %v2177
        %v2226 = vadd.f32 %v2105, %v2182
        %v2227 = vadd.f32 %v2106, %v2185
        %v2228 = vadd.f32 %v2107, %v2190
        %v2229 = vadd.f32 %v2108, %v2193
        %v2230 = vadd.f32 %v2109, %v2198
        %v2231 = vadd.f32 %v2110, %v2201
        %v2232 = vadd.f32 %v2111, %v2206
        %v2233 = vadd.f32 %v2112, %v2209
        %v2234 = vadd.f32 %v2113, %v2214
        %v2235 = vadd.f32 %v2114, %v2217
        %s2236 = scalar_lea.vmem %s3, 32
        %v2237 = vld [vmem:[%s2236] sm:$0xf]
        %v2239 = vsel %vm541, %v1972, 0
        %v2242 = vsel %vm1123, %v2237, 0
        %2244 = vmatprep.subr.bf16.mxu0 0
        %2245 = vmatpush1.bf16.msra.mxu0 %v2242
        %2246 = vmatprep.subr.bf16.mxu0 0
        %2247 = vmatpush1.bf16.msra.mxu0 0
        %2248 = vmatprep.subr.bf16.mxu0 0
        %2249 = vmatpush1.bf16.msra.mxu0 0
        %2250 = vmatprep.subr.bf16.mxu0 0
        %2251 = vmatpush1.bf16.msra.mxu0 0
        %2252 = vmatprep.subr.bf16.mxu0 0
        %2253 = vmatpush1.bf16.msra.mxu0 0
        %2254 = vmatprep.subr.bf16.mxu0 0
        %2255 = vmatpush1.bf16.msra.mxu0 0
        %2256 = vmatprep.subr.bf16.mxu0 0
        %2257 = vmatpush1.bf16.msra.mxu0 0
        %2258 = vmatprep.subr.bf16.mxu0 0
        %2259 = vmatpush1.bf16.msra.mxu0 0
        %2260 = vmatprep.subr.bf16.mxu0 0
        %2261 = vmatpush1.bf16.msra.mxu0 0
        %2262 = vmatprep.subr.bf16.mxu0 0
        %2263 = vmatpush1.bf16.msra.mxu0 0
        %2264 = vmatprep.subr.bf16.mxu0 0
        %2265 = vmatpush1.bf16.msra.mxu0 0
        %2266 = vmatprep.subr.bf16.mxu0 0
        %2267 = vmatpush1.bf16.msra.mxu0 0
        %2268 = vmatprep.subr.bf16.mxu0 0
        %2269 = vmatpush1.bf16.msra.mxu0 0
        %2270 = vmatprep.subr.bf16.mxu0 0
        %2271 = vmatpush1.bf16.msra.mxu0 0
        %2272 = vmatprep.subr.bf16.mxu0 0
        %2273 = vmatpush1.bf16.msra.mxu0 0
        %2274 = vmatprep.subr.bf16.mxu0 0
        %2275 = vmatpush1.bf16.msra.mxu0 0
        %2276 = vmatprep.mubr.bf16.mxu0 0
        %2277 = vmatmul.mubr.bf16.gmra.mrb[0].mxu0 %v1982
        %v2278 = vpop.f32.mrb[0].mxu0
        %v2279 = vadd.f32 0.0, %v2278
        %v2280 = vpop.f32.mrb[0].mxu0
        %v2281 = vpop.f32.mrb[0].mxu0
        %v2282 = vadd.f32 0.0, %v2281
        %v2283 = vpop.f32.mrb[0].mxu0
        %2284 = vmatprep.mubr.bf16.mxu0 0
        %2285 = vmatmul.mubr.bf16.gmra.mrb[0].mxu0 %v1985
        %v2286 = vpop.f32.mrb[0].mxu0
        %v2287 = vadd.f32 0.0, %v2286
        %v2288 = vpop.f32.mrb[0].mxu0
        %v2289 = vpop.f32.mrb[0].mxu0
        %v2290 = vadd.f32 0.0, %v2289
        %v2291 = vpop.f32.mrb[0].mxu0
        %2292 = vmatprep.mubr.bf16.mxu0 0
        %2293 = vmatmul.mubr.bf16.gmra.mrb[0].mxu0 %v1988
        %v2294 = vpop.f32.mrb[0].mxu0
        %v2295 = vadd.f32 0.0, %v2294
        %v2296 = vpop.f32.mrb[0].mxu0
        %v2297 = vpop.f32.mrb[0].mxu0
        %v2298 = vadd.f32 0.0, %v2297
        %v2299 = vpop.f32.mrb[0].mxu0
        %2300 = vmatprep.mubr.bf16.mxu0 0
        %2301 = vmatmul.mubr.bf16.gmra.mrb[0].mxu0 %v1991
        %v2302 = vpop.f32.mrb[0].mxu0
        %v2303 = vadd.f32 0.0, %v2302
        %v2304 = vpop.f32.mrb[0].mxu0
        %v2305 = vpop.f32.mrb[0].mxu0
        %v2306 = vadd.f32 0.0, %v2305
        %v2307 = vpop.f32.mrb[0].mxu0
        %2308 = vmatprep.mubr.bf16.mxu0 0
        %2309 = vmatmul.mubr.bf16.gmra.mrb[0].mxu0 %v1994
        %v2310 = vpop.f32.mrb[0].mxu0
        %v2311 = vadd.f32 0.0, %v2310
        %v2312 = vpop.f32.mrb[0].mxu0
        %v2313 = vpop.f32.mrb[0].mxu0
        %v2314 = vadd.f32 0.0, %v2313
        %v2315 = vpop.f32.mrb[0].mxu0
        %2316 = vmatprep.mubr.bf16.mxu0 0
        %2317 = vmatmul.mubr.bf16.gmra.mrb[0].mxu0 %v1997
        %v2318 = vpop.f32.mrb[0].mxu0
        %v2319 = vadd.f32 0.0, %v2318
        %v2320 = vpop.f32.mrb[0].mxu0
        %v2321 = vpop.f32.mrb[0].mxu0
        %v2322 = vadd.f32 0.0, %v2321
        %v2323 = vpop.f32.mrb[0].mxu0
        %2324 = vmatprep.mubr.bf16.mxu0 0
        %2325 = vmatmul.mubr.bf16.gmra.mrb[0].mxu0 %v2118
        %v2326 = vpop.f32.mrb[0].mxu0
        %v2327 = vadd.f32 0.0, %v2326
        %v2328 = vpop.f32.mrb[0].mxu0
        %v2329 = vpop.f32.mrb[0].mxu0
        %v2330 = vadd.f32 0.0, %v2329
        %v2331 = vpop.f32.mrb[0].mxu0
        %2332 = vmatprep.mubr.bf16.mxu0 0
        %2333 = vmatmul.mubr.bf16.gmra.mrb[0].mxu0 %v2239
        %v2334 = vpop.f32.mrb[0].mxu0
        %v2335 = vadd.f32 0.0, %v2334
        %v2336 = vpop.f32.mrb[0].mxu0
        %v2337 = vpop.f32.mrb[0].mxu0
        %v2338 = vadd.f32 0.0, %v2337
        %v2339 = vpop.f32.mrb[0].mxu0
        %2340 = vdwg.mxu0
        %v2341 = vadd.f32 %v2220, %v2279
        %v2342 = vadd.f32 %v2221, %v2282
        %v2343 = vadd.f32 %v2222, %v2287
        %v2344 = vadd.f32 %v2223, %v2290
        %v2345 = vadd.f32 %v2224, %v2295
        %v2346 = vadd.f32 %v2225, %v2298
        %v2347 = vadd.f32 %v2226, %v2303
        %v2348 = vadd.f32 %v2227, %v2306
        %v2349 = vadd.f32 %v2228, %v2311
        %v2350 = vadd.f32 %v2229, %v2314
        %v2351 = vadd.f32 %v2230, %v2319
        %v2352 = vadd.f32 %v2231, %v2322
        %v2353 = vadd.f32 %v2232, %v2327
        %v2354 = vadd.f32 %v2233, %v2330
        %v2355 = vadd.f32 %v2234, %v2335
        %v2356 = vadd.f32 %v2235, %v2338
        %v2357 = vld [vmem:[%s4] sm:$0x1]
        %v2359 = vlaneseq
        %v2360 = vshrl.u32 %v2359, 7
        %v2361 = vsub.s32 0, %v2360
        %v2362 = vrot.slane %v2357, %v2361
        %v2364 = vadd.f32 %v2341, %v2362
        %v2365 = vadd.f32 %v2342, %v2362
        %v2366 = vadd.f32 %v2343, %v2362
        %v2367 = vadd.f32 %v2344, %v2362
        %v2368 = vadd.f32 %v2345, %v2362
        %v2369 = vadd.f32 %v2346, %v2362
        %v2370 = vadd.f32 %v2347, %v2362
        %v2371 = vadd.f32 %v2348, %v2362
        %v2372 = vadd.f32 %v2349, %v2362
        %v2373 = vadd.f32 %v2350, %v2362
        %v2374 = vadd.f32 %v2351, %v2362
        %v2375 = vadd.f32 %v2352, %v2362
        %v2376 = vadd.f32 %v2353, %v2362
        %v2377 = vadd.f32 %v2354, %v2362
        %v2378 = vadd.f32 %v2355, %v2362
        %v2379 = vadd.f32 %v2356, %v2362
        %v2380 = vmax.f32 %v2364, 0.0
        %v2381 = vmax.f32 %v2365, 0.0
        %v2382 = vmax.f32 %v2366, 0.0
        %v2383 = vmax.f32 %v2367, 0.0
        %v2384 = vmax.f32 %v2368, 0.0
        %v2385 = vmax.f32 %v2369, 0.0
        %v2386 = vmax.f32 %v2370, 0.0
        %v2387 = vmax.f32 %v2371, 0.0
        %v2388 = vmax.f32 %v2372, 0.0
        %v2389 = vmax.f32 %v2373, 0.0
        %v2390 = vmax.f32 %v2374, 0.0
        %v2391 = vmax.f32 %v2375, 0.0
        %v2392 = vmax.f32 %v2376, 0.0
        %v2393 = vmax.f32 %v2377, 0.0
        %v2394 = vmax.f32 %v2378, 0.0
        %v2395 = vmax.f32 %v2379, 0.0
        %v2396 = vpack.c.bf16 %v2381, %v2380
        %v2397 = vpack.c.bf16 %v2383, %v2382
        %v2398 = vpack.c.bf16 %v2385, %v2384
        %v2399 = vpack.c.bf16 %v2387, %v2386
        %v2400 = vpack.c.bf16 %v2389, %v2388
        %v2401 = vpack.c.bf16 %v2391, %v2390
        %v2402 = vpack.c.bf16 %v2393, %v2392
        %v2403 = vpack.c.bf16 %v2395, %v2394
        %v2404 = vld [vmem:[%s5] sm:$0xf]
        %v2405 = vld [vmem:[%s6] sm:$0x1]
        %v2407 = vlaneseq
        %v2408 = vshrl.u32 %v2407, 7
        %v2409 = vsub.s32 0, %v2408
        %v2410 = vrot.slane %v2405, %v2409
        %v2413 = vsel %vm541, %v2396, 0
        %v2416 = vsel %vm541, %v2397, 0
        %v2419 = vsel %vm541, %v2398, 0
        %v2422 = vsel %vm541, %v2399, 0
        %v2425 = vsel %vm541, %v2400, 0
        %v2428 = vsel %vm541, %v2401, 0
        %v2431 = vsel %vm541, %v2402, 0
        %v2434 = vsel %vm541, %v2403, 0
        %v2437 = vsel %vm1123, %v2404, 0
        %2439 = vmatprep.subr.bf16.mxu0 0
        %2440 = vmatpush1.bf16.msra.mxu0 %v2437
        %2441 = vmatprep.subr.bf16.mxu0 0
        %2442 = vmatpush1.bf16.msra.mxu0 0
        %2443 = vmatprep.subr.bf16.mxu0 0
        %2444 = vmatpush1.bf16.msra.mxu0 0
        %2445 = vmatprep.subr.bf16.mxu0 0
        %2446 = vmatpush1.bf16.msra.mxu0 0
        %2447 = vmatprep.subr.bf16.mxu0 0
        %2448 = vmatpush1.bf16.msra.mxu0 0
        %2449 = vmatprep.subr.bf16.mxu0 0
        %2450 = vmatpush1.bf16.msra.mxu0 0
        %2451 = vmatprep.subr.bf16.mxu0 0
        %2452 = vmatpush1.bf16.msra.mxu0 0
        %2453 = vmatprep.subr.bf16.mxu0 0
        %2454 = vmatpush1.bf16.msra.mxu0 0
        %2455 = vmatprep.subr.bf16.mxu0 0
        %2456 = vmatpush1.bf16.msra.mxu0 0
        %2457 = vmatprep.subr.bf16.mxu0 0
        %2458 = vmatpush1.bf16.msra.mxu0 0
        %2459 = vmatprep.subr.bf16.mxu0 0
        %2460 = vmatpush1.bf16.msra.mxu0 0
        %2461 = vmatprep.subr.bf16.mxu0 0
        %2462 = vmatpush1.bf16.msra.mxu0 0
        %2463 = vmatprep.subr.bf16.mxu0 0
        %2464 = vmatpush1.bf16.msra.mxu0 0
        %2465 = vmatprep.subr.bf16.mxu0 0
        %2466 = vmatpush1.bf16.msra.mxu0 0
        %2467 = vmatprep.subr.bf16.mxu0 0
        %2468 = vmatpush1.bf16.msra.mxu0 0
        %2469 = vmatprep.subr.bf16.mxu0 0
        %2470 = vmatpush1.bf16.msra.mxu0 0
        %2471 = vmatprep.mubr.bf16.mxu0 0
        %2472 = vmatmul.mubr.bf16.gmra.mrb[0].mxu0 %v2413
        %v2473 = vpop.f32.mrb[0].mxu0
        %v2474 = vadd.f32 %v2410, %v2473
        %v2475 = vpop.f32.mrb[0].mxu0
        %v2476 = vpop.f32.mrb[0].mxu0
        %v2477 = vadd.f32 %v2410, %v2476
        %v2478 = vpop.f32.mrb[0].mxu0
        %2479 = vmatprep.mubr.bf16.mxu0 0
        %2480 = vmatmul.mubr.bf16.gmra.mrb[0].mxu0 %v2416
        %v2481 = vpop.f32.mrb[0].mxu0
        %v2482 = vadd.f32 %v2410, %v2481
        %v2483 = vpop.f32.mrb[0].mxu0
        %v2484 = vpop.f32.mrb[0].mxu0
        %v2485 = vadd.f32 %v2410, %v2484
        %v2486 = vpop.f32.mrb[0].mxu0
        %2487 = vmatprep.mubr.bf16.mxu0 0
        %2488 = vmatmul.mubr.bf16.gmra.mrb[0].mxu0 %v2419
        %v2489 = vpop.f32.mrb[0].mxu0
        %v2490 = vadd.f32 %v2410, %v2489
        %v2491 = vpop.f32.mrb[0].mxu0
        %v2492 = vpop.f32.mrb[0].mxu0
        %v2493 = vadd.f32 %v2410, %v2492
        %v2494 = vpop.f32.mrb[0].mxu0
        %2495 = vmatprep.mubr.bf16.mxu0 0
        %2496 = vmatmul.mubr.bf16.gmra.mrb[0].mxu0 %v2422
        %v2497 = vpop.f32.mrb[0].mxu0
        %v2498 = vadd.f32 %v2410, %v2497
        %v2499 = vpop.f32.mrb[0].mxu0
        %v2500 = vpop.f32.mrb[0].mxu0
        %v2501 = vadd.f32 %v2410, %v2500
        %v2502 = vpop.f32.mrb[0].mxu0
        %2503 = vmatprep.mubr.bf16.mxu0 0
        %2504 = vmatmul.mubr.bf16.gmra.mrb[0].mxu0 %v2425
        %v2505 = vpop.f32.mrb[0].mxu0
        %v2506 = vadd.f32 %v2410, %v2505
        %v2507 = vpop.f32.mrb[0].mxu0
        %v2508 = vpop.f32.mrb[0].mxu0
        %v2509 = vadd.f32 %v2410, %v2508
        %v2510 = vpop.f32.mrb[0].mxu0
        %2511 = vmatprep.mubr.bf16.mxu0 0
        %2512 = vmatmul.mubr.bf16.gmra.mrb[0].mxu0 %v2428
        %v2513 = vpop.f32.mrb[0].mxu0
        %v2514 = vadd.f32 %v2410, %v2513
        %v2515 = vpop.f32.mrb[0].mxu0
        %v2516 = vpop.f32.mrb[0].mxu0
        %v2517 = vadd.f32 %v2410, %v2516
        %v2518 = vpop.f32.mrb[0].mxu0
        %2519 = vmatprep.mubr.bf16.mxu0 0
        %2520 = vmatmul.mubr.bf16.gmra.mrb[0].mxu0 %v2431
        %v2521 = vpop.f32.mrb[0].mxu0
        %v2522 = vadd.f32 %v2410, %v2521
        %v2523 = vpop.f32.mrb[0].mxu0
        %v2524 = vpop.f32.mrb[0].mxu0
        %v2525 = vadd.f32 %v2410, %v2524
        %v2526 = vpop.f32.mrb[0].mxu0
        %2527 = vmatprep.mubr.bf16.mxu0 0
        %2528 = vmatmul.mubr.bf16.gmra.mrb[0].mxu0 %v2434
        %v2529 = vpop.f32.mrb[0].mxu0
        %v2530 = vadd.f32 %v2410, %v2529
        %v2531 = vpop.f32.mrb[0].mxu0
        %v2532 = vpop.f32.mrb[0].mxu0
        %v2533 = vadd.f32 %v2410, %v2532
        %v2534 = vpop.f32.mrb[0].mxu0
        %2535 = vdwg.mxu0
        %v2536 = vadd.f32 %v2474, %v361
        %v2537 = vadd.f32 %v2477, %v362
        %v2538 = vadd.f32 %v2482, %v363
        %v2539 = vadd.f32 %v2485, %v364
        %v2540 = vadd.f32 %v2490, %v365
        %v2541 = vadd.f32 %v2493, %v366
        %v2542 = vadd.f32 %v2498, %v367
        %v2543 = vadd.f32 %v2501, %v368
        %v2544 = vadd.f32 %v2506, %v369
        %v2545 = vadd.f32 %v2509, %v370
        %v2546 = vadd.f32 %v2514, %v371
        %v2547 = vadd.f32 %v2517, %v372
        %v2548 = vadd.f32 %v2522, %v373
        %v2549 = vadd.f32 %v2525, %v374
        %v2550 = vadd.f32 %v2530, %v375
        %v2551 = vadd.f32 %v2533, %v376
        %2552 = vst.msk [vmem:[%s350] sm:$0xff] %vm403, %v2536
        %2553 = vst.msk [vmem:[%s350 + $0x8] sm:$0xff] %vm403, %v2537
        %2554 = vst.msk [vmem:[%s350 + $0x10] sm:$0xff] %vm403, %v2538
        %2555 = vst.msk [vmem:[%s350 + $0x18] sm:$0xff] %vm403, %v2539
        %2556 = vst.msk [vmem:[%s350 + $0x20] sm:$0xff] %vm403, %v2540
        %2557 = vst.msk [vmem:[%s350 + $0x28] sm:$0xff] %vm403, %v2541
        %2558 = vst.msk [vmem:[%s350 + $0x30] sm:$0xff] %vm403, %v2542
        %2559 = vst.msk [vmem:[%s350 + $0x38] sm:$0xff] %vm403, %v2543
        %2560 = vst.msk [vmem:[%s350 + $0x40] sm:$0xff] %vm403, %v2544
        %2561 = vst.msk [vmem:[%s350 + $0x48] sm:$0xff] %vm403, %v2545
        %2562 = vst.msk [vmem:[%s350 + $0x50] sm:$0xff] %vm403, %v2546
        %2563 = vst.msk [vmem:[%s350 + $0x58] sm:$0xff] %vm403, %v2547
        %2564 = vst.msk [vmem:[%s350 + $0x60] sm:$0xff] %vm403, %v2548
        %2565 = vst.msk [vmem:[%s350 + $0x68] sm:$0xff] %vm403, %v2549
        %2566 = vst.msk [vmem:[%s350 + $0x70] sm:$0xff] %vm403, %v2550
        %2567 = vst.msk [vmem:[%s350 + $0x78] sm:$0xff] %vm403, %v2551
        %v2568 = vmax.f32 %v2536, 0.0
        %v2569 = vmax.f32 %v2537, 0.0
        %v2570 = vmax.f32 %v2538, 0.0
        %v2571 = vmax.f32 %v2539, 0.0
        %v2572 = vmax.f32 %v2540, 0.0
        %v2573 = vmax.f32 %v2541, 0.0
        %v2574 = vmax.f32 %v2542, 0.0
        %v2575 = vmax.f32 %v2543, 0.0
        %v2576 = vmax.f32 %v2544, 0.0
        %v2577 = vmax.f32 %v2545, 0.0
        %v2578 = vmax.f32 %v2546, 0.0
        %v2579 = vmax.f32 %v2547, 0.0
        %v2580 = vmax.f32 %v2548, 0.0
        %v2581 = vmax.f32 %v2549, 0.0
        %v2582 = vmax.f32 %v2550, 0.0
        %v2583 = vmax.f32 %v2551, 0.0
        %2584 = vst.msk [vmem:[%s343] sm:$0xff] %vm403, %v2568
        %2585 = vst.msk [vmem:[%s343 + $0x8] sm:$0xff] %vm403, %v2569
        %2586 = vst.msk [vmem:[%s343 + $0x10] sm:$0xff] %vm403, %v2570
        %2587 = vst.msk [vmem:[%s343 + $0x18] sm:$0xff] %vm403, %v2571
        %2588 = vst.msk [vmem:[%s343 + $0x20] sm:$0xff] %vm403, %v2572
        %2589 = vst.msk [vmem:[%s343 + $0x28] sm:$0xff] %vm403, %v2573
        %2590 = vst.msk [vmem:[%s343 + $0x30] sm:$0xff] %vm403, %v2574
        %2591 = vst.msk [vmem:[%s343 + $0x38] sm:$0xff] %vm403, %v2575
        %2592 = vst.msk [vmem:[%s343 + $0x40] sm:$0xff] %vm403, %v2576
        %2593 = vst.msk [vmem:[%s343 + $0x48] sm:$0xff] %vm403, %v2577
        %2594 = vst.msk [vmem:[%s343 + $0x50] sm:$0xff] %vm403, %v2578
        %2595 = vst.msk [vmem:[%s343 + $0x58] sm:$0xff] %vm403, %v2579
        %2596 = vst.msk [vmem:[%s343 + $0x60] sm:$0xff] %vm403, %v2580
        %2597 = vst.msk [vmem:[%s343 + $0x68] sm:$0xff] %vm403, %v2581
        %2598 = vst.msk [vmem:[%s343 + $0x70] sm:$0xff] %vm403, %v2582
        %2599 = vst.msk [vmem:[%s343 + $0x78] sm:$0xff] %vm403, %v2583
        %s2600 = sand.u32 %s203, 1
        %s2601 = scalar_lea.sflag [#allocation5], %s2600
        %s2602 = sand.u32 %s203, 1
        %s2603 = smul.addr %s2602, 128
        %s2604 = scalar_lea.vmem [#allocation6], %s2603
        %s2605 = sand.u32 %s231, 1
        %s2606 = scalar_lea.sflag [#allocation8], %s2605
        %s2607 = sand.u32 %s231, 1
        %s2608 = smul.addr %s2607, 128
        %s2609 = scalar_lea.vmem [#allocation7], %s2608
        // Predicated region
        $region69: #{bottleneck_forward.1} parent=47 // pred_check
          %p2610 = pneg %p213
        $region70: #{bottleneck_forward.1} parent=47 // pred_check_branch
          %2612 = sbr.rel (%p2610) target = $region72
        $region71: #{bottleneck_forward.1} parent=47 // pred_region
          %s2613 = smul.u32 16, %s34
          %s2615 = ssub.s32 2048, 2048
          %2616 = vsyncadd %s2601, %s2615
          %s2617 = smul.addr %s33, 32
          %s2618 = sadd.s32 %s2613, %s2617
          %s2619 = smul.addr %s2618, 128
          %s2620 = scalar_lea.hbm %s7, %s2619
          %s2621 = sshll.u32 %s2604, 4
          %s2622 = int_to_ptr.vmem [resolvable:$true] %s2621
          %2627 = dma.vmem_to_hbm [thread:$0]  %s2622, 2048, %s2620, %s2601, 128, 128, 8
        $region72: #{bottleneck_forward.1} parent=47 // pred_fallthru
          _
        // Predicated region
        $region73: #{bottleneck_forward.1} parent=47 // pred_check
          %p2628 = pneg %p241
        $region74: #{bottleneck_forward.1} parent=47 // pred_check_branch
          %2630 = sbr.rel (%p2628) target = $region76
        $region75: #{bottleneck_forward.1} parent=47 // pred_region
          %s2631 = smul.u32 16, %s34
          %s2633 = ssub.s32 2048, 2048
          %2634 = vsyncadd %s2606, %s2633
          %s2635 = smul.addr %s33, 32
          %s2636 = sadd.s32 %s2631, %s2635
          %s2637 = smul.addr %s2636, 128
          %s2638 = scalar_lea.hbm %s8, %s2637
          %s2639 = sshll.u32 %s2609, 4
          %s2640 = int_to_ptr.vmem [resolvable:$true] %s2639
          %2645 = dma.vmem_to_hbm [thread:$0]  %s2640, 2048, %s2638, %s2606, 128, 128, 8
        $region76: #{bottleneck_forward.1} parent=47 // pred_fallthru
          _
      $region48: #{bottleneck_forward.1} parent=5 // pred_fallthru
        _
      %p2646 = scmp.le.s32.totalorder 2, %s24
      // Predicated region
      $region77: #{bottleneck_forward.1} parent=5 // pred_check
        %p2647 = pneg %p2646
      $region78: #{bottleneck_forward.1} parent=5 // pred_check_branch
        %2649 = sbr.rel (%p2647) target = $region80
      $region79: #{bottleneck_forward.1} parent=5 // pred_region
        %s2650 = ssub.s32 %s24, 2
        // Predicated region
        $region81: #{bottleneck_forward.1} parent=79 // pred_check
          %p2651 = pneg %p219
        $region82: #{bottleneck_forward.1} parent=79 // pred_check_branch
          %2653 = sbr.rel (%p2651) target = $region84
        $region83: #{bottleneck_forward.1} parent=79 // pred_region
          %s2654 = sand.u32 %s204, 1
          %s2655 = scalar_lea.sflag [#allocation5], %s2654
          %s2656 = sand.u32 %s204, 1
          %s2657 = smul.addr %s2656, 128
          %s2658 = scalar_lea.vmem [#allocation6], %s2657
          %2659 = dma.done %s2655, 2048
        $region84: #{bottleneck_forward.1} parent=79 // pred_fallthru
          _
        // Predicated region
        $region85: #{bottleneck_forward.1} parent=79 // pred_check
          %p2660 = pneg %p247
        $region86: #{bottleneck_forward.1} parent=79 // pred_check_branch
          %2662 = sbr.rel (%p2660) target = $region88
        $region87: #{bottleneck_forward.1} parent=79 // pred_region
          %s2663 = sand.u32 %s232, 1
          %s2664 = scalar_lea.sflag [#allocation8], %s2663
          %s2665 = sand.u32 %s232, 1
          %s2666 = smul.addr %s2665, 128
          %s2667 = scalar_lea.vmem [#allocation7], %s2666
          %2668 = dma.done %s2664, 2048
        $region88: #{bottleneck_forward.1} parent=79 // pred_fallthru
          _
      $region80: #{bottleneck_forward.1} parent=5 // pred_fallthru
        _
    $region6: #{bottleneck_forward.1} parent=1 // loop_footer
      %s28 = sadd.s32 1, %s24
    $region7: #{bottleneck_forward.1} parent=1 // loop_footer_branch
      %23 = sbr.rel target = $region3
    $region8: #{bottleneck_forward.1} parent=1 // loop_exit
      _
    %2669 = vsyncpa [#allocation4], 1
    %s2670 = scalar_lea.sflag [#allocation4], 1
    %2671 = vsyncpa %s2670, 1
    %2672 = vsyncpa [#allocation5], 1
    %s2673 = scalar_lea.sflag [#allocation5], 1
    %2674 = vsyncpa %s2673, 1
    %2675 = vsyncpa [#allocation8], 1
    %s2676 = scalar_lea.sflag [#allocation8], 1
    %2677 = vsyncpa %s2676, 1

</llo_original>
